<compile_context>
chip_gen: v6e
topology: v6e:2x2x1
jax: 0.10.0
libtpu: 0.0.40
codegen_flags: <defaults>
</compile_context>

<pallas_src>
import functools

import numpy as np

import jax
import jax.numpy as jnp
from jax.experimental import pallas as pl
from jax.experimental.pallas import tpu as pltpu


def _round_up(x, m):
    return (x + m - 1) // m * m


def _pad2(x, rows, cols):
    return jnp.pad(x, ((0, rows - x.shape[0]), (0, cols - x.shape[1])))


def _spec(block_shape, index_map, *, single_buffer=False):
    """BlockSpec helper; single-buffers grid-invariant operands when possible."""
    if single_buffer:
        try:
            return pl.BlockSpec(block_shape, index_map,
                                pipeline_mode=pl.Buffered(1))
        except Exception:  # older jax without pipeline_mode / Buffered
            pass
    return pl.BlockSpec(block_shape, index_map)


def _vmem_limit_bytes():
    """Generation-aware VMEM cap: ~100 MiB on 128-MiB parts, ~48 MiB on v7x."""
    try:
        phys = int(pltpu.get_tpu_info().vmem_capacity_bytes)
    except Exception:
        phys = 64 * 1024 * 1024  # conservative (v7x per-TC size)
    return min(100 * 1024 * 1024, int(phys * 0.78))


# ----------------------------------------------------------------------------
# Static planning (tile sizes, relation chunking, VMEM budget)
# ----------------------------------------------------------------------------
def make_plan(n, h_dim, num_rels):
    dp = _round_up(h_dim, 128)
    n_pad = _round_up(n, 128)

    # Keep >= 2 dst tiles when possible so both v7x TensorCores get work.
    tm = 128 if (n_pad // 128) >= 2 else 64
    nt = n_pad // tm

    vmem_limit = _vmem_limit_bytes()
    budget = int(vmem_limit * 0.85)

    def usage(tk, rc):
        return (2 * rc * tm * tk * 2      # a block   (double buffered, bf16)
                + 2 * tk * dp * 2         # h_src     (double buffered, bf16)
                + 2 * tm * dp * 2         # h_dst     (double buffered, bf16)
                + 2 * rc * dp * dp * 2    # w_rel     (worst case 2-deep)
                + dp * dp * 2             # w_loop    (single buffered)
                + 2 * tm * dp * 2         # output    (bf16)
                + rc * tm * dp * 4        # acc scratch (f32)
                + 2 * tm * dp * 4)        # loop + agg scratch (f32)

    rc_cands = sorted({min(num_rels, c) for c in (16, 8, 4, 2, 1)}, reverse=True)
    tk_cands = [t for t in (1024, 512, 256, 128) if n_pad % t == 0]
    tk, rc = 128, 1
    for tk_c in tk_cands:
        hit = None
        for rc_c in rc_cands:
            if usage(tk_c, rc_c) <= budget:
                hit = (tk_c, rc_c)
                break
        if hit is not None:
            tk, rc = hit
            break

    n_rc = -(-num_rels // rc)
    r_pad = n_rc * rc
    return dict(n_pad=n_pad, nt=nt, tm=tm, tk=tk, dp=dp,
                rc=rc, n_rc=n_rc, r_pad=r_pad, vmem_limit=vmem_limit)


# ----------------------------------------------------------------------------
# Graph densification + block-occupancy tables (host side, built ONCE)
# ----------------------------------------------------------------------------
def build_graph_blocks(plan, src, dst, etypes, e_w, norm):
    n_pad, tm, tk, r_pad, nt = (plan["n_pad"], plan["tm"], plan["tk"],
                                plan["r_pad"], plan["nt"])
    src = np.asarray(src, np.int64)
    dst = np.asarray(dst, np.int64)
    et = np.asarray(etypes, np.int64)
    coef = (np.asarray(e_w, np.float32) * np.asarray(norm, np.float32)).reshape(-1)

    # A[dst//tm, r, dst%tm, src] += e_w * norm   (streamed layout)
    adj = np.zeros((nt, r_pad, tm, n_pad), np.float32)
    np.add.at(adj, (dst // tm, et, dst % tm, src), coef)
    adj2 = jnp.asarray(adj.reshape(nt * r_pad * tm, n_pad), dtype=jnp.bfloat16)

    # Occupancy of (dst tile, src block) pairs -> data-dependent index_map.
    n_kblk = n_pad // tk
    occ = np.zeros((nt, n_kblk), bool)
    occ[dst // tm, src // tk] = True
    counts = occ.sum(axis=1).astype(np.int32)
    max_nb = max(1, int(counts.max())) if counts.size else 1
    blk_tbl = np.zeros((nt, max_nb), np.int32)
    for i in range(nt):
        ks = np.nonzero(occ[i])[0].astype(np.int32)
        if ks.size == 0:
            blk_tbl[i, :] = 0
        else:
            blk_tbl[i, :ks.size] = ks
            blk_tbl[i, ks.size:] = ks[-1]   # repeat last block: DMA dedups
    return {"adj2": adj2,
            "blk_tbl": jnp.asarray(blk_tbl),
            "counts": jnp.asarray(counts)}


# ----------------------------------------------------------------------------
# Pallas kernels
# ----------------------------------------------------------------------------
def _linear_kernel(x_ref, w_ref, b_ref, o_ref):
    o_ref[...] = (
        jnp.dot(x_ref[...], w_ref[...], preferred_element_type=jnp.float32)
        + b_ref[...]
    ).astype(o_ref.dtype)


def linear(x_bf16, w_t_bf16, b_f32, *, out_dtype, tm, vmem_limit):
    """x: (Np, Din_p) bf16, w_t: (Din_p, Dout_p) bf16, b: (1, Dout_p) f32."""
    n, din = x_bf16.shape
    dout = w_t_bf16.shape[1]
    return pl.pallas_call(
        _linear_kernel,
        out_shape=jax.ShapeDtypeStruct((n, dout), out_dtype),
        grid_spec=pltpu.PrefetchScalarGridSpec(
            num_scalar_prefetch=0,
            grid=(n // tm,),
            in_specs=[
                pl.BlockSpec((tm, din), lambda i: (i, 0)),
                _spec((din, dout), lambda i: (0, 0), single_buffer=True),
                _spec((1, dout), lambda i: (0, 0), single_buffer=True),
            ],
            out_specs=pl.BlockSpec((tm, dout), lambda i: (i, 0)),
        ),
        compiler_params=pltpu.CompilerParams(
            dimension_semantics=("parallel",),
            vmem_limit_bytes=vmem_limit,
        ),
    )(x_bf16, w_t_bf16, b_f32)


def _rgcn_layer_kernel(
    blk_ref,     # SMEM (nt, max_nb) i32: non-empty src-block ids per dst tile
    cnt_ref,     # SMEM (nt,)        i32: number of non-empty src blocks
    a_ref,       # (Rc*tm, tk)  bf16: adjacency rows (this dst tile / rel chunk)
    h_src_ref,   # (tk, Dp)     bf16: source-node features (reduction block)
    h_dst_ref,   # (tm, Dp)     bf16: dst-node features (self loop)
    w_rel_ref,   # (Rc, Dp, Dp) bf16: per-relation weights for this chunk
    w_loop_ref,  # (Dp, Dp)     bf16: self-loop weight (in x out)
    nb_ref,      # (4, Dp)      f32 : [ln_gamma, ln_beta, h_bias, lane_mask]
    o_ref,       # (tm, Dp)     bf16: output node features
    acc_ref,     # (Rc*tm, Dp)  f32 scratch: per-chunk AH accumulator
    loop_ref,    # (tm, Dp)     f32 scratch: self-loop message
    agg_ref,     # (tm, Dp)     f32 scratch: sum_r AH_r @ W_r across chunks
    *, d_real, tm, rc, mask_lanes,
):
    i = pl.program_id(0)
    r_chunk = pl.program_id(1)
    k = pl.program_id(2)
    n_rc = pl.num_programs(1)
    n_k = pl.num_programs(2)

    @pl.when(jnp.logical_and(r_chunk == 0, k == 0))
    def _():
        agg_ref[...] = jnp.zeros_like(agg_ref)
        # Self-loop message hoisted to the first step so it overlaps the
        # adjacency streaming instead of trailing the last DMA.
        loop_ref[...] = jnp.dot(
            h_dst_ref[...], w_loop_ref[...], preferred_element_type=jnp.float32
        )

    @pl.when(k == 0)
    def _():
        acc_ref[...] = jnp.zeros_like(acc_ref)

    # Stage 1 (memory bound): one fused matmul covering every relation in the
    # chunk.  Skipped for src blocks with no incident edges (block sparsity).
    @pl.when(k < cnt_ref[i])
    def _():
        acc_ref[...] += jnp.dot(
            a_ref[...], h_src_ref[...], preferred_element_type=jnp.float32
        )

    @pl.when(k == n_k - 1)
    def _():
        # Stage 2 (epilogue, once per dst tile per chunk): agg += sum_r AH_r@W_r.
        # f32 LHS keeps neighbor sums at full precision before projection.
        agg = agg_ref[...]
        for r in range(rc):
            agg = agg + jnp.dot(
                acc_ref[r * tm:(r + 1) * tm, :],
                w_rel_ref[r].astype(jnp.float32),
                preferred_element_type=jnp.float32,
            )
        agg_ref[...] = agg

    @pl.when(jnp.logical_and(r_chunk == n_rc - 1, k == n_k - 1))
    def _():
        agg = agg_ref[...]
        nb = nb_ref[...]
        gamma, beta, bias = nb[0:1, :], nb[1:2, :], nb[2:3, :]
        # LayerNorm over the first d_real lanes (precomputed 0/1 lane mask;
        # masking skipped at Python level when the feature dim is unpadded).
        inv_d = 1.0 / float(d_real)
        if mask_lanes:
            lane_m = nb[3:4, :]
            mean = jnp.sum(agg * lane_m, axis=-1, keepdims=True) * inv_d
            diff = (agg - mean) * lane_m
        else:
            mean = jnp.sum(agg, axis=-1, keepdims=True) * inv_d
            diff = agg - mean
        var = jnp.sum(diff * diff, axis=-1, keepdims=True) * inv_d
        xn = diff * jax.lax.rsqrt(var + 1e-5)
        # LayerNorm -> + h_bias -> + self loop -> ReLU (dropout = identity).
        out = xn * gamma + beta + bias + loop_ref[...]
        o_ref[...] = jnp.maximum(out, 0.0).astype(o_ref.dtype)


def rgcn_layer(adj2, blk_tbl, counts, h_bf16, w_rel, w_loop_t, norm_bias, *,
               plan, d_real):
    """One RelGraphConv layer (bf16 in / bf16 out, f32 accumulation)."""
    n_pad, dp, tm, tk = plan["n_pad"], plan["dp"], plan["tm"], plan["tk"]
    rc, n_rc, nt = plan["rc"], plan["n_rc"], plan["nt"]
    max_nb = blk_tbl.shape[1]
    mask_lanes = (d_real != dp)

    kernel = functools.partial(_rgcn_layer_kernel, d_real=d_real, tm=tm, rc=rc,
                               mask_lanes=mask_lanes)

    return pl.pallas_call(
        kernel,
        out_shape=jax.ShapeDtypeStruct((n_pad, dp), jnp.bfloat16),
        grid_spec=pltpu.PrefetchScalarGridSpec(
            num_scalar_prefetch=2,
            grid=(nt, n_rc, max_nb),
            in_specs=[
                # adjacency rows: data-dependent src block via occupancy table
                pl.BlockSpec((rc * tm, tk),
                             lambda i, r, k, blk, cnt: (i * n_rc + r, blk[i, k])),
                pl.BlockSpec((tk, dp),
                             lambda i, r, k, blk, cnt: (blk[i, k], 0)),
                # h_dst: varies with the parallel dst axis -> keep double-buffered
                pl.BlockSpec((tm, dp),
                             lambda i, r, k, blk, cnt: (i, 0)),
                _spec((rc, dp, dp),
                      lambda i, r, k, blk, cnt: (r, 0, 0),
                      single_buffer=(n_rc == 1)),
                _spec((dp, dp),
                      lambda i, r, k, blk, cnt: (0, 0), single_buffer=True),
                _spec((4, dp),
                      lambda i, r, k, blk, cnt: (0, 0), single_buffer=True),
            ],
            out_specs=pl.BlockSpec((tm, dp), lambda i, r, k, blk, cnt: (i, 0)),
            scratch_shapes=[
                pltpu.VMEM((rc * tm, dp), jnp.float32),
                pltpu.VMEM((tm, dp), jnp.float32),
                pltpu.VMEM((tm, dp), jnp.float32),
            ],
        ),
        compiler_params=pltpu.CompilerParams(
            dimension_semantics=("parallel", "arbitrary", "arbitrary"),
            vmem_limit_bytes=plan["vmem_limit"],
        ),
    )(blk_tbl, counts, adj2, h_bf16, h_bf16, w_rel, w_loop_t, norm_bias)


# ----------------------------------------------------------------------------
# Parameter construction (deterministic, mirrors the PyTorch shapes; padded)
# ----------------------------------------------------------------------------
def _xavier(key, shape, gain=1.0):
    fan_in, fan_out = shape[-2], shape[-1]
    std = gain * (2.0 / (fan_in + fan_out)) ** 0.5
    return std * jax.random.normal(key, shape, dtype=jnp.float32)


def make_rgcn_params(key, in_dim, h_dim, out_dim, num_rels, num_bases=-1,
                     num_hidden_layers=2):
    if num_bases is None or num_bases > num_rels or num_bases <= 0:
        num_bases = num_rels
    gain = 2.0 ** 0.5  # nn.init.calculate_gain('relu')

    in_p = _round_up(in_dim, 128)
    dp = _round_up(h_dim, 128)
    out_p = _round_up(out_dim, 128)

    keys = iter(jax.random.split(key, 2 + 3 * num_hidden_layers))

    params = {
        "num_rels": num_rels,
        "in_dim": in_dim,
        "h_dim": h_dim,
        "out_dim": out_dim,
        # nn.Linear weights stored transposed (in, out), zero-padded, bf16.
        "i2h_w_t": _pad2(_xavier(next(keys), (in_dim, h_dim), gain),
                         in_p, dp).astype(jnp.bfloat16),
        "i2h_b": jnp.zeros((1, dp), jnp.float32),
        "h2o_w_t": _pad2(_xavier(next(keys), (h_dim, out_dim), gain),
                         dp, out_p).astype(jnp.bfloat16),
        "h2o_b": jnp.zeros((1, out_p), jnp.float32),
        "layers": [],
    }

    lane_mask = _pad2(jnp.ones((1, h_dim), jnp.float32), 1, dp)
    for _ in range(num_hidden_layers):
        basis = _xavier(next(keys), (num_bases, h_dim, h_dim), gain)
        if num_bases < num_rels:
            w_comp = _xavier(next(keys), (num_rels, num_bases), gain)
            # basis composition (glue matmul): W_r = sum_b a_rb V_b
            w_rel = jnp.einsum("rb,bio->rio", w_comp, basis)
        else:
            w_rel = basis
        w_rel_p = jnp.pad(
            w_rel, ((0, 0), (0, dp - h_dim), (0, dp - h_dim))
        ).astype(jnp.bfloat16)

        loop_w = _xavier(next(keys), (h_dim, h_dim), gain)
        norm_bias = jnp.concatenate(
            [
                lane_mask,                        # ln_gamma (init = 1)
                jnp.zeros((1, dp), jnp.float32),  # ln_beta
                jnp.zeros((1, dp), jnp.float32),  # h_bias
                lane_mask,                        # lane mask for padded features
            ],
            axis=0,
        )
        params["layers"].append(
            {
                "w_rel": w_rel_p,                                        # (R,Dp,Dp)
                "loop_w_t": _pad2(loop_w, dp, dp).astype(jnp.bfloat16),  # (Dp,Dp)
                "norm_bias": norm_bias,                                  # (4,Dp)
            }
        )
    return params


# ----------------------------------------------------------------------------
# Forward pass (matches RGCN.forward semantics, eval mode)
# ----------------------------------------------------------------------------
def rgcn_forward(params, plan, inputs, graph, embedding=True):
    n = inputs.shape[0]
    x = inputs.reshape(n, -1).astype(jnp.float32)   # h = inputs.view(N, -1)
    in_dim = x.shape[1]
    h_dim = params["h_dim"]
    out_dim = params["out_dim"]

    n_pad, dp, tm = plan["n_pad"], plan["dp"], plan["tm"]
    in_p = _round_up(in_dim, 128)
    vmem_limit = plan["vmem_limit"]

    if embedding:
        x_p = _pad2(x, n_pad, in_p).astype(jnp.bfloat16)
        h = linear(x_p, params["i2h_w_t"], params["i2h_b"],
                   out_dtype=jnp.bfloat16, tm=tm, vmem_limit=vmem_limit)
    else:
        h = _pad2(x, n_pad, dp).astype(jnp.bfloat16)

    for layer in params["layers"]:
        w_rel = layer["w_rel"]
        if w_rel.shape[0] < plan["r_pad"]:  # pad relations to the chunk multiple
            w_rel = jnp.pad(
                w_rel, ((0, plan["r_pad"] - w_rel.shape[0]), (0, 0), (0, 0)))
        h = rgcn_layer(
            graph["adj2"], graph["blk_tbl"], graph["counts"], h,
            w_rel, layer["loop_w_t"], layer["norm_bias"],
            plan=plan, d_real=h_dim,
        )

    out = linear(h, params["h2o_w_t"], params["h2o_b"],
                 out_dtype=jnp.float32, tm=tm, vmem_limit=vmem_limit)
    return out[:n, :out_dim]


# ----------------------------------------------------------------------------
if __name__ == "__main__":
    key = jax.random.PRNGKey(0)
    k_in, k_src, k_dst, k_ety, k_ew, k_nrm, k_par = jax.random.split(key, 7)

    # small shapes
    N, IN_DIM, H_DIM, OUT_DIM = 16, 32, 32, 8
    NUM_RELS, NUM_HIDDEN, E = 3, 2, 48

    # inputs: (N, 4, 8) -> flattened to (N, 32) inside forward (the .view call)
    inputs = jax.random.normal(k_in, (N, 4, 8), dtype=jnp.float32)

    # synthetic graph
    src = jax.random.randint(k_src, (E,), 0, N)
    dst = jax.random.randint(k_dst, (E,), 0, N)
    etypes = jax.random.randint(k_ety, (E,), 0, NUM_RELS)
    e_w = jax.random.uniform(k_ew, (E, 1), dtype=jnp.float32)    # edge weights
    norm = jax.random.uniform(k_nrm, (E, 1), dtype=jnp.float32)  # edge normalizer

    params = make_rgcn_params(
        k_par, IN_DIM, H_DIM, OUT_DIM, NUM_RELS,
        num_bases=-1, num_hidden_layers=NUM_HIDDEN,
    )

    # Static-graph preparation: dense blocked adjacency + occupancy tables are
    # built ONCE on the host and reused across layers / forward calls.
    plan = make_plan(N, H_DIM, NUM_RELS)
    graph = build_graph_blocks(plan, src, dst, etypes, e_w, norm)

    fwd = jax.jit(functools.partial(rgcn_forward, params, plan))
    out = fwd(inputs, graph)
    jax.block_until_ready(out)

    assert out.shape == (N, OUT_DIM) and out.dtype == jnp.float32
    assert bool(jnp.all(jnp.isfinite(out)))
    print("KERNEL_OK")
</pallas_src>

<mosaic_0001>
module attributes {stable_mosaic.version = 11 : i64} {
  func.func @_linear_kernel(%arg0: i32, %arg1: memref<64x128xbf16, #tpu.memory_space<vmem>>, %arg2: memref<128x128xbf16, #tpu.memory_space<vmem>>, %arg3: memref<1x128xf32, #tpu.memory_space<vmem>>, %arg4: memref<64x128xf32, #tpu.memory_space<vmem>>) attributes {dimension_semantics = [#tpu.dimension_semantics<parallel>], iteration_bounds = array<i64: 2>, scalar_prefetch = 0 : i64, scratch_operands = 0 : i64, tpu.core_type = #tpu.core_type<tc>, window_params = [{transform_indices = @transform_0, window_bounds = array<i64: 64, 128>}, {pipeline_mode = #tpu.pipeline_mode<synchronous>, transform_indices = @transform_1, window_bounds = array<i64: 128, 128>}, {pipeline_mode = #tpu.pipeline_mode<synchronous>, transform_indices = @transform_2, window_bounds = array<i64: 1, 128>}, {transform_indices = @transform_3, window_bounds = array<i64: 64, 128>}]} {
    %c0 = arith.constant 0 : index
    %c0_0 = arith.constant 0 : index
    %0 = vector.load %arg1[%c0, %c0_0] : memref<64x128xbf16, #tpu.memory_space<vmem>>, vector<64x128xbf16>
    %c0_1 = arith.constant 0 : index
    %c0_2 = arith.constant 0 : index
    %1 = vector.load %arg2[%c0_1, %c0_2] : memref<128x128xbf16, #tpu.memory_space<vmem>>, vector<128x128xbf16>
    %cst = arith.constant dense<0.000000e+00> : vector<64x128xf32>
    %2 = tpu.matmul %0, %1, %cst {dimension_numbers = #tpu.dot_dimension_numbers<[1], [0], [0], [1], [0, 0, 1, 1], [], []>} : vector<64x128xbf16>, vector<128x128xbf16>, vector<64x128xf32> -> vector<64x128xf32>
    %c0_3 = arith.constant 0 : index
    %c0_4 = arith.constant 0 : index
    %3 = vector.load %arg3[%c0_3, %c0_4] : memref<1x128xf32, #tpu.memory_space<vmem>>, vector<1x128xf32>
    %4 = vector.broadcast %3 : vector<1x128xf32> to vector<64x128xf32>
    %5 = arith.addf %2, %4 : vector<64x128xf32>
    %c0_5 = arith.constant 0 : index
    %c0_6 = arith.constant 0 : index
    %6 = vector.load %arg4[%c0_5, %c0_6] : memref<64x128xf32, #tpu.memory_space<vmem>>, vector<64x128xf32>
    tpu.vector_store %arg4[%c0_5, %c0_6], %5 {strides = array<i32>} : memref<64x128xf32, #tpu.memory_space<vmem>>, vector<64x128xf32>,
    return
  }
  func.func @transform_0(%arg0: i32) -> (i32, i32) {
    %c0_i32 = arith.constant 0 : i32
    %c0_i32_0 = arith.constant 0 : i32
    return %arg0, %c0_i32 : i32, i32
  }
  func.func @transform_1(%arg0: i32) -> (i32, i32) {
    %c0_i32 = arith.constant 0 : i32
    %c0_i32_0 = arith.constant 0 : i32
    %c0_i32_1 = arith.constant 0 : i32
    return %c0_i32, %c0_i32_0 : i32, i32
  }
  func.func @transform_2(%arg0: i32) -> (i32, i32) {
    %c0_i32 = arith.constant 0 : i32
    %c0_i32_0 = arith.constant 0 : i32
    %c0_i32_1 = arith.constant 0 : i32
    return %c0_i32, %c0_i32_0 : i32, i32
  }
  func.func @transform_3(%arg0: i32) -> (i32, i32) {
    %c0_i32 = arith.constant 0 : i32
    %c0_i32_0 = arith.constant 0 : i32
    return %arg0, %c0_i32 : i32, i32
  }
}

module attributes {stable_mosaic.version = 11 : i64} {
  func.func @_rgcn_layer_kernel(%arg0: i32, %arg1: i32, %arg2: i32, %arg3: memref<2x1xi32, #tpu.memory_space<smem>>, %arg4: memref<2xi32, #tpu.memory_space<smem>>, %arg5: memref<192x128xbf16, #tpu.memory_space<vmem>>, %arg6: memref<128x128xbf16, #tpu.memory_space<vmem>>, %arg7: memref<64x128xbf16, #tpu.memory_space<vmem>>, %arg8: memref<3x128x128xbf16, #tpu.memory_space<vmem>>, %arg9: memref<128x128xbf16, #tpu.memory_space<vmem>>, %arg10: memref<4x128xf32, #tpu.memory_space<vmem>>, %arg11: memref<64x128xbf16, #tpu.memory_space<vmem>>, %arg12: memref<192x128xf32, #tpu.memory_space<vmem>>, %arg13: memref<64x128xf32, #tpu.memory_space<vmem>>, %arg14: memref<64x128xf32, #tpu.memory_space<vmem>>) attributes {dimension_semantics = [#tpu.dimension_semantics<parallel>, #tpu.dimension_semantics<arbitrary>, #tpu.dimension_semantics<arbitrary>], iteration_bounds = array<i64: 2, 1, 1>, scalar_prefetch = 2 : i64, scratch_operands = 3 : i64, tpu.core_type = #tpu.core_type<tc>, window_params = [{transform_indices = @transform_0, window_bounds = array<i64: 192, 128>}, {transform_indices = @transform_1, window_bounds = array<i64: 128, 128>}, {transform_indices = @transform_2, window_bounds = array<i64: 64, 128>}, {pipeline_mode = #tpu.pipeline_mode<synchronous>, transform_indices = @transform_3, window_bounds = array<i64: 3, 128, 128>}, {pipeline_mode = #tpu.pipeline_mode<synchronous>, transform_indices = @transform_4, window_bounds = array<i64: 128, 128>}, {pipeline_mode = #tpu.pipeline_mode<synchronous>, transform_indices = @transform_5, window_bounds = array<i64: 4, 128>}, {transform_indices = @transform_6, window_bounds = array<i64: 64, 128>}]} {
    %c0_i32 = arith.constant 0 : i32
    %0 = arith.cmpi eq, %arg1, %c0_i32 : i32
    %c0_i32_0 = arith.constant 0 : i32
    %1 = arith.cmpi eq, %arg2, %c0_i32_0 : i32
    %2 = arith.andi %0, %1 : i1
    %3 = arith.extui %2 : i1 to i32
    %c0_i32_1 = arith.constant 0 : i32
    %4 = arith.cmpi ne, %3, %c0_i32_1 : i32
    scf.if %4 {
      %cst = arith.constant 0.000000e+00 : f32
      %21 = vector.broadcast %cst : f32 to vector<64x128xf32>
      %c0 = arith.constant 0 : index
      %c0_10 = arith.constant 0 : index
      %22 = vector.load %arg14[%c0, %c0_10] : memref<64x128xf32, #tpu.memory_space<vmem>>, vector<64x128xf32>
      tpu.vector_store %arg14[%c0, %c0_10], %21 {strides = array<i32>} : memref<64x128xf32, #tpu.memory_space<vmem>>, vector<64x128xf32>,
      %c0_11 = arith.constant 0 : index
      %c0_12 = arith.constant 0 : index
      %23 = vector.load %arg7[%c0_11, %c0_12] : memref<64x128xbf16, #tpu.memory_space<vmem>>, vector<64x128xbf16>
      %c0_13 = arith.constant 0 : index
      %c0_14 = arith.constant 0 : index
      %24 = vector.load %arg9[%c0_13, %c0_14] : memref<128x128xbf16, #tpu.memory_space<vmem>>, vector<128x128xbf16>
      %cst_15 = arith.constant dense<0.000000e+00> : vector<64x128xf32>
      %25 = tpu.matmul %23, %24, %cst_15 {dimension_numbers = #tpu.dot_dimension_numbers<[1], [0], [0], [1], [0, 0, 1, 1], [], []>} : vector<64x128xbf16>, vector<128x128xbf16>, vector<64x128xf32> -> vector<64x128xf32>
      %c0_16 = arith.constant 0 : index
      %c0_17 = arith.constant 0 : index
      %26 = vector.load %arg13[%c0_16, %c0_17] : memref<64x128xf32, #tpu.memory_space<vmem>>, vector<64x128xf32>
      tpu.vector_store %arg13[%c0_16, %c0_17], %25 {strides = array<i32>} : memref<64x128xf32, #tpu.memory_space<vmem>>, vector<64x128xf32>,
    } else {
    }
    %c0_i32_2 = arith.constant 0 : i32
    %5 = arith.cmpi eq, %arg2, %c0_i32_2 : i32
    %6 = arith.extui %5 : i1 to i32
    %c0_i32_3 = arith.constant 0 : i32
    %7 = arith.cmpi ne, %6, %c0_i32_3 : i32
    scf.if %7 {
      %cst = arith.constant 0.000000e+00 : f32
      %21 = vector.broadcast %cst : f32 to vector<192x128xf32>
      %c0 = arith.constant 0 : index
      %c0_10 = arith.constant 0 : index
      %22 = vector.load %arg12[%c0, %c0_10] : memref<192x128xf32, #tpu.memory_space<vmem>>, vector<192x128xf32>
      tpu.vector_store %arg12[%c0, %c0_10], %21 {strides = array<i32>} : memref<192x128xf32, #tpu.memory_space<vmem>>, vector<192x128xf32>,
    } else {
    }
    %8 = arith.index_cast %arg0 : i32 to index
    %9 = memref.load %arg4[%8] : memref<2xi32, #tpu.memory_space<smem>>
    %10 = arith.cmpi slt, %arg2, %9 : i32
    %11 = arith.extui %10 : i1 to i32
    %c0_i32_4 = arith.constant 0 : i32
    %12 = arith.cmpi ne, %11, %c0_i32_4 : i32
    scf.if %12 {
      %c0 = arith.constant 0 : index
      %c0_10 = arith.constant 0 : index
      %21 = vector.load %arg12[%c0, %c0_10] : memref<192x128xf32, #tpu.memory_space<vmem>>, vector<192x128xf32>
      %c0_11 = arith.constant 0 : index
      %c0_12 = arith.constant 0 : index
      %22 = vector.load %arg5[%c0_11, %c0_12] : memref<192x128xbf16, #tpu.memory_space<vmem>>, vector<192x128xbf16>
      %c0_13 = arith.constant 0 : index
      %c0_14 = arith.constant 0 : index
      %23 = vector.load %arg6[%c0_13, %c0_14] : memref<128x128xbf16, #tpu.memory_space<vmem>>, vector<128x128xbf16>
      %cst = arith.constant dense<0.000000e+00> : vector<192x128xf32>
      %24 = tpu.matmul %22, %23, %cst {dimension_numbers = #tpu.dot_dimension_numbers<[1], [0], [0], [1], [0, 0, 1, 1], [], []>} : vector<192x128xbf16>, vector<128x128xbf16>, vector<192x128xf32> -> vector<192x128xf32>
      %25 = arith.addf %21, %24 : vector<192x128xf32>
      %c0_15 = arith.constant 0 : index
      %c0_16 = arith.constant 0 : index
      %26 = vector.load %arg12[%c0_15, %c0_16] : memref<192x128xf32, #tpu.memory_space<vmem>>, vector<192x128xf32>
      tpu.vector_store %arg12[%c0_15, %c0_16], %25 {strides = array<i32>} : memref<192x128xf32, #tpu.memory_space<vmem>>, vector<192x128xf32>,
    } else {
    }
    %c0_i32_5 = arith.constant 0 : i32
    %13 = arith.cmpi eq, %arg2, %c0_i32_5 : i32
    %14 = arith.extui %13 : i1 to i32
    %c0_i32_6 = arith.constant 0 : i32
    %15 = arith.cmpi ne, %14, %c0_i32_6 : i32
    scf.if %15 {
      %c0 = arith.constant 0 : index
      %c0_10 = arith.constant 0 : index
      %21 = vector.load %arg14[%c0, %c0_10] : memref<64x128xf32, #tpu.memory_space<vmem>>, vector<64x128xf32>
      %c0_11 = arith.constant 0 : index
      %c0_12 = arith.constant 0 : index
      %22 = vector.load %arg12[%c0_11, %c0_12] : memref<192x128xf32, #tpu.memory_space<vmem>>, vector<64x128xf32>
      %c0_13 = arith.constant 0 : index
      %c0_14 = arith.constant 0 : index
      %c0_15 = arith.constant 0 : index
      %23 = vector.load %arg8[%c0_13, %c0_14, %c0_15] : memref<3x128x128xbf16, #tpu.memory_space<vmem>>, vector<1x128x128xbf16>
      %24 = vector.shape_cast %23 : vector<1x128x128xbf16> to vector<128x128xbf16>
      %25 = arith.extf %24 : vector<128x128xbf16> to vector<128x128xf32>
      %cst = arith.constant dense<0.000000e+00> : vector<64x128xf32>
      %26 = tpu.matmul %22, %25, %cst {dimension_numbers = #tpu.dot_dimension_numbers<[1], [0], [0], [1], [0, 0, 1, 1], [], []>} : vector<64x128xf32>, vector<128x128xf32>, vector<64x128xf32> -> vector<64x128xf32>
      %27 = arith.addf %21, %26 : vector<64x128xf32>
      %c64 = arith.constant 64 : index
      %c0_16 = arith.constant 0 : index
      %28 = vector.load %arg12[%c64, %c0_16] : memref<192x128xf32, #tpu.memory_space<vmem>>, vector<64x128xf32>
      %c1 = arith.constant 1 : index
      %c0_17 = arith.constant 0 : index
      %c0_18 = arith.constant 0 : index
      %29 = vector.load %arg8[%c1, %c0_17, %c0_18] : memref<3x128x128xbf16, #tpu.memory_space<vmem>>, vector<1x128x128xbf16>
      %30 = vector.shape_cast %29 : vector<1x128x128xbf16> to vector<128x128xbf16>
      %31 = arith.extf %30 : vector<128x128xbf16> to vector<128x128xf32>
      %cst_19 = arith.constant dense<0.000000e+00> : vector<64x128xf32>
      %32 = tpu.matmul %28, %31, %cst_19 {dimension_numbers = #tpu.dot_dimension_numbers<[1], [0], [0], [1], [0, 0, 1, 1], [], []>} : vector<64x128xf32>, vector<128x128xf32>, vector<64x128xf32> -> vector<64x128xf32>
      %33 = arith.addf %27, %32 : vector<64x128xf32>
      %c128 = arith.constant 128 : index
      %c0_20 = arith.constant 0 : index
      %34 = vector.load %arg12[%c128, %c0_20] : memref<192x128xf32, #tpu.memory_space<vmem>>, vector<64x128xf32>
      %c2 = arith.constant 2 : index
      %c0_21 = arith.constant 0 : index
      %c0_22 = arith.constant 0 : index
      %35 = vector.load %arg8[%c2, %c0_21, %c0_22] : memref<3x128x128xbf16, #tpu.memory_space<vmem>>, vector<1x128x128xbf16>
      %36 = vector.shape_cast %35 : vector<1x128x128xbf16> to vector<128x128xbf16>
      %37 = arith.extf %36 : vector<128x128xbf16> to vector<128x128xf32>
      %cst_23 = arith.constant dense<0.000000e+00> : vector<64x128xf32>
      %38 = tpu.matmul %34, %37, %cst_23 {dimension_numbers = #tpu.dot_dimension_numbers<[1], [0], [0], [1], [0, 0, 1, 1], [], []>} : vector<64x128xf32>, vector<128x128xf32>, vector<64x128xf32> -> vector<64x128xf32>
      %39 = arith.addf %33, %38 : vector<64x128xf32>
      %c0_24 = arith.constant 0 : index
      %c0_25 = arith.constant 0 : index
      %40 = vector.load %arg14[%c0_24, %c0_25] : memref<64x128xf32, #tpu.memory_space<vmem>>, vector<64x128xf32>
      tpu.vector_store %arg14[%c0_24, %c0_25], %39 {strides = array<i32>} : memref<64x128xf32, #tpu.memory_space<vmem>>, vector<64x128xf32>,
    } else {
    }
    %c0_i32_7 = arith.constant 0 : i32
    %16 = arith.cmpi eq, %arg1, %c0_i32_7 : i32
    %c0_i32_8 = arith.constant 0 : i32
    %17 = arith.cmpi eq, %arg2, %c0_i32_8 : i32
    %18 = arith.andi %16, %17 : i1
    %19 = arith.extui %18 : i1 to i32
    %c0_i32_9 = arith.constant 0 : i32
    %20 = arith.cmpi ne, %19, %c0_i32_9 : i32
    scf.if %20 {
      %c0 = arith.constant 0 : index
      %c0_10 = arith.constant 0 : index
      %21 = vector.load %arg14[%c0, %c0_10] : memref<64x128xf32, #tpu.memory_space<vmem>>, vector<64x128xf32>
      %c0_11 = arith.constant 0 : index
      %c0_12 = arith.constant 0 : index
      %22 = vector.load %arg10[%c0_11, %c0_12] : memref<4x128xf32, #tpu.memory_space<vmem>>, vector<4x128xf32>
      %23 = vector.extract_strided_slice %22 {offsets = [0, 0], sizes = [1, 128], strides = [1, 1]} : vector<4x128xf32> to vector<1x128xf32>
      %24 = vector.extract_strided_slice %22 {offsets = [1, 0], sizes = [1, 128], strides = [1, 1]} : vector<4x128xf32> to vector<1x128xf32>
      %25 = vector.extract_strided_slice %22 {offsets = [2, 0], sizes = [1, 128], strides = [1, 1]} : vector<4x128xf32> to vector<1x128xf32>
      %26 = vector.extract_strided_slice %22 {offsets = [3, 0], sizes = [1, 128], strides = [1, 1]} : vector<4x128xf32> to vector<1x128xf32>
      %27 = vector.broadcast %26 : vector<1x128xf32> to vector<64x128xf32>
      %28 = arith.mulf %21, %27 : vector<64x128xf32>
      %cst = arith.constant dense<0.000000e+00> : vector<64xf32>
      %29 = vector.multi_reduction <add>, %28, %cst [1] : vector<64x128xf32> to vector<64xf32>
      %30 = vector.shape_cast %29 : vector<64xf32> to vector<64x1xf32>
      %cst_13 = arith.constant 3.125000e-02 : f32
      %31 = vector.broadcast %cst_13 : f32 to vector<64x1xf32>
      %32 = arith.mulf %30, %31 : vector<64x1xf32>
      %33 = vector.broadcast %32 : vector<64x1xf32> to vector<64x128xf32>
      %34 = arith.subf %21, %33 : vector<64x128xf32>
      %35 = vector.broadcast %26 : vector<1x128xf32> to vector<64x128xf32>
      %36 = arith.mulf %34, %35 : vector<64x128xf32>
      %37 = arith.mulf %36, %36 : vector<64x128xf32>
      %cst_14 = arith.constant dense<0.000000e+00> : vector<64xf32>
      %38 = vector.multi_reduction <add>, %37, %cst_14 [1] : vector<64x128xf32> to vector<64xf32>
      %39 = vector.shape_cast %38 : vector<64xf32> to vector<64x1xf32>
      %cst_15 = arith.constant 3.125000e-02 : f32
      %40 = vector.broadcast %cst_15 : f32 to vector<64x1xf32>
      %41 = arith.mulf %39, %40 : vector<64x1xf32>
      %cst_16 = arith.constant 9.99999974E-6 : f32
      %42 = vector.broadcast %cst_16 : f32 to vector<64x1xf32>
      %43 = arith.addf %41, %42 : vector<64x1xf32>
      %44 = math.rsqrt %43 : vector<64x1xf32>
      %45 = vector.broadcast %44 : vector<64x1xf32> to vector<64x128xf32>
      %46 = arith.mulf %36, %45 : vector<64x128xf32>
      %47 = vector.broadcast %23 : vector<1x128xf32> to vector<64x128xf32>
      %48 = arith.mulf %46, %47 : vector<64x128xf32>
      %49 = vector.broadcast %24 : vector<1x128xf32> to vector<64x128xf32>
      %50 = arith.addf %48, %49 : vector<64x128xf32>
      %51 = vector.broadcast %25 : vector<1x128xf32> to vector<64x128xf32>
      %52 = arith.addf %50, %51 : vector<64x128xf32>
      %c0_17 = arith.constant 0 : index
      %c0_18 = arith.constant 0 : index
      %53 = vector.load %arg13[%c0_17, %c0_18] : memref<64x128xf32, #tpu.memory_space<vmem>>, vector<64x128xf32>
      %54 = arith.addf %52, %53 : vector<64x128xf32>
      %cst_19 = arith.constant 0.000000e+00 : f32
      %55 = vector.broadcast %cst_19 : f32 to vector<64x128xf32>
      %56 = arith.maximumf %54, %55 : vector<64x128xf32>
      %57 = arith.truncf %56 : vector<64x128xf32> to vector<64x128xbf16>
      %c0_20 = arith.constant 0 : index
      %c0_21 = arith.constant 0 : index
      %58 = vector.load %arg11[%c0_20, %c0_21] : memref<64x128xbf16, #tpu.memory_space<vmem>>, vector<64x128xbf16>
      tpu.vector_store %arg11[%c0_20, %c0_21], %57 {strides = array<i32>} : memref<64x128xbf16, #tpu.memory_space<vmem>>, vector<64x128xbf16>,
    } else {
    }
    return
  }
  func.func @transform_0(%arg0: i32, %arg1: i32, %arg2: i32, %arg3: memref<2x1xi32, #tpu.memory_space<smem>>, %arg4: memref<2xi32, #tpu.memory_space<smem>>) -> (i32, i32) {
    %c1_i32 = arith.constant 1 : i32
    %0 = arith.muli %arg0, %c1_i32 : i32
    %1 = arith.addi %0, %arg1 : i32
    %2 = arith.index_cast %arg0 : i32 to index
    %3 = arith.index_cast %arg2 : i32 to index
    %4 = memref.load %arg3[%2, %3] : memref<2x1xi32, #tpu.memory_space<smem>>
    %c0_i32 = arith.constant 0 : i32
    return %1, %4 : i32, i32
  }
  func.func @transform_1(%arg0: i32, %arg1: i32, %arg2: i32, %arg3: memref<2x1xi32, #tpu.memory_space<smem>>, %arg4: memref<2xi32, #tpu.memory_space<smem>>) -> (i32, i32) {
    %0 = arith.index_cast %arg0 : i32 to index
    %1 = arith.index_cast %arg2 : i32 to index
    %2 = memref.load %arg3[%0, %1] : memref<2x1xi32, #tpu.memory_space<smem>>
    %c0_i32 = arith.constant 0 : i32
    %c0_i32_0 = arith.constant 0 : i32
    return %2, %c0_i32 : i32, i32
  }
  func.func @transform_2(%arg0: i32, %arg1: i32, %arg2: i32, %arg3: memref<2x1xi32, #tpu.memory_space<smem>>, %arg4: memref<2xi32, #tpu.memory_space<smem>>) -> (i32, i32) {
    %c0_i32 = arith.constant 0 : i32
    %c0_i32_0 = arith.constant 0 : i32
    return %arg0, %c0_i32 : i32, i32
  }
  func.func @transform_3(%arg0: i32, %arg1: i32, %arg2: i32, %arg3: memref<2x1xi32, #tpu.memory_space<smem>>, %arg4: memref<2xi32, #tpu.memory_space<smem>>) -> (i32, i32, i32) {
    %c0_i32 = arith.constant 0 : i32
    %c0_i32_0 = arith.constant 0 : i32
    %c0_i32_1 = arith.constant 0 : i32
    return %arg1, %c0_i32, %c0_i32_0 : i32, i32, i32
  }
  func.func @transform_4(%arg0: i32, %arg1: i32, %arg2: i32, %arg3: memref<2x1xi32, #tpu.memory_space<smem>>, %arg4: memref<2xi32, #tpu.memory_space<smem>>) -> (i32, i32) {
    %c0_i32 = arith.constant 0 : i32
    %c0_i32_0 = arith.constant 0 : i32
    %c0_i32_1 = arith.constant 0 : i32
    return %c0_i32, %c0_i32_0 : i32, i32
  }
  func.func @transform_5(%arg0: i32, %arg1: i32, %arg2: i32, %arg3: memref<2x1xi32, #tpu.memory_space<smem>>, %arg4: memref<2xi32, #tpu.memory_space<smem>>) -> (i32, i32) {
    %c0_i32 = arith.constant 0 : i32
    %c0_i32_0 = arith.constant 0 : i32
    %c0_i32_1 = arith.constant 0 : i32
    return %c0_i32, %c0_i32_0 : i32, i32
  }
  func.func @transform_6(%arg0: i32, %arg1: i32, %arg2: i32, %arg3: memref<2x1xi32, #tpu.memory_space<smem>>, %arg4: memref<2xi32, #tpu.memory_space<smem>>) -> (i32, i32) {
    %c0_i32 = arith.constant 0 : i32
    %c0_i32_0 = arith.constant 0 : i32
    return %arg0, %c0_i32 : i32, i32
  }
}

module attributes {stable_mosaic.version = 11 : i64} {
  func.func @_linear_kernel(%arg0: i32, %arg1: memref<64x128xbf16, #tpu.memory_space<vmem>>, %arg2: memref<128x128xbf16, #tpu.memory_space<vmem>>, %arg3: memref<1x128xf32, #tpu.memory_space<vmem>>, %arg4: memref<64x128xbf16, #tpu.memory_space<vmem>>) attributes {dimension_semantics = [#tpu.dimension_semantics<parallel>], iteration_bounds = array<i64: 2>, scalar_prefetch = 0 : i64, scratch_operands = 0 : i64, tpu.core_type = #tpu.core_type<tc>, window_params = [{transform_indices = @transform_0, window_bounds = array<i64: 64, 128>}, {pipeline_mode = #tpu.pipeline_mode<synchronous>, transform_indices = @transform_1, window_bounds = array<i64: 128, 128>}, {pipeline_mode = #tpu.pipeline_mode<synchronous>, transform_indices = @transform_2, window_bounds = array<i64: 1, 128>}, {transform_indices = @transform_3, window_bounds = array<i64: 64, 128>}]} {
    %c0 = arith.constant 0 : index
    %c0_0 = arith.constant 0 : index
    %0 = vector.load %arg1[%c0, %c0_0] : memref<64x128xbf16, #tpu.memory_space<vmem>>, vector<64x128xbf16>
    %c0_1 = arith.constant 0 : index
    %c0_2 = arith.constant 0 : index
    %1 = vector.load %arg2[%c0_1, %c0_2] : memref<128x128xbf16, #tpu.memory_space<vmem>>, vector<128x128xbf16>
    %cst = arith.constant dense<0.000000e+00> : vector<64x128xf32>
    %2 = tpu.matmul %0, %1, %cst {dimension_numbers = #tpu.dot_dimension_numbers<[1], [0], [0], [1], [0, 0, 1, 1], [], []>} : vector<64x128xbf16>, vector<128x128xbf16>, vector<64x128xf32> -> vector<64x128xf32>
    %c0_3 = arith.constant 0 : index
    %c0_4 = arith.constant 0 : index
    %3 = vector.load %arg3[%c0_3, %c0_4] : memref<1x128xf32, #tpu.memory_space<vmem>>, vector<1x128xf32>
    %4 = vector.broadcast %3 : vector<1x128xf32> to vector<64x128xf32>
    %5 = arith.addf %2, %4 : vector<64x128xf32>
    %6 = arith.truncf %5 : vector<64x128xf32> to vector<64x128xbf16>
    %c0_5 = arith.constant 0 : index
    %c0_6 = arith.constant 0 : index
    %7 = vector.load %arg4[%c0_5, %c0_6] : memref<64x128xbf16, #tpu.memory_space<vmem>>, vector<64x128xbf16>
    tpu.vector_store %arg4[%c0_5, %c0_6], %6 {strides = array<i32>} : memref<64x128xbf16, #tpu.memory_space<vmem>>, vector<64x128xbf16>,
    return
  }
  func.func @transform_0(%arg0: i32) -> (i32, i32) {
    %c0_i32 = arith.constant 0 : i32
    %c0_i32_0 = arith.constant 0 : i32
    return %arg0, %c0_i32 : i32, i32
  }
  func.func @transform_1(%arg0: i32) -> (i32, i32) {
    %c0_i32 = arith.constant 0 : i32
    %c0_i32_0 = arith.constant 0 : i32
    %c0_i32_1 = arith.constant 0 : i32
    return %c0_i32, %c0_i32_0 : i32, i32
  }
  func.func @transform_2(%arg0: i32) -> (i32, i32) {
    %c0_i32 = arith.constant 0 : i32
    %c0_i32_0 = arith.constant 0 : i32
    %c0_i32_1 = arith.constant 0 : i32
    return %c0_i32, %c0_i32_0 : i32, i32
  }
  func.func @transform_3(%arg0: i32) -> (i32, i32) {
    %c0_i32 = arith.constant 0 : i32
    %c0_i32_0 = arith.constant 0 : i32
    return %arg0, %c0_i32 : i32, i32
  }
}

module attributes {stable_mosaic.version = 11 : i64} {
  func.func @_rgcn_layer_kernel(%arg0: i32, %arg1: i32, %arg2: i32, %arg3: memref<2x1xi32, #tpu.memory_space<smem>>, %arg4: memref<2xi32, #tpu.memory_space<smem>>, %arg5: memref<192x128xbf16, #tpu.memory_space<vmem>>, %arg6: memref<128x128xbf16, #tpu.memory_space<vmem>>, %arg7: memref<64x128xbf16, #tpu.memory_space<vmem>>, %arg8: memref<3x128x128xbf16, #tpu.memory_space<vmem>>, %arg9: memref<128x128xbf16, #tpu.memory_space<vmem>>, %arg10: memref<4x128xf32, #tpu.memory_space<vmem>>, %arg11: memref<64x128xbf16, #tpu.memory_space<vmem>>, %arg12: memref<192x128xf32, #tpu.memory_space<vmem>>, %arg13: memref<64x128xf32, #tpu.memory_space<vmem>>, %arg14: memref<64x128xf32, #tpu.memory_space<vmem>>) attributes {dimension_semantics = [#tpu.dimension_semantics<parallel>, #tpu.dimension_semantics<arbitrary>, #tpu.dimension_semantics<arbitrary>], iteration_bounds = array<i64: 2, 1, 1>, scalar_prefetch = 2 : i64, scratch_operands = 3 : i64, tpu.core_type = #tpu.core_type<tc>, window_params = [{transform_indices = @transform_0, window_bounds = array<i64: 192, 128>}, {transform_indices = @transform_1, window_bounds = array<i64: 128, 128>}, {transform_indices = @transform_2, window_bounds = array<i64: 64, 128>}, {pipeline_mode = #tpu.pipeline_mode<synchronous>, transform_indices = @transform_3, window_bounds = array<i64: 3, 128, 128>}, {pipeline_mode = #tpu.pipeline_mode<synchronous>, transform_indices = @transform_4, window_bounds = array<i64: 128, 128>}, {pipeline_mode = #tpu.pipeline_mode<synchronous>, transform_indices = @transform_5, window_bounds = array<i64: 4, 128>}, {transform_indices = @transform_6, window_bounds = array<i64: 64, 128>}]} {
    %c0_i32 = arith.constant 0 : i32
    %0 = arith.cmpi eq, %arg1, %c0_i32 : i32
    %c0_i32_0 = arith.constant 0 : i32
    %1 = arith.cmpi eq, %arg2, %c0_i32_0 : i32
    %2 = arith.andi %0, %1 : i1
    %3 = arith.extui %2 : i1 to i32
    %c0_i32_1 = arith.constant 0 : i32
    %4 = arith.cmpi ne, %3, %c0_i32_1 : i32
    scf.if %4 {
      %cst = arith.constant 0.000000e+00 : f32
      %21 = vector.broadcast %cst : f32 to vector<64x128xf32>
      %c0 = arith.constant 0 : index
      %c0_10 = arith.constant 0 : index
      %22 = vector.load %arg14[%c0, %c0_10] : memref<64x128xf32, #tpu.memory_space<vmem>>, vector<64x128xf32>
      tpu.vector_store %arg14[%c0, %c0_10], %21 {strides = array<i32>} : memref<64x128xf32, #tpu.memory_space<vmem>>, vector<64x128xf32>,
      %c0_11 = arith.constant 0 : index
      %c0_12 = arith.constant 0 : index
      %23 = vector.load %arg7[%c0_11, %c0_12] : memref<64x128xbf16, #tpu.memory_space<vmem>>, vector<64x128xbf16>
      %c0_13 = arith.constant 0 : index
      %c0_14 = arith.constant 0 : index
      %24 = vector.load %arg9[%c0_13, %c0_14] : memref<128x128xbf16, #tpu.memory_space<vmem>>, vector<128x128xbf16>
      %cst_15 = arith.constant dense<0.000000e+00> : vector<64x128xf32>
      %25 = tpu.matmul %23, %24, %cst_15 {dimension_numbers = #tpu.dot_dimension_numbers<[1], [0], [0], [1], [0, 0, 1, 1], [], []>} : vector<64x128xbf16>, vector<128x128xbf16>, vector<64x128xf32> -> vector<64x128xf32>
      %c0_16 = arith.constant 0 : index
      %c0_17 = arith.constant 0 : index
      %26 = vector.load %arg13[%c0_16, %c0_17] : memref<64x128xf32, #tpu.memory_space<vmem>>, vector<64x128xf32>
      tpu.vector_store %arg13[%c0_16, %c0_17], %25 {strides = array<i32>} : memref<64x128xf32, #tpu.memory_space<vmem>>, vector<64x128xf32>,
    } else {
    }
    %c0_i32_2 = arith.constant 0 : i32
    %5 = arith.cmpi eq, %arg2, %c0_i32_2 : i32
    %6 = arith.extui %5 : i1 to i32
    %c0_i32_3 = arith.constant 0 : i32
    %7 = arith.cmpi ne, %6, %c0_i32_3 : i32
    scf.if %7 {
      %cst = arith.constant 0.000000e+00 : f32
      %21 = vector.broadcast %cst : f32 to vector<192x128xf32>
      %c0 = arith.constant 0 : index
      %c0_10 = arith.constant 0 : index
      %22 = vector.load %arg12[%c0, %c0_10] : memref<192x128xf32, #tpu.memory_space<vmem>>, vector<192x128xf32>
      tpu.vector_store %arg12[%c0, %c0_10], %21 {strides = array<i32>} : memref<192x128xf32, #tpu.memory_space<vmem>>, vector<192x128xf32>,
    } else {
    }
    %8 = arith.index_cast %arg0 : i32 to index
    %9 = memref.load %arg4[%8] : memref<2xi32, #tpu.memory_space<smem>>
    %10 = arith.cmpi slt, %arg2, %9 : i32
    %11 = arith.extui %10 : i1 to i32
    %c0_i32_4 = arith.constant 0 : i32
    %12 = arith.cmpi ne, %11, %c0_i32_4 : i32
    scf.if %12 {
      %c0 = arith.constant 0 : index
      %c0_10 = arith.constant 0 : index
      %21 = vector.load %arg12[%c0, %c0_10] : memref<192x128xf32, #tpu.memory_space<vmem>>, vector<192x128xf32>
      %c0_11 = arith.constant 0 : index
      %c0_12 = arith.constant 0 : index
      %22 = vector.load %arg5[%c0_11, %c0_12] : memref<192x128xbf16, #tpu.memory_space<vmem>>, vector<192x128xbf16>
      %c0_13 = arith.constant 0 : index
      %c0_14 = arith.constant 0 : index
      %23 = vector.load %arg6[%c0_13, %c0_14] : memref<128x128xbf16, #tpu.memory_space<vmem>>, vector<128x128xbf16>
      %cst = arith.constant dense<0.000000e+00> : vector<192x128xf32>
      %24 = tpu.matmul %22, %23, %cst {dimension_numbers = #tpu.dot_dimension_numbers<[1], [0], [0], [1], [0, 0, 1, 1], [], []>} : vector<192x128xbf16>, vector<128x128xbf16>, vector<192x128xf32> -> vector<192x128xf32>
      %25 = arith.addf %21, %24 : vector<192x128xf32>
      %c0_15 = arith.constant 0 : index
      %c0_16 = arith.constant 0 : index
      %26 = vector.load %arg12[%c0_15, %c0_16] : memref<192x128xf32, #tpu.memory_space<vmem>>, vector<192x128xf32>
      tpu.vector_store %arg12[%c0_15, %c0_16], %25 {strides = array<i32>} : memref<192x128xf32, #tpu.memory_space<vmem>>, vector<192x128xf32>,
    } else {
    }
    %c0_i32_5 = arith.constant 0 : i32
    %13 = arith.cmpi eq, %arg2, %c0_i32_5 : i32
    %14 = arith.extui %13 : i1 to i32
    %c0_i32_6 = arith.constant 0 : i32
    %15 = arith.cmpi ne, %14, %c0_i32_6 : i32
    scf.if %15 {
      %c0 = arith.constant 0 : index
      %c0_10 = arith.constant 0 : index
      %21 = vector.load %arg14[%c0, %c0_10] : memref<64x128xf32, #tpu.memory_space<vmem>>, vector<64x128xf32>
      %c0_11 = arith.constant 0 : index
      %c0_12 = arith.constant 0 : index
      %22 = vector.load %arg12[%c0_11, %c0_12] : memref<192x128xf32, #tpu.memory_space<vmem>>, vector<64x128xf32>
      %c0_13 = arith.constant 0 : index
      %c0_14 = arith.constant 0 : index
      %c0_15 = arith.constant 0 : index
      %23 = vector.load %arg8[%c0_13, %c0_14, %c0_15] : memref<3x128x128xbf16, #tpu.memory_space<vmem>>, vector<1x128x128xbf16>
      %24 = vector.shape_cast %23 : vector<1x128x128xbf16> to vector<128x128xbf16>
      %25 = arith.extf %24 : vector<128x128xbf16> to vector<128x128xf32>
      %cst = arith.constant dense<0.000000e+00> : vector<64x128xf32>
      %26 = tpu.matmul %22, %25, %cst {dimension_numbers = #tpu.dot_dimension_numbers<[1], [0], [0], [1], [0, 0, 1, 1], [], []>} : vector<64x128xf32>, vector<128x128xf32>, vector<64x128xf32> -> vector<64x128xf32>
      %27 = arith.addf %21, %26 : vector<64x128xf32>
      %c64 = arith.constant 64 : index
      %c0_16 = arith.constant 0 : index
      %28 = vector.load %arg12[%c64, %c0_16] : memref<192x128xf32, #tpu.memory_space<vmem>>, vector<64x128xf32>
      %c1 = arith.constant 1 : index
      %c0_17 = arith.constant 0 : index
      %c0_18 = arith.constant 0 : index
      %29 = vector.load %arg8[%c1, %c0_17, %c0_18] : memref<3x128x128xbf16, #tpu.memory_space<vmem>>, vector<1x128x128xbf16>
      %30 = vector.shape_cast %29 : vector<1x128x128xbf16> to vector<128x128xbf16>
      %31 = arith.extf %30 : vector<128x128xbf16> to vector<128x128xf32>
      %cst_19 = arith.constant dense<0.000000e+00> : vector<64x128xf32>
      %32 = tpu.matmul %28, %31, %cst_19 {dimension_numbers = #tpu.dot_dimension_numbers<[1], [0], [0], [1], [0, 0, 1, 1], [], []>} : vector<64x128xf32>, vector<128x128xf32>, vector<64x128xf32> -> vector<64x128xf32>
      %33 = arith.addf %27, %32 : vector<64x128xf32>
      %c128 = arith.constant 128 : index
      %c0_20 = arith.constant 0 : index
      %34 = vector.load %arg12[%c128, %c0_20] : memref<192x128xf32, #tpu.memory_space<vmem>>, vector<64x128xf32>
      %c2 = arith.constant 2 : index
      %c0_21 = arith.constant 0 : index
      %c0_22 = arith.constant 0 : index
      %35 = vector.load %arg8[%c2, %c0_21, %c0_22] : memref<3x128x128xbf16, #tpu.memory_space<vmem>>, vector<1x128x128xbf16>
      %36 = vector.shape_cast %35 : vector<1x128x128xbf16> to vector<128x128xbf16>
      %37 = arith.extf %36 : vector<128x128xbf16> to vector<128x128xf32>
      %cst_23 = arith.constant dense<0.000000e+00> : vector<64x128xf32>
      %38 = tpu.matmul %34, %37, %cst_23 {dimension_numbers = #tpu.dot_dimension_numbers<[1], [0], [0], [1], [0, 0, 1, 1], [], []>} : vector<64x128xf32>, vector<128x128xf32>, vector<64x128xf32> -> vector<64x128xf32>
      %39 = arith.addf %33, %38 : vector<64x128xf32>
      %c0_24 = arith.constant 0 : index
      %c0_25 = arith.constant 0 : index
      %40 = vector.load %arg14[%c0_24, %c0_25] : memref<64x128xf32, #tpu.memory_space<vmem>>, vector<64x128xf32>
      tpu.vector_store %arg14[%c0_24, %c0_25], %39 {strides = array<i32>} : memref<64x128xf32, #tpu.memory_space<vmem>>, vector<64x128xf32>,
    } else {
    }
    %c0_i32_7 = arith.constant 0 : i32
    %16 = arith.cmpi eq, %arg1, %c0_i32_7 : i32
    %c0_i32_8 = arith.constant 0 : i32
    %17 = arith.cmpi eq, %arg2, %c0_i32_8 : i32
    %18 = arith.andi %16, %17 : i1
    %19 = arith.extui %18 : i1 to i32
    %c0_i32_9 = arith.constant 0 : i32
    %20 = arith.cmpi ne, %19, %c0_i32_9 : i32
    scf.if %20 {
      %c0 = arith.constant 0 : index
      %c0_10 = arith.constant 0 : index
      %21 = vector.load %arg14[%c0, %c0_10] : memref<64x128xf32, #tpu.memory_space<vmem>>, vector<64x128xf32>
      %c0_11 = arith.constant 0 : index
      %c0_12 = arith.constant 0 : index
      %22 = vector.load %arg10[%c0_11, %c0_12] : memref<4x128xf32, #tpu.memory_space<vmem>>, vector<4x128xf32>
      %23 = vector.extract_strided_slice %22 {offsets = [0, 0], sizes = [1, 128], strides = [1, 1]} : vector<4x128xf32> to vector<1x128xf32>
      %24 = vector.extract_strided_slice %22 {offsets = [1, 0], sizes = [1, 128], strides = [1, 1]} : vector<4x128xf32> to vector<1x128xf32>
      %25 = vector.extract_strided_slice %22 {offsets = [2, 0], sizes = [1, 128], strides = [1, 1]} : vector<4x128xf32> to vector<1x128xf32>
      %26 = vector.extract_strided_slice %22 {offsets = [3, 0], sizes = [1, 128], strides = [1, 1]} : vector<4x128xf32> to vector<1x128xf32>
      %27 = vector.broadcast %26 : vector<1x128xf32> to vector<64x128xf32>
      %28 = arith.mulf %21, %27 : vector<64x128xf32>
      %cst = arith.constant dense<0.000000e+00> : vector<64xf32>
      %29 = vector.multi_reduction <add>, %28, %cst [1] : vector<64x128xf32> to vector<64xf32>
      %30 = vector.shape_cast %29 : vector<64xf32> to vector<64x1xf32>
      %cst_13 = arith.constant 3.125000e-02 : f32
      %31 = vector.broadcast %cst_13 : f32 to vector<64x1xf32>
      %32 = arith.mulf %30, %31 : vector<64x1xf32>
      %33 = vector.broadcast %32 : vector<64x1xf32> to vector<64x128xf32>
      %34 = arith.subf %21, %33 : vector<64x128xf32>
      %35 = vector.broadcast %26 : vector<1x128xf32> to vector<64x128xf32>
      %36 = arith.mulf %34, %35 : vector<64x128xf32>
      %37 = arith.mulf %36, %36 : vector<64x128xf32>
      %cst_14 = arith.constant dense<0.000000e+00> : vector<64xf32>
      %38 = vector.multi_reduction <add>, %37, %cst_14 [1] : vector<64x128xf32> to vector<64xf32>
      %39 = vector.shape_cast %38 : vector<64xf32> to vector<64x1xf32>
      %cst_15 = arith.constant 3.125000e-02 : f32
      %40 = vector.broadcast %cst_15 : f32 to vector<64x1xf32>
      %41 = arith.mulf %39, %40 : vector<64x1xf32>
      %cst_16 = arith.constant 9.99999974E-6 : f32
      %42 = vector.broadcast %cst_16 : f32 to vector<64x1xf32>
      %43 = arith.addf %41, %42 : vector<64x1xf32>
      %44 = math.rsqrt %43 : vector<64x1xf32>
      %45 = vector.broadcast %44 : vector<64x1xf32> to vector<64x128xf32>
      %46 = arith.mulf %36, %45 : vector<64x128xf32>
      %47 = vector.broadcast %23 : vector<1x128xf32> to vector<64x128xf32>
      %48 = arith.mulf %46, %47 : vector<64x128xf32>
      %49 = vector.broadcast %24 : vector<1x128xf32> to vector<64x128xf32>
      %50 = arith.addf %48, %49 : vector<64x128xf32>
      %51 = vector.broadcast %25 : vector<1x128xf32> to vector<64x128xf32>
      %52 = arith.addf %50, %51 : vector<64x128xf32>
      %c0_17 = arith.constant 0 : index
      %c0_18 = arith.constant 0 : index
      %53 = vector.load %arg13[%c0_17, %c0_18] : memref<64x128xf32, #tpu.memory_space<vmem>>, vector<64x128xf32>
      %54 = arith.addf %52, %53 : vector<64x128xf32>
      %cst_19 = arith.constant 0.000000e+00 : f32
      %55 = vector.broadcast %cst_19 : f32 to vector<64x128xf32>
      %56 = arith.maximumf %54, %55 : vector<64x128xf32>
      %57 = arith.truncf %56 : vector<64x128xf32> to vector<64x128xbf16>
      %c0_20 = arith.constant 0 : index
      %c0_21 = arith.constant 0 : index
      %58 = vector.load %arg11[%c0_20, %c0_21] : memref<64x128xbf16, #tpu.memory_space<vmem>>, vector<64x128xbf16>
      tpu.vector_store %arg11[%c0_20, %c0_21], %57 {strides = array<i32>} : memref<64x128xbf16, #tpu.memory_space<vmem>>, vector<64x128xbf16>,
    } else {
    }
    return
  }
  func.func @transform_0(%arg0: i32, %arg1: i32, %arg2: i32, %arg3: memref<2x1xi32, #tpu.memory_space<smem>>, %arg4: memref<2xi32, #tpu.memory_space<smem>>) -> (i32, i32) {
    %c1_i32 = arith.constant 1 : i32
    %0 = arith.muli %arg0, %c1_i32 : i32
    %1 = arith.addi %0, %arg1 : i32
    %2 = arith.index_cast %arg0 : i32 to index
    %3 = arith.index_cast %arg2 : i32 to index
    %4 = memref.load %arg3[%2, %3] : memref<2x1xi32, #tpu.memory_space<smem>>
    %c0_i32 = arith.constant 0 : i32
    return %1, %4 : i32, i32
  }
  func.func @transform_1(%arg0: i32, %arg1: i32, %arg2: i32, %arg3: memref<2x1xi32, #tpu.memory_space<smem>>, %arg4: memref<2xi32, #tpu.memory_space<smem>>) -> (i32, i32) {
    %0 = arith.index_cast %arg0 : i32 to index
    %1 = arith.index_cast %arg2 : i32 to index
    %2 = memref.load %arg3[%0, %1] : memref<2x1xi32, #tpu.memory_space<smem>>
    %c0_i32 = arith.constant 0 : i32
    %c0_i32_0 = arith.constant 0 : i32
    return %2, %c0_i32 : i32, i32
  }
  func.func @transform_2(%arg0: i32, %arg1: i32, %arg2: i32, %arg3: memref<2x1xi32, #tpu.memory_space<smem>>, %arg4: memref<2xi32, #tpu.memory_space<smem>>) -> (i32, i32) {
    %c0_i32 = arith.constant 0 : i32
    %c0_i32_0 = arith.constant 0 : i32
    return %arg0, %c0_i32 : i32, i32
  }
  func.func @transform_3(%arg0: i32, %arg1: i32, %arg2: i32, %arg3: memref<2x1xi32, #tpu.memory_space<smem>>, %arg4: memref<2xi32, #tpu.memory_space<smem>>) -> (i32, i32, i32) {
    %c0_i32 = arith.constant 0 : i32
    %c0_i32_0 = arith.constant 0 : i32
    %c0_i32_1 = arith.constant 0 : i32
    return %arg1, %c0_i32, %c0_i32_0 : i32, i32, i32
  }
  func.func @transform_4(%arg0: i32, %arg1: i32, %arg2: i32, %arg3: memref<2x1xi32, #tpu.memory_space<smem>>, %arg4: memref<2xi32, #tpu.memory_space<smem>>) -> (i32, i32) {
    %c0_i32 = arith.constant 0 : i32
    %c0_i32_0 = arith.constant 0 : i32
    %c0_i32_1 = arith.constant 0 : i32
    return %c0_i32, %c0_i32_0 : i32, i32
  }
  func.func @transform_5(%arg0: i32, %arg1: i32, %arg2: i32, %arg3: memref<2x1xi32, #tpu.memory_space<smem>>, %arg4: memref<2xi32, #tpu.memory_space<smem>>) -> (i32, i32) {
    %c0_i32 = arith.constant 0 : i32
    %c0_i32_0 = arith.constant 0 : i32
    %c0_i32_1 = arith.constant 0 : i32
    return %c0_i32, %c0_i32_0 : i32, i32
  }
  func.func @transform_6(%arg0: i32, %arg1: i32, %arg2: i32, %arg3: memref<2x1xi32, #tpu.memory_space<smem>>, %arg4: memref<2xi32, #tpu.memory_space<smem>>) -> (i32, i32) {
    %c0_i32 = arith.constant 0 : i32
    %c0_i32_0 = arith.constant 0 : i32
    return %arg0, %c0_i32 : i32, i32
  }
}

</mosaic_0001>

<llo_original>
// kernel: rgcn_forward.7
$region0: #{rgcn_forward.7}
  #allocation0 [shape = 'u32[]', space=smem, size = 0x4, offset = 0x4, fixed_abs, tag = 'smem constant byte address 0x4 - core index']
  #allocation1 [shape = 'u32[144,128]{1,0:T(1,128)}', space=vmem, size = 0x12000, scoped, tag = 'internal scratch']
  %s0 = inlined_call_operand.vmem [shape: bf16[128,128], index: 0, kind: input, shape index: {}]
  %s1 = inlined_call_operand.vmem [shape: bf16[128,128], index: 1, kind: input, shape index: {}]
  %s2 = inlined_call_operand.vmem [shape: f32[1,128], index: 2, kind: input, shape index: {}]
  %s3 = inlined_call_operand.vmem [shape: f32[128,128], index: 3, kind: output, shape index: {}]
  %s4 = sld [smem:[#allocation0]]
  $region45: #{rgcn_forward.7} parent=0
    _
  %s6 = ssub.s32 1, %s4
  %s7 = scalar_select 0, %s6, %s4
  loop: start=0, step=1, limit=4
  $region2: #{rgcn_forward.7} parent=0 // loop_pre_header
    _
  $region3: #{rgcn_forward.7} parent=0 // loop_header
    %s9 = sphi 0, %s13
    %p10 = scmp.ge.s32.totalorder %s9, 4
    %s19 = sphi 0, %s21
    %s22 = sphi 0, %s19
    %s23 = sphi 0, %s22
    %s39 = sphi 0, %s23
    %s43 = sphi 0, %s43
    %s45 = sphi 0, %s43
    %s46 = sphi 0, %s45
    %s60 = sphi 0, %s46
    %s64 = sphi 0, %s64
    %s66 = sphi 0, %s64
    %s67 = sphi 0, %s66
    %s81 = sphi 0, %s67
    %s87 = sphi 0, %s89
    %s90 = sphi 0, %s87
    %s91 = sphi 0, %s90
    %s107 = sphi 0, %s91
  $region4: #{rgcn_forward.7} parent=0 // loop_header_branch
    %12 = sbr.rel (%p10) target = $region8
  $region5: #{rgcn_forward.7} parent=0 // loop_body
    %s14 = ssub.s32 %s9, 1
    %s15 = ssub.s32 %s9, 2
    %s16 = sadd.s32 %s9, 1
    %s17 = ssub.s32 %s9, %s16
    %p18 = scmp.eq.s32.totalorder %s17, 0
    %s20 = sadd.s32 %s19, 1
    %s21 = scalar_select %p18, %s19, %s20
    %p24 = pneg %p18
    %p25 = scmp.eq.s32.totalorder %s9, 1
    %p26 = por %p24, %p25
    %p27 = scmp.ne.s32.totalorder %s19, %s22
    %p28 = scmp.eq.s32.totalorder %s9, 0
    %p29 = por %p27, %p28
    %p30 = scmp.ne.s32.totalorder %s19, %s22
    %p31 = scmp.eq.s32.totalorder %s14, 1
    %p32 = por %p30, %p31
    %p33 = scmp.ne.s32.totalorder %s22, %s23
    %p34 = scmp.eq.s32.totalorder %s14, 0
    %p35 = por %p33, %p34
    %p36 = scmp.ne.s32.totalorder %s22, %s23
    %p37 = scmp.eq.s32.totalorder %s15, 1
    %p38 = por %p36, %p37
    %p40 = scmp.ne.s32.totalorder %s23, %s39
    %p41 = scmp.eq.s32.totalorder %s15, 0
    %p42 = por %p40, %p41
    %s44 = sadd.s32 %s43, 1
    %p47 = scmp.eq.s32.totalorder %s9, 1
    %p48 = scmp.ne.s32.totalorder %s43, %s45
    %p49 = scmp.eq.s32.totalorder %s9, 0
    %p50 = por %p48, %p49
    %p51 = scmp.ne.s32.totalorder %s43, %s45
    %p52 = scmp.eq.s32.totalorder %s14, 1
    %p53 = por %p51, %p52
    %p54 = scmp.ne.s32.totalorder %s45, %s46
    %p55 = scmp.eq.s32.totalorder %s14, 0
    %p56 = por %p54, %p55
    %p57 = scmp.ne.s32.totalorder %s45, %s46
    %p58 = scmp.eq.s32.totalorder %s15, 1
    %p59 = por %p57, %p58
    %p61 = scmp.ne.s32.totalorder %s46, %s60
    %p62 = scmp.eq.s32.totalorder %s15, 0
    %p63 = por %p61, %p62
    %s65 = sadd.s32 %s64, 1
    %p68 = scmp.eq.s32.totalorder %s9, 1
    %p69 = scmp.ne.s32.totalorder %s64, %s66
    %p70 = scmp.eq.s32.totalorder %s9, 0
    %p71 = por %p69, %p70
    %p72 = scmp.ne.s32.totalorder %s64, %s66
    %p73 = scmp.eq.s32.totalorder %s14, 1
    %p74 = por %p72, %p73
    %p75 = scmp.ne.s32.totalorder %s66, %s67
    %p76 = scmp.eq.s32.totalorder %s14, 0
    %p77 = por %p75, %p76
    %p78 = scmp.ne.s32.totalorder %s66, %s67
    %p79 = scmp.eq.s32.totalorder %s15, 1
    %p80 = por %p78, %p79
    %p82 = scmp.ne.s32.totalorder %s67, %s81
    %p83 = scmp.eq.s32.totalorder %s15, 0
    %p84 = por %p82, %p83
    %s85 = ssub.s32 %s9, %s16
    %p86 = scmp.eq.s32.totalorder %s85, 0
    %s88 = sadd.s32 %s87, 1
    %s89 = scalar_select %p86, %s87, %s88
    %p92 = pneg %p86
    %p93 = scmp.eq.s32.totalorder %s9, 1
    %p94 = por %p92, %p93
    %p95 = scmp.ne.s32.totalorder %s87, %s90
    %p96 = scmp.eq.s32.totalorder %s9, 0
    %p97 = por %p95, %p96
    %p98 = scmp.ne.s32.totalorder %s87, %s90
    %p99 = scmp.eq.s32.totalorder %s14, 1
    %p100 = por %p98, %p99
    %p101 = scmp.ne.s32.totalorder %s90, %s91
    %p102 = scmp.eq.s32.totalorder %s14, 0
    %p103 = por %p101, %p102
    %p104 = scmp.ne.s32.totalorder %s90, %s91
    %p105 = scmp.eq.s32.totalorder %s15, 1
    %p106 = por %p104, %p105
    %p108 = scmp.ne.s32.totalorder %s91, %s107
    %p109 = scmp.eq.s32.totalorder %s15, 0
    %p110 = por %p108, %p109
    %p111 = scmp.le.s32.totalorder 1, %s9
    %p112 = scmp.lt.s32.totalorder %s9, 3
    %p113 = pnand %p111, %p112
    %p114 = pneg %p113
    // Predicated region
    $region9: #{rgcn_forward.7} parent=5 // pred_check
      _
    $region10: #{rgcn_forward.7} parent=5 // pred_check_branch
      %116 = sbr.rel (%p113) target = $region12
    $region11: #{rgcn_forward.7} parent=5 // pred_region
      %s117 = ssub.s32 %s9, 1
      // Predicated region
      $region13: #{rgcn_forward.7} parent=11 // pred_check
        %p118 = pneg %p56
      $region14: #{rgcn_forward.7} parent=11 // pred_check_branch
        %120 = sbr.rel (%p118) target = $region16
      $region15: #{rgcn_forward.7} parent=11 // pred_region
        _
      $region16: #{rgcn_forward.7} parent=11 // pred_fallthru
        _
      // Predicated region
      $region17: #{rgcn_forward.7} parent=11 // pred_check
        %p121 = pneg %p77
      $region18: #{rgcn_forward.7} parent=11 // pred_check_branch
        %123 = sbr.rel (%p121) target = $region20
      $region19: #{rgcn_forward.7} parent=11 // pred_region
        _
      $region20: #{rgcn_forward.7} parent=11 // pred_fallthru
        _
    $region12: #{rgcn_forward.7} parent=5 // pred_fallthru
      _
    %p124 = scmp.lt.s32.totalorder %s9, 2
    // Predicated region
    $region21: #{rgcn_forward.7} parent=5 // pred_check
      %p125 = pneg %p124
    $region22: #{rgcn_forward.7} parent=5 // pred_check_branch
      %127 = sbr.rel (%p125) target = $region24
    $region23: #{rgcn_forward.7} parent=5 // pred_region
      // Predicated region
      $region25: #{rgcn_forward.7} parent=23 // pred_check
        %p128 = pneg %p29
      $region26: #{rgcn_forward.7} parent=23 // pred_check_branch
        %130 = sbr.rel (%p128) target = $region28
      $region27: #{rgcn_forward.7} parent=23 // pred_region
        %s131 = smul.u32 8, %s9
        %p132 = scmp.lt.s32.totalorder %s131, 15
        %s133 = scalar_select %p132, %s131, 15
        %s134 = smul.addr %s133, 4
        %s135 = scalar_lea.vmem %s0, %s134
        %s136 = smul.u32 8, %s9
      $region28: #{rgcn_forward.7} parent=23 // pred_fallthru
        _
    $region24: #{rgcn_forward.7} parent=5 // pred_fallthru
      _
    %p137 = scmp.le.s32.totalorder 1, %s9
    %p138 = scmp.lt.s32.totalorder %s9, 3
    %p139 = pnand %p137, %p138
    %p140 = pneg %p139
    // Predicated region
    $region29: #{rgcn_forward.7} parent=5 // pred_check
      _
    $region30: #{rgcn_forward.7} parent=5 // pred_check_branch
      %142 = sbr.rel (%p139) target = $region32
    $region31: #{rgcn_forward.7} parent=5 // pred_region
      %s143 = ssub.s32 %s9, 1
      %s144 = smul.u32 8, %s14
      %p145 = scmp.lt.s32.totalorder %s144, 15
      %s146 = scalar_select %p145, %s144, 15
      %s147 = smul.addr %s146, 4
      %s148 = scalar_lea.vmem %s0, %s147
      %p149 = pneg %p35
      %p150 = pneg %p32
      %p151 = pneg %p56
      %p152 = pneg %p53
      %p153 = pneg %p77
      %p154 = pneg %p74
      %p155 = pneg %p103
      %p156 = pneg %p100
      %s157 = smul.u32 8, %s14
      %p158 = scmp.lt.s32.totalorder %s157, 15
      %s159 = scalar_select %p158, %s157, 15
      %s160 = smul.addr %s159, 8
      %s161 = scalar_lea.vmem %s3, %s160
      %s162 = smul.u32 8, %s14
      %p163 = scmp.lt.s32.totalorder %s162, 15
      %s164 = scalar_select %p163, %s162, 15
      %s165 = smul.addr %s164, 4
      %s166 = scalar_lea.vmem %s0, %s165
      %s167 = smul.u32 8, %s14
      %s168 = smul.u32 8, %s14
      %p169 = scmp.lt.s32.totalorder %s168, 15
      %s170 = scalar_select %p169, %s168, 15
      %s171 = smul.addr %s170, 8
      %s172 = scalar_lea.vmem %s3, %s171
      %s173 = smul.u32 8, %s14
      %v175 = vld [vmem:[%s166] sm:$0xf]
      %v176 = vld [vmem:[%s166 + $0x4] sm:$0xf]
      %v177 = vld [vmem:[%s166 + $0x8] sm:$0xf]
      %v178 = vld [vmem:[%s166 + $0xc] sm:$0xf]
      %v179 = vld [vmem:[%s166 + $0x10] sm:$0xf]
      %v180 = vld [vmem:[%s166 + $0x14] sm:$0xf]
      %v181 = vld [vmem:[%s166 + $0x18] sm:$0xf]
      %v182 = vld [vmem:[%s166 + $0x1c] sm:$0xf]
      %v183 = vld [vmem:[%s1] sm:$0xf]
      %v184 = vld [vmem:[%s1 + $0x4] sm:$0xf]
      %v185 = vld [vmem:[%s1 + $0x8] sm:$0xf]
      %v186 = vld [vmem:[%s1 + $0xc] sm:$0xf]
      %v187 = vld [vmem:[%s1 + $0x10] sm:$0xf]
      %v188 = vld [vmem:[%s1 + $0x14] sm:$0xf]
      %v189 = vld [vmem:[%s1 + $0x18] sm:$0xf]
      %v190 = vld [vmem:[%s1 + $0x1c] sm:$0xf]
      %v191 = vld [vmem:[%s1 + $0x20] sm:$0xf]
      %v192 = vld [vmem:[%s1 + $0x24] sm:$0xf]
      %v193 = vld [vmem:[%s1 + $0x28] sm:$0xf]
      %v194 = vld [vmem:[%s1 + $0x2c] sm:$0xf]
      %v195 = vld [vmem:[%s1 + $0x30] sm:$0xf]
      %v196 = vld [vmem:[%s1 + $0x34] sm:$0xf]
      %v197 = vld [vmem:[%s1 + $0x38] sm:$0xf]
      %v198 = vld [vmem:[%s1 + $0x3c] sm:$0xf]
      %v199 = vld [vmem:[%s2] sm:$0x1]
      %v201 = vlaneseq
      %v202 = vshrl.u32 %v201, 7
      %v203 = vsub.s32 0, %v202
      %v204 = vrot.slane %v199, %v203
      %v214 = vunpack.c.l.b16 %v175
      %v215 = vunpack.c.l.b16 %v176
      %v216 = vunpack.c.l.b16 %v177
      %v217 = vunpack.c.l.b16 %v178
      %v218 = vunpack.c.l.b16 %v179
      %v219 = vunpack.c.l.b16 %v180
      %v220 = vunpack.c.l.b16 %v181
      %v221 = vunpack.c.l.b16 %v182
      %v222 = vpack.c.b16 %v215, %v214
      %v223 = vpack.c.b16 %v217, %v216
      %v224 = vpack.c.b16 %v219, %v218
      %v225 = vpack.c.b16 %v221, %v220
      %v246 = vunpack.c.l.b16 %v183
      %v247 = vunpack.c.l.b16 %v184
      %v248 = vunpack.c.l.b16 %v185
      %v249 = vunpack.c.l.b16 %v186
      %v250 = vunpack.c.l.b16 %v187
      %v251 = vunpack.c.l.b16 %v188
      %v252 = vunpack.c.l.b16 %v189
      %v253 = vunpack.c.l.b16 %v190
      %v254 = vunpack.c.l.b16 %v191
      %v255 = vunpack.c.l.b16 %v192
      %v256 = vunpack.c.l.b16 %v193
      %v257 = vunpack.c.l.b16 %v194
      %v258 = vunpack.c.l.b16 %v195
      %v259 = vunpack.c.l.b16 %v196
      %v260 = vunpack.c.l.b16 %v197
      %v261 = vunpack.c.l.b16 %v198
      %v262 = vpack.c.b16 %v247, %v246
      %v263 = vpack.c.b16 %v249, %v248
      %v264 = vpack.c.b16 %v251, %v250
      %v265 = vpack.c.b16 %v253, %v252
      %v266 = vpack.c.b16 %v255, %v254
      %v267 = vpack.c.b16 %v257, %v256
      %v268 = vpack.c.b16 %v259, %v258
      %v269 = vpack.c.b16 %v261, %v260
      %278 = vmatprep.subr.bf16.mxu0 0
      %279 = vmatpush1.bf16.msra.mxu0 %v269
      %280 = vmatprep.subr.bf16.mxu0 0
      %281 = vmatpush1.bf16.msra.mxu0 %v268
      %282 = vmatprep.subr.bf16.mxu0 0
      %283 = vmatpush1.bf16.msra.mxu0 %v267
      %284 = vmatprep.subr.bf16.mxu0 0
      %285 = vmatpush1.bf16.msra.mxu0 %v266
      %286 = vmatprep.subr.bf16.mxu0 0
      %287 = vmatpush1.bf16.msra.mxu0 %v265
      %288 = vmatprep.subr.bf16.mxu0 0
      %289 = vmatpush1.bf16.msra.mxu0 %v264
      %290 = vmatprep.subr.bf16.mxu0 0
      %291 = vmatpush1.bf16.msra.mxu0 %v263
      %292 = vmatprep.subr.bf16.mxu0 0
      %293 = vmatpush1.bf16.msra.mxu0 %v262
      %294 = vmatprep.subr.bf16.mxu0 0
      %295 = vmatpush2.bf16.msra.mxu0 0
      %296 = vmatprep.subr.bf16.mxu0 0
      %297 = vmatpush2.bf16.msra.mxu0 0
      %298 = vmatprep.subr.bf16.mxu0 0
      %299 = vmatpush2.bf16.msra.mxu0 0
      %300 = vmatprep.subr.bf16.mxu0 0
      %301 = vmatpush2.bf16.msra.mxu0 0
      %302 = vmatprep.subr.bf16.mxu0 0
      %303 = vmatpush2.bf16.msra.mxu0 0
      %304 = vmatprep.subr.bf16.mxu0 0
      %305 = vmatpush2.bf16.msra.mxu0 0
      %306 = vmatprep.subr.bf16.mxu0 0
      %307 = vmatpush2.bf16.msra.mxu0 0
      %308 = vmatprep.subr.bf16.mxu0 0
      %309 = vmatpush2.bf16.msra.mxu0 0
      %310 = vmatprep.mubr.bf16.mxu0 0
      %311 = vmatmul.mubr.bf16.gmra.mxu0 %v222
      %v312 = vpop.f32.mrf.mxu0
      %v313 = vadd.f32 %v204, %v312
      %v314 = vpop.f32.mrf.mxu0
      %v315 = vpop.f32.mrf.mxu0
      %v316 = vadd.f32 %v204, %v315
      %v317 = vpop.f32.mrf.mxu0
      %318 = vmatprep.mubr.bf16.mxu0 0
      %319 = vmatmul.mubr.bf16.gmra.mxu0 %v223
      %v320 = vpop.f32.mrf.mxu0
      %v321 = vadd.f32 %v204, %v320
      %v322 = vpop.f32.mrf.mxu0
      %v323 = vpop.f32.mrf.mxu0
      %v324 = vadd.f32 %v204, %v323
      %v325 = vpop.f32.mrf.mxu0
      %326 = vmatprep.mubr.bf16.mxu0 0
      %327 = vmatmul.mubr.bf16.gmra.mxu0 %v224
      %v328 = vpop.f32.mrf.mxu0
      %v329 = vadd.f32 %v204, %v328
      %v330 = vpop.f32.mrf.mxu0
      %v331 = vpop.f32.mrf.mxu0
      %v332 = vadd.f32 %v204, %v331
      %v333 = vpop.f32.mrf.mxu0
      %334 = vmatprep.mubr.bf16.mxu0 0
      %335 = vmatmul.mubr.bf16.gmra.mxu0 %v225
      %v336 = vpop.f32.mrf.mxu0
      %v337 = vadd.f32 %v204, %v336
      %v338 = vpop.f32.mrf.mxu0
      %v339 = vpop.f32.mrf.mxu0
      %v340 = vadd.f32 %v204, %v339
      %v341 = vpop.f32.mrf.mxu0
      %342 = vdwg.mxu0
      %343 = vst [vmem:[%s172] sm:$0xff] %v313
      %344 = vst [vmem:[%s172 + $0x8] sm:$0xff] %v316
      %345 = vst [vmem:[%s172 + $0x10] sm:$0xff] %v321
      %346 = vst [vmem:[%s172 + $0x18] sm:$0xff] %v324
      %347 = vst [vmem:[%s172 + $0x20] sm:$0xff] %v329
      %348 = vst [vmem:[%s172 + $0x28] sm:$0xff] %v332
      %349 = vst [vmem:[%s172 + $0x30] sm:$0xff] %v337
      %350 = vst [vmem:[%s172 + $0x38] sm:$0xff] %v340
      %s351 = smul.u32 8, %s14
      %p352 = scmp.lt.s32.totalorder %s351, 15
      %s353 = scalar_select %p352, %s351, 15
      %s354 = smul.addr %s353, 8
      %s355 = scalar_lea.vmem %s3, %s354
      // Predicated region
      $region33: #{rgcn_forward.7} parent=31 // pred_check
        %p356 = pneg %p100
      $region34: #{rgcn_forward.7} parent=31 // pred_check_branch
        %358 = sbr.rel (%p356) target = $region36
      $region35: #{rgcn_forward.7} parent=31 // pred_region
        %s359 = smul.u32 8, %s14
      $region36: #{rgcn_forward.7} parent=31 // pred_fallthru
        _
    $region32: #{rgcn_forward.7} parent=5 // pred_fallthru
      _
    %p360 = scmp.le.s32.totalorder 2, %s9
    // Predicated region
    $region37: #{rgcn_forward.7} parent=5 // pred_check
      %p361 = pneg %p360
    $region38: #{rgcn_forward.7} parent=5 // pred_check_branch
      %363 = sbr.rel (%p361) target = $region40
    $region39: #{rgcn_forward.7} parent=5 // pred_region
      %s364 = ssub.s32 %s9, 2
      // Predicated region
      $region41: #{rgcn_forward.7} parent=39 // pred_check
        %p365 = pneg %p106
      $region42: #{rgcn_forward.7} parent=39 // pred_check_branch
        %367 = sbr.rel (%p365) target = $region44
      $region43: #{rgcn_forward.7} parent=39 // pred_region
        %s368 = smul.u32 8, %s15
        %p369 = scmp.lt.s32.totalorder %s368, 15
        %s370 = scalar_select %p369, %s368, 15
        %s371 = smul.addr %s370, 8
        %s372 = scalar_lea.vmem %s3, %s371
      $region44: #{rgcn_forward.7} parent=39 // pred_fallthru
        _
    $region40: #{rgcn_forward.7} parent=5 // pred_fallthru
      _
  $region6: #{rgcn_forward.7} parent=0 // loop_footer
    %s13 = sadd.s32 1, %s9
  $region7: #{rgcn_forward.7} parent=0 // loop_footer_branch
    %8 = sbr.rel target = $region3
  $region8: #{rgcn_forward.7} parent=0 // loop_exit
    _

// kernel: rgcn_forward.4
$region0: #{rgcn_forward.4}
  #allocation0 [shape = 'u32[]', space=smem, size = 0x4, offset = 0x4, fixed_abs, tag = 'smem constant byte address 0x4 - core index']
  #allocation1 [shape = 'u32[144,128]{1,0:T(1,128)}', space=vmem, size = 0x12000, scoped, tag = 'internal scratch']
  %s0 = inlined_call_operand.vmem [shape: bf16[128,128], index: 0, kind: input, shape index: {}]
  %s1 = inlined_call_operand.vmem [shape: bf16[128,128], index: 1, kind: input, shape index: {}]
  %s2 = inlined_call_operand.vmem [shape: f32[1,128], index: 2, kind: input, shape index: {}]
  %s3 = inlined_call_operand.vmem [shape: bf16[128,128], index: 3, kind: output, shape index: {}]
  %s4 = sld [smem:[#allocation0]]
  $region45: #{rgcn_forward.4} parent=0
    _
  %s6 = ssub.s32 1, %s4
  %s7 = scalar_select 0, %s6, %s4
  loop: start=0, step=1, limit=4
  $region2: #{rgcn_forward.4} parent=0 // loop_pre_header
    _
  $region3: #{rgcn_forward.4} parent=0 // loop_header
    %s9 = sphi 0, %s13
    %p10 = scmp.ge.s32.totalorder %s9, 4
    %s19 = sphi 0, %s21
    %s22 = sphi 0, %s19
    %s23 = sphi 0, %s22
    %s39 = sphi 0, %s23
    %s43 = sphi 0, %s43
    %s45 = sphi 0, %s43
    %s46 = sphi 0, %s45
    %s60 = sphi 0, %s46
    %s64 = sphi 0, %s64
    %s66 = sphi 0, %s64
    %s67 = sphi 0, %s66
    %s81 = sphi 0, %s67
    %s87 = sphi 0, %s89
    %s90 = sphi 0, %s87
    %s91 = sphi 0, %s90
    %s107 = sphi 0, %s91
  $region4: #{rgcn_forward.4} parent=0 // loop_header_branch
    %12 = sbr.rel (%p10) target = $region8
  $region5: #{rgcn_forward.4} parent=0 // loop_body
    %s14 = ssub.s32 %s9, 1
    %s15 = ssub.s32 %s9, 2
    %s16 = sadd.s32 %s9, 1
    %s17 = ssub.s32 %s9, %s16
    %p18 = scmp.eq.s32.totalorder %s17, 0
    %s20 = sadd.s32 %s19, 1
    %s21 = scalar_select %p18, %s19, %s20
    %p24 = pneg %p18
    %p25 = scmp.eq.s32.totalorder %s9, 1
    %p26 = por %p24, %p25
    %p27 = scmp.ne.s32.totalorder %s19, %s22
    %p28 = scmp.eq.s32.totalorder %s9, 0
    %p29 = por %p27, %p28
    %p30 = scmp.ne.s32.totalorder %s19, %s22
    %p31 = scmp.eq.s32.totalorder %s14, 1
    %p32 = por %p30, %p31
    %p33 = scmp.ne.s32.totalorder %s22, %s23
    %p34 = scmp.eq.s32.totalorder %s14, 0
    %p35 = por %p33, %p34
    %p36 = scmp.ne.s32.totalorder %s22, %s23
    %p37 = scmp.eq.s32.totalorder %s15, 1
    %p38 = por %p36, %p37
    %p40 = scmp.ne.s32.totalorder %s23, %s39
    %p41 = scmp.eq.s32.totalorder %s15, 0
    %p42 = por %p40, %p41
    %s44 = sadd.s32 %s43, 1
    %p47 = scmp.eq.s32.totalorder %s9, 1
    %p48 = scmp.ne.s32.totalorder %s43, %s45
    %p49 = scmp.eq.s32.totalorder %s9, 0
    %p50 = por %p48, %p49
    %p51 = scmp.ne.s32.totalorder %s43, %s45
    %p52 = scmp.eq.s32.totalorder %s14, 1
    %p53 = por %p51, %p52
    %p54 = scmp.ne.s32.totalorder %s45, %s46
    %p55 = scmp.eq.s32.totalorder %s14, 0
    %p56 = por %p54, %p55
    %p57 = scmp.ne.s32.totalorder %s45, %s46
    %p58 = scmp.eq.s32.totalorder %s15, 1
    %p59 = por %p57, %p58
    %p61 = scmp.ne.s32.totalorder %s46, %s60
    %p62 = scmp.eq.s32.totalorder %s15, 0
    %p63 = por %p61, %p62
    %s65 = sadd.s32 %s64, 1
    %p68 = scmp.eq.s32.totalorder %s9, 1
    %p69 = scmp.ne.s32.totalorder %s64, %s66
    %p70 = scmp.eq.s32.totalorder %s9, 0
    %p71 = por %p69, %p70
    %p72 = scmp.ne.s32.totalorder %s64, %s66
    %p73 = scmp.eq.s32.totalorder %s14, 1
    %p74 = por %p72, %p73
    %p75 = scmp.ne.s32.totalorder %s66, %s67
    %p76 = scmp.eq.s32.totalorder %s14, 0
    %p77 = por %p75, %p76
    %p78 = scmp.ne.s32.totalorder %s66, %s67
    %p79 = scmp.eq.s32.totalorder %s15, 1
    %p80 = por %p78, %p79
    %p82 = scmp.ne.s32.totalorder %s67, %s81
    %p83 = scmp.eq.s32.totalorder %s15, 0
    %p84 = por %p82, %p83
    %s85 = ssub.s32 %s9, %s16
    %p86 = scmp.eq.s32.totalorder %s85, 0
    %s88 = sadd.s32 %s87, 1
    %s89 = scalar_select %p86, %s87, %s88
    %p92 = pneg %p86
    %p93 = scmp.eq.s32.totalorder %s9, 1
    %p94 = por %p92, %p93
    %p95 = scmp.ne.s32.totalorder %s87, %s90
    %p96 = scmp.eq.s32.totalorder %s9, 0
    %p97 = por %p95, %p96
    %p98 = scmp.ne.s32.totalorder %s87, %s90
    %p99 = scmp.eq.s32.totalorder %s14, 1
    %p100 = por %p98, %p99
    %p101 = scmp.ne.s32.totalorder %s90, %s91
    %p102 = scmp.eq.s32.totalorder %s14, 0
    %p103 = por %p101, %p102
    %p104 = scmp.ne.s32.totalorder %s90, %s91
    %p105 = scmp.eq.s32.totalorder %s15, 1
    %p106 = por %p104, %p105
    %p108 = scmp.ne.s32.totalorder %s91, %s107
    %p109 = scmp.eq.s32.totalorder %s15, 0
    %p110 = por %p108, %p109
    %p111 = scmp.le.s32.totalorder 1, %s9
    %p112 = scmp.lt.s32.totalorder %s9, 3
    %p113 = pnand %p111, %p112
    %p114 = pneg %p113
    // Predicated region
    $region9: #{rgcn_forward.4} parent=5 // pred_check
      _
    $region10: #{rgcn_forward.4} parent=5 // pred_check_branch
      %116 = sbr.rel (%p113) target = $region12
    $region11: #{rgcn_forward.4} parent=5 // pred_region
      %s117 = ssub.s32 %s9, 1
      // Predicated region
      $region13: #{rgcn_forward.4} parent=11 // pred_check
        %p118 = pneg %p56
      $region14: #{rgcn_forward.4} parent=11 // pred_check_branch
        %120 = sbr.rel (%p118) target = $region16
      $region15: #{rgcn_forward.4} parent=11 // pred_region
        _
      $region16: #{rgcn_forward.4} parent=11 // pred_fallthru
        _
      // Predicated region
      $region17: #{rgcn_forward.4} parent=11 // pred_check
        %p121 = pneg %p77
      $region18: #{rgcn_forward.4} parent=11 // pred_check_branch
        %123 = sbr.rel (%p121) target = $region20
      $region19: #{rgcn_forward.4} parent=11 // pred_region
        _
      $region20: #{rgcn_forward.4} parent=11 // pred_fallthru
        _
    $region12: #{rgcn_forward.4} parent=5 // pred_fallthru
      _
    %p124 = scmp.lt.s32.totalorder %s9, 2
    // Predicated region
    $region21: #{rgcn_forward.4} parent=5 // pred_check
      %p125 = pneg %p124
    $region22: #{rgcn_forward.4} parent=5 // pred_check_branch
      %127 = sbr.rel (%p125) target = $region24
    $region23: #{rgcn_forward.4} parent=5 // pred_region
      // Predicated region
      $region25: #{rgcn_forward.4} parent=23 // pred_check
        %p128 = pneg %p29
      $region26: #{rgcn_forward.4} parent=23 // pred_check_branch
        %130 = sbr.rel (%p128) target = $region28
      $region27: #{rgcn_forward.4} parent=23 // pred_region
        %s131 = smul.u32 8, %s9
        %p132 = scmp.lt.s32.totalorder %s131, 15
        %s133 = scalar_select %p132, %s131, 15
        %s134 = smul.addr %s133, 4
        %s135 = scalar_lea.vmem %s0, %s134
        %s136 = smul.u32 8, %s9
      $region28: #{rgcn_forward.4} parent=23 // pred_fallthru
        _
    $region24: #{rgcn_forward.4} parent=5 // pred_fallthru
      _
    %p137 = scmp.le.s32.totalorder 1, %s9
    %p138 = scmp.lt.s32.totalorder %s9, 3
    %p139 = pnand %p137, %p138
    %p140 = pneg %p139
    // Predicated region
    $region29: #{rgcn_forward.4} parent=5 // pred_check
      _
    $region30: #{rgcn_forward.4} parent=5 // pred_check_branch
      %142 = sbr.rel (%p139) target = $region32
    $region31: #{rgcn_forward.4} parent=5 // pred_region
      %s143 = ssub.s32 %s9, 1
      %s144 = smul.u32 8, %s14
      %p145 = scmp.lt.s32.totalorder %s144, 15
      %s146 = scalar_select %p145, %s144, 15
      %s147 = smul.addr %s146, 4
      %s148 = scalar_lea.vmem %s0, %s147
      %p149 = pneg %p35
      %p150 = pneg %p32
      %p151 = pneg %p56
      %p152 = pneg %p53
      %p153 = pneg %p77
      %p154 = pneg %p74
      %p155 = pneg %p103
      %p156 = pneg %p100
      %s157 = smul.u32 8, %s14
      %p158 = scmp.lt.s32.totalorder %s157, 15
      %s159 = scalar_select %p158, %s157, 15
      %s160 = smul.addr %s159, 4
      %s161 = scalar_lea.vmem %s3, %s160
      %s162 = smul.u32 8, %s14
      %p163 = scmp.lt.s32.totalorder %s162, 15
      %s164 = scalar_select %p163, %s162, 15
      %s165 = smul.addr %s164, 4
      %s166 = scalar_lea.vmem %s0, %s165
      %s167 = smul.u32 8, %s14
      %s168 = smul.u32 8, %s14
      %p169 = scmp.lt.s32.totalorder %s168, 15
      %s170 = scalar_select %p169, %s168, 15
      %s171 = smul.addr %s170, 4
      %s172 = scalar_lea.vmem %s3, %s171
      %s173 = smul.u32 8, %s14
      %v175 = vld [vmem:[%s166] sm:$0xf]
      %v176 = vld [vmem:[%s166 + $0x4] sm:$0xf]
      %v177 = vld [vmem:[%s166 + $0x8] sm:$0xf]
      %v178 = vld [vmem:[%s166 + $0xc] sm:$0xf]
      %v179 = vld [vmem:[%s166 + $0x10] sm:$0xf]
      %v180 = vld [vmem:[%s166 + $0x14] sm:$0xf]
      %v181 = vld [vmem:[%s166 + $0x18] sm:$0xf]
      %v182 = vld [vmem:[%s166 + $0x1c] sm:$0xf]
      %v183 = vld [vmem:[%s1] sm:$0xf]
      %v184 = vld [vmem:[%s1 + $0x4] sm:$0xf]
      %v185 = vld [vmem:[%s1 + $0x8] sm:$0xf]
      %v186 = vld [vmem:[%s1 + $0xc] sm:$0xf]
      %v187 = vld [vmem:[%s1 + $0x10] sm:$0xf]
      %v188 = vld [vmem:[%s1 + $0x14] sm:$0xf]
      %v189 = vld [vmem:[%s1 + $0x18] sm:$0xf]
      %v190 = vld [vmem:[%s1 + $0x1c] sm:$0xf]
      %v191 = vld [vmem:[%s1 + $0x20] sm:$0xf]
      %v192 = vld [vmem:[%s1 + $0x24] sm:$0xf]
      %v193 = vld [vmem:[%s1 + $0x28] sm:$0xf]
      %v194 = vld [vmem:[%s1 + $0x2c] sm:$0xf]
      %v195 = vld [vmem:[%s1 + $0x30] sm:$0xf]
      %v196 = vld [vmem:[%s1 + $0x34] sm:$0xf]
      %v197 = vld [vmem:[%s1 + $0x38] sm:$0xf]
      %v198 = vld [vmem:[%s1 + $0x3c] sm:$0xf]
      %v199 = vld [vmem:[%s2] sm:$0x1]
      %v201 = vlaneseq
      %v202 = vshrl.u32 %v201, 7
      %v203 = vsub.s32 0, %v202
      %v204 = vrot.slane %v199, %v203
      %v214 = vunpack.c.l.b16 %v175
      %v215 = vunpack.c.l.b16 %v176
      %v216 = vunpack.c.l.b16 %v177
      %v217 = vunpack.c.l.b16 %v178
      %v218 = vunpack.c.l.b16 %v179
      %v219 = vunpack.c.l.b16 %v180
      %v220 = vunpack.c.l.b16 %v181
      %v221 = vunpack.c.l.b16 %v182
      %v222 = vpack.c.b16 %v215, %v214
      %v223 = vpack.c.b16 %v217, %v216
      %v224 = vpack.c.b16 %v219, %v218
      %v225 = vpack.c.b16 %v221, %v220
      %v246 = vunpack.c.l.b16 %v183
      %v247 = vunpack.c.l.b16 %v184
      %v248 = vunpack.c.l.b16 %v185
      %v249 = vunpack.c.l.b16 %v186
      %v250 = vunpack.c.l.b16 %v187
      %v251 = vunpack.c.l.b16 %v188
      %v252 = vunpack.c.l.b16 %v189
      %v253 = vunpack.c.l.b16 %v190
      %v254 = vunpack.c.l.b16 %v191
      %v255 = vunpack.c.l.b16 %v192
      %v256 = vunpack.c.l.b16 %v193
      %v257 = vunpack.c.l.b16 %v194
      %v258 = vunpack.c.l.b16 %v195
      %v259 = vunpack.c.l.b16 %v196
      %v260 = vunpack.c.l.b16 %v197
      %v261 = vunpack.c.l.b16 %v198
      %v262 = vpack.c.b16 %v247, %v246
      %v263 = vpack.c.b16 %v249, %v248
      %v264 = vpack.c.b16 %v251, %v250
      %v265 = vpack.c.b16 %v253, %v252
      %v266 = vpack.c.b16 %v255, %v254
      %v267 = vpack.c.b16 %v257, %v256
      %v268 = vpack.c.b16 %v259, %v258
      %v269 = vpack.c.b16 %v261, %v260
      %278 = vmatprep.subr.bf16.mxu0 0
      %279 = vmatpush1.bf16.msra.mxu0 %v269
      %280 = vmatprep.subr.bf16.mxu0 0
      %281 = vmatpush1.bf16.msra.mxu0 %v268
      %282 = vmatprep.subr.bf16.mxu0 0
      %283 = vmatpush1.bf16.msra.mxu0 %v267
      %284 = vmatprep.subr.bf16.mxu0 0
      %285 = vmatpush1.bf16.msra.mxu0 %v266
      %286 = vmatprep.subr.bf16.mxu0 0
      %287 = vmatpush1.bf16.msra.mxu0 %v265
      %288 = vmatprep.subr.bf16.mxu0 0
      %289 = vmatpush1.bf16.msra.mxu0 %v264
      %290 = vmatprep.subr.bf16.mxu0 0
      %291 = vmatpush1.bf16.msra.mxu0 %v263
      %292 = vmatprep.subr.bf16.mxu0 0
      %293 = vmatpush1.bf16.msra.mxu0 %v262
      %294 = vmatprep.subr.bf16.mxu0 0
      %295 = vmatpush2.bf16.msra.mxu0 0
      %296 = vmatprep.subr.bf16.mxu0 0
      %297 = vmatpush2.bf16.msra.mxu0 0
      %298 = vmatprep.subr.bf16.mxu0 0
      %299 = vmatpush2.bf16.msra.mxu0 0
      %300 = vmatprep.subr.bf16.mxu0 0
      %301 = vmatpush2.bf16.msra.mxu0 0
      %302 = vmatprep.subr.bf16.mxu0 0
      %303 = vmatpush2.bf16.msra.mxu0 0
      %304 = vmatprep.subr.bf16.mxu0 0
      %305 = vmatpush2.bf16.msra.mxu0 0
      %306 = vmatprep.subr.bf16.mxu0 0
      %307 = vmatpush2.bf16.msra.mxu0 0
      %308 = vmatprep.subr.bf16.mxu0 0
      %309 = vmatpush2.bf16.msra.mxu0 0
      %310 = vmatprep.mubr.bf16.mxu0 0
      %311 = vmatmul.mubr.bf16.gmra.mxu0 %v222
      %v312 = vpop.f32.mrf.mxu0
      %v313 = vadd.f32 %v204, %v312
      %v314 = vpop.f32.mrf.mxu0
      %v315 = vpop.f32.mrf.mxu0
      %v316 = vadd.f32 %v204, %v315
      %v317 = vpop.f32.mrf.mxu0
      %318 = vmatprep.mubr.bf16.mxu0 0
      %319 = vmatmul.mubr.bf16.gmra.mxu0 %v223
      %v320 = vpop.f32.mrf.mxu0
      %v321 = vadd.f32 %v204, %v320
      %v322 = vpop.f32.mrf.mxu0
      %v323 = vpop.f32.mrf.mxu0
      %v324 = vadd.f32 %v204, %v323
      %v325 = vpop.f32.mrf.mxu0
      %326 = vmatprep.mubr.bf16.mxu0 0
      %327 = vmatmul.mubr.bf16.gmra.mxu0 %v224
      %v328 = vpop.f32.mrf.mxu0
      %v329 = vadd.f32 %v204, %v328
      %v330 = vpop.f32.mrf.mxu0
      %v331 = vpop.f32.mrf.mxu0
      %v332 = vadd.f32 %v204, %v331
      %v333 = vpop.f32.mrf.mxu0
      %334 = vmatprep.mubr.bf16.mxu0 0
      %335 = vmatmul.mubr.bf16.gmra.mxu0 %v225
      %v336 = vpop.f32.mrf.mxu0
      %v337 = vadd.f32 %v204, %v336
      %v338 = vpop.f32.mrf.mxu0
      %v339 = vpop.f32.mrf.mxu0
      %v340 = vadd.f32 %v204, %v339
      %v341 = vpop.f32.mrf.mxu0
      %342 = vdwg.mxu0
      %v343 = vpack.c.bf16 %v316, %v313
      %v344 = vpack.c.bf16 %v324, %v321
      %v345 = vpack.c.bf16 %v332, %v329
      %v346 = vpack.c.bf16 %v340, %v337
      %v351 = vunpack.c.l.b16 %v343
      %v352 = vunpack.c.h.b16 %v343
      %v353 = vunpack.c.l.b16 %v344
      %v354 = vunpack.c.h.b16 %v344
      %v355 = vunpack.c.l.b16 %v345
      %v356 = vunpack.c.h.b16 %v345
      %v357 = vunpack.c.l.b16 %v346
      %v358 = vunpack.c.h.b16 %v346
      %v359 = vpack.c.b16 %v351, %v351
      %v360 = vpack.c.b16 %v352, %v352
      %v361 = vpack.c.b16 %v353, %v353
      %v362 = vpack.c.b16 %v354, %v354
      %v363 = vpack.c.b16 %v355, %v355
      %v364 = vpack.c.b16 %v356, %v356
      %v365 = vpack.c.b16 %v357, %v357
      %v366 = vpack.c.b16 %v358, %v358
      %375 = vst [vmem:[%s172] sm:$0xf] %v359
      %376 = vst [vmem:[%s172 + $0x4] sm:$0xf] %v360
      %377 = vst [vmem:[%s172 + $0x8] sm:$0xf] %v361
      %378 = vst [vmem:[%s172 + $0xc] sm:$0xf] %v362
      %379 = vst [vmem:[%s172 + $0x10] sm:$0xf] %v363
      %380 = vst [vmem:[%s172 + $0x14] sm:$0xf] %v364
      %381 = vst [vmem:[%s172 + $0x18] sm:$0xf] %v365
      %382 = vst [vmem:[%s172 + $0x1c] sm:$0xf] %v366
      %s383 = smul.u32 8, %s14
      %p384 = scmp.lt.s32.totalorder %s383, 15
      %s385 = scalar_select %p384, %s383, 15
      %s386 = smul.addr %s385, 4
      %s387 = scalar_lea.vmem %s3, %s386
      // Predicated region
      $region33: #{rgcn_forward.4} parent=31 // pred_check
        %p388 = pneg %p100
      $region34: #{rgcn_forward.4} parent=31 // pred_check_branch
        %390 = sbr.rel (%p388) target = $region36
      $region35: #{rgcn_forward.4} parent=31 // pred_region
        %s391 = smul.u32 8, %s14
      $region36: #{rgcn_forward.4} parent=31 // pred_fallthru
        _
    $region32: #{rgcn_forward.4} parent=5 // pred_fallthru
      _
    %p392 = scmp.le.s32.totalorder 2, %s9
    // Predicated region
    $region37: #{rgcn_forward.4} parent=5 // pred_check
      %p393 = pneg %p392
    $region38: #{rgcn_forward.4} parent=5 // pred_check_branch
      %395 = sbr.rel (%p393) target = $region40
    $region39: #{rgcn_forward.4} parent=5 // pred_region
      %s396 = ssub.s32 %s9, 2
      // Predicated region
      $region41: #{rgcn_forward.4} parent=39 // pred_check
        %p397 = pneg %p106
      $region42: #{rgcn_forward.4} parent=39 // pred_check_branch
        %399 = sbr.rel (%p397) target = $region44
      $region43: #{rgcn_forward.4} parent=39 // pred_region
        %s400 = smul.u32 8, %s15
        %p401 = scmp.lt.s32.totalorder %s400, 15
        %s402 = scalar_select %p401, %s400, 15
        %s403 = smul.addr %s402, 4
        %s404 = scalar_lea.vmem %s3, %s403
      $region44: #{rgcn_forward.4} parent=39 // pred_fallthru
        _
    $region40: #{rgcn_forward.4} parent=5 // pred_fallthru
      _
  $region6: #{rgcn_forward.4} parent=0 // loop_footer
    %s13 = sadd.s32 1, %s9
  $region7: #{rgcn_forward.4} parent=0 // loop_footer_branch
    %8 = sbr.rel target = $region3
  $region8: #{rgcn_forward.4} parent=0 // loop_exit
    _

// kernel: rgcn_forward.5
$region0: #{rgcn_forward.5}
  #allocation0 [shape = 'u32[]', space=smem, size = 0x4, offset = 0x4, fixed_abs, tag = 'smem constant byte address 0x4 - core index']
  #allocation1 [shape = 'u32[144,128]{1,0:T(1,128)}', space=vmem, size = 0x12000, scoped, tag = 'internal scratch']
  #allocation2 [shape = 'f32[192,128]{1,0:T(8,128)}', space=vmem, size = 0x18000, scoped, tag = 'scratch operand']
  #allocation3 [shape = 'f32[64,128]{1,0:T(8,128)}', space=vmem, size = 0x8000, scoped, tag = 'scratch operand']
  #allocation4 [shape = 'f32[64,128]{1,0:T(8,128)}', space=vmem, size = 0x8000, scoped, tag = 'scratch operand']
  #allocation5 [shape = 's32[1]{0}', space=sflag, size = 0x4, scoped, tag = 'scoped memory for rgcn_forward.5']
  #allocation6 [shape = 'u8[1024]{0}', space=smem, size = 0x400, scoped, tag = 'prefetched SMEM operand 0']
  #allocation7 [shape = 'u8[512]{0}', space=smem, size = 0x200, scoped, tag = 'prefetched SMEM operand 1']
  %s0 = inlined_call_operand.vmem [shape: s32[2,1], index: 0, kind: input, shape index: {}]
  %s1 = inlined_call_operand.vmem [shape: s32[2], index: 1, kind: input, shape index: {}]
  %s2 = inlined_call_operand.vmem [shape: bf16[384,128], index: 2, kind: input, shape index: {}]
  %s3 = inlined_call_operand.vmem [shape: bf16[128,128], index: 3, kind: input, shape index: {}, may-alias: {3,4}]
  %s4 = inlined_call_operand.vmem [shape: bf16[128,128], index: 4, kind: input, shape index: {}, may-alias: {3,4}]
  %s5 = inlined_call_operand.hbm [shape: bf16[3,128,128], index: 5, kind: input, shape index: {}]
  %s6 = inlined_call_operand.vmem [shape: bf16[128,128], index: 6, kind: input, shape index: {}]
  %s7 = inlined_call_operand.vmem [shape: f32[4,128], index: 7, kind: input, shape index: {}]
  %s8 = inlined_call_operand.vmem [shape: bf16[128,128], index: 8, kind: output, shape index: {}]
  %s9 = sld [smem:[#allocation0]]
  $region81: #{rgcn_forward.5} parent=0
    _
  %s11 = ssub.s32 1, %s9
  %s12 = scalar_select 0, %s11, %s9
  %s13 = sshll.u32 %s0, 4
  %s14 = int_to_ptr.vmem [resolvable:$true] %s13
  %16 = dma.vmem_to_smem %s14, 32, [#allocation6], [#allocation5]
  %s17 = sshll.u32 %s1, 4
  %s18 = int_to_ptr.vmem [resolvable:$true] %s17
  %20 = dma.vmem_to_smem %s18, 16, [#allocation7], [#allocation5]
  %21 = dma.done [#allocation5], 48
  %22 = sfence
  $region1: #{rgcn_forward.5} parent=0
    #allocation8 [shape = 'u8[98304]{0}', space=vmem, size = 0x18000, scoped, tag = 'input window, operand 5, single buffered']
    #allocation9 [shape = 's32[2]{0}', space=sflag, size = 0x8, scoped, tag = 'scoped memory for rgcn_forward.5']
    %23 = vsyncpa [#allocation9], 0
    loop: start=0, step=1, limit=4
    $region2: #{rgcn_forward.5} parent=1 // loop_pre_header
      _
    $region3: #{rgcn_forward.5} parent=1 // loop_header
      %s25 = sphi 0, %s29
      %p26 = scmp.ge.s32.totalorder %s25, 4
      %s32 = sphi 0, %s51
      %s33 = sphi 0, %s47
      %s34 = sphi 0, %s43
      %s35 = sphi 0, %s32
      %s36 = sphi 0, %s33
      %s37 = sphi 0, %s34
      %s38 = sphi 0, %s35
      %s39 = sphi 0, %s36
      %s40 = sphi 0, %s37
      %s74 = sphi 0, %s76
      %s77 = sphi 0, %s74
      %s78 = sphi 0, %s77
      %s94 = sphi 0, %s78
      %s116 = sphi 0, %s118
      %s119 = sphi 0, %s116
      %s120 = sphi 0, %s119
      %s136 = sphi 0, %s120
      %s142 = sphi 0, %s144
      %s145 = sphi 0, %s142
      %s146 = sphi 0, %s145
      %s162 = sphi 0, %s146
      %s168 = sphi 0, %s170
      %s171 = sphi 0, %s168
      %s172 = sphi 0, %s171
      %s188 = sphi 0, %s172
      %s192 = sphi 0, %s192
      %s194 = sphi 0, %s192
      %s195 = sphi 0, %s194
      %s209 = sphi 0, %s195
      %s213 = sphi 0, %s213
      %s215 = sphi 0, %s213
      %s216 = sphi 0, %s215
      %s230 = sphi 0, %s216
      %s236 = sphi 0, %s238
      %s239 = sphi 0, %s236
      %s240 = sphi 0, %s239
      %s256 = sphi 0, %s240
    $region4: #{rgcn_forward.5} parent=1 // loop_header_branch
      %28 = sbr.rel (%p26) target = $region8
    $region5: #{rgcn_forward.5} parent=1 // loop_body
      %s30 = ssub.s32 %s25, 1
      %s31 = ssub.s32 %s25, 2
      %s41 = sadd.s32 1, %s34
      %p42 = scmp.ge.s32.totalorder %s41, 1
      %s43 = scalar_select %p42, 0, %s41
      %s44 = sadd.s32 1, %s33
      %s45 = scalar_select %p42, %s44, %s33
      %p46 = scmp.ge.s32.totalorder %s45, 1
      %s47 = scalar_select %p46, 0, %s45
      %s48 = sadd.s32 1, %s32
      %s49 = scalar_select %p46, %s48, %s32
      %p50 = scmp.ge.s32.totalorder %s49, 2
      %s51 = scalar_select %p50, 0, %s49
      %s52 = sadd.s32 %s32, %s33
      %s53 = sshra.s32 %s34, 7
      %s54 = sand.u32 %s34, 127
      %s55 = sadd.s32 %s53, %s32
      %s56 = smul.u32 %s55, 128
      %s57 = sshra.s32 %s34, 7
      %s58 = sand.u32 %s34, 127
      %s59 = sadd.s32 %s56, %s58
      %s60 = sld [smem:[#allocation6 + %s59]]
      %s61 = sadd.s32 %s51, %s47
      %s62 = sshra.s32 %s43, 7
      %s63 = sand.u32 %s43, 127
      %s64 = sadd.s32 %s62, %s51
      %s65 = smul.u32 %s64, 128
      %s66 = sshra.s32 %s43, 7
      %s67 = sand.u32 %s43, 127
      %s68 = sadd.s32 %s65, %s67
      %s69 = sld [smem:[#allocation6 + %s68]]
      %s70 = ssub.s32 %s52, %s61
      %s71 = ssub.s32 %s60, %s69
      %s72 = sor.u32 %s70, %s71
      %p73 = scmp.eq.s32.totalorder %s72, 0
      %s75 = sadd.s32 %s74, 1
      %s76 = scalar_select %p73, %s74, %s75
      %p79 = pneg %p73
      %p80 = scmp.eq.s32.totalorder %s25, 1
      %p81 = por %p79, %p80
      %p82 = scmp.ne.s32.totalorder %s74, %s77
      %p83 = scmp.eq.s32.totalorder %s25, 0
      %p84 = por %p82, %p83
      %p85 = scmp.ne.s32.totalorder %s74, %s77
      %p86 = scmp.eq.s32.totalorder %s30, 1
      %p87 = por %p85, %p86
      %p88 = scmp.ne.s32.totalorder %s77, %s78
      %p89 = scmp.eq.s32.totalorder %s30, 0
      %p90 = por %p88, %p89
      %p91 = scmp.ne.s32.totalorder %s77, %s78
      %p92 = scmp.eq.s32.totalorder %s31, 1
      %p93 = por %p91, %p92
      %p95 = scmp.ne.s32.totalorder %s78, %s94
      %p96 = scmp.eq.s32.totalorder %s31, 0
      %p97 = por %p95, %p96
      %s98 = sshra.s32 %s34, 7
      %s99 = sand.u32 %s34, 127
      %s100 = sadd.s32 %s98, %s32
      %s101 = smul.u32 %s100, 128
      %s102 = sshra.s32 %s34, 7
      %s103 = sand.u32 %s34, 127
      %s104 = sadd.s32 %s101, %s103
      %s105 = sld [smem:[#allocation6 + %s104]]
      %s106 = sshra.s32 %s43, 7
      %s107 = sand.u32 %s43, 127
      %s108 = sadd.s32 %s106, %s51
      %s109 = smul.u32 %s108, 128
      %s110 = sshra.s32 %s43, 7
      %s111 = sand.u32 %s43, 127
      %s112 = sadd.s32 %s109, %s111
      %s113 = sld [smem:[#allocation6 + %s112]]
      %s114 = ssub.s32 %s105, %s113
      %p115 = scmp.eq.s32.totalorder %s114, 0
      %s117 = sadd.s32 %s116, 1
      %s118 = scalar_select %p115, %s116, %s117
      %p121 = pneg %p115
      %p122 = scmp.eq.s32.totalorder %s25, 1
      %p123 = por %p121, %p122
      %p124 = scmp.ne.s32.totalorder %s116, %s119
      %p125 = scmp.eq.s32.totalorder %s25, 0
      %p126 = por %p124, %p125
      %p127 = scmp.ne.s32.totalorder %s116, %s119
      %p128 = scmp.eq.s32.totalorder %s30, 1
      %p129 = por %p127, %p128
      %p130 = scmp.ne.s32.totalorder %s119, %s120
      %p131 = scmp.eq.s32.totalorder %s30, 0
      %p132 = por %p130, %p131
      %p133 = scmp.ne.s32.totalorder %s119, %s120
      %p134 = scmp.eq.s32.totalorder %s31, 1
      %p135 = por %p133, %p134
      %p137 = scmp.ne.s32.totalorder %s120, %s136
      %p138 = scmp.eq.s32.totalorder %s31, 0
      %p139 = por %p137, %p138
      %s140 = ssub.s32 %s32, %s51
      %p141 = scmp.eq.s32.totalorder %s140, 0
      %s143 = sadd.s32 %s142, 1
      %s144 = scalar_select %p141, %s142, %s143
      %p147 = pneg %p141
      %p148 = scmp.eq.s32.totalorder %s25, 1
      %p149 = por %p147, %p148
      %p150 = scmp.ne.s32.totalorder %s142, %s145
      %p151 = scmp.eq.s32.totalorder %s25, 0
      %p152 = por %p150, %p151
      %p153 = scmp.ne.s32.totalorder %s142, %s145
      %p154 = scmp.eq.s32.totalorder %s30, 1
      %p155 = por %p153, %p154
      %p156 = scmp.ne.s32.totalorder %s145, %s146
      %p157 = scmp.eq.s32.totalorder %s30, 0
      %p158 = por %p156, %p157
      %p159 = scmp.ne.s32.totalorder %s145, %s146
      %p160 = scmp.eq.s32.totalorder %s31, 1
      %p161 = por %p159, %p160
      %p163 = scmp.ne.s32.totalorder %s146, %s162
      %p164 = scmp.eq.s32.totalorder %s31, 0
      %p165 = por %p163, %p164
      %s166 = ssub.s32 %s33, %s47
      %p167 = scmp.eq.s32.totalorder %s166, 0
      %s169 = sadd.s32 %s168, 1
      %s170 = scalar_select %p167, %s168, %s169
      %p173 = pneg %p167
      %p174 = scmp.eq.s32.totalorder %s25, 1
      %p175 = por %p173, %p174
      %p176 = scmp.ne.s32.totalorder %s168, %s171
      %p177 = scmp.eq.s32.totalorder %s25, 0
      %p178 = por %p176, %p177
      %p179 = scmp.ne.s32.totalorder %s168, %s171
      %p180 = scmp.eq.s32.totalorder %s30, 1
      %p181 = por %p179, %p180
      %p182 = scmp.ne.s32.totalorder %s171, %s172
      %p183 = scmp.eq.s32.totalorder %s30, 0
      %p184 = por %p182, %p183
      %p185 = scmp.ne.s32.totalorder %s171, %s172
      %p186 = scmp.eq.s32.totalorder %s31, 1
      %p187 = por %p185, %p186
      %p189 = scmp.ne.s32.totalorder %s172, %s188
      %p190 = scmp.eq.s32.totalorder %s31, 0
      %p191 = por %p189, %p190
      %s193 = sadd.s32 %s192, 1
      %p196 = scmp.eq.s32.totalorder %s25, 1
      %p197 = scmp.ne.s32.totalorder %s192, %s194
      %p198 = scmp.eq.s32.totalorder %s25, 0
      %p199 = por %p197, %p198
      %p200 = scmp.ne.s32.totalorder %s192, %s194
      %p201 = scmp.eq.s32.totalorder %s30, 1
      %p202 = por %p200, %p201
      %p203 = scmp.ne.s32.totalorder %s194, %s195
      %p204 = scmp.eq.s32.totalorder %s30, 0
      %p205 = por %p203, %p204
      %p206 = scmp.ne.s32.totalorder %s194, %s195
      %p207 = scmp.eq.s32.totalorder %s31, 1
      %p208 = por %p206, %p207
      %p210 = scmp.ne.s32.totalorder %s195, %s209
      %p211 = scmp.eq.s32.totalorder %s31, 0
      %p212 = por %p210, %p211
      %s214 = sadd.s32 %s213, 1
      %p217 = scmp.eq.s32.totalorder %s25, 1
      %p218 = scmp.ne.s32.totalorder %s213, %s215
      %p219 = scmp.eq.s32.totalorder %s25, 0
      %p220 = por %p218, %p219
      %p221 = scmp.ne.s32.totalorder %s213, %s215
      %p222 = scmp.eq.s32.totalorder %s30, 1
      %p223 = por %p221, %p222
      %p224 = scmp.ne.s32.totalorder %s215, %s216
      %p225 = scmp.eq.s32.totalorder %s30, 0
      %p226 = por %p224, %p225
      %p227 = scmp.ne.s32.totalorder %s215, %s216
      %p228 = scmp.eq.s32.totalorder %s31, 1
      %p229 = por %p227, %p228
      %p231 = scmp.ne.s32.totalorder %s216, %s230
      %p232 = scmp.eq.s32.totalorder %s31, 0
      %p233 = por %p231, %p232
      %s234 = ssub.s32 %s32, %s51
      %p235 = scmp.eq.s32.totalorder %s234, 0
      %s237 = sadd.s32 %s236, 1
      %s238 = scalar_select %p235, %s236, %s237
      %p241 = pneg %p235
      %p242 = scmp.eq.s32.totalorder %s25, 1
      %p243 = por %p241, %p242
      %p244 = scmp.ne.s32.totalorder %s236, %s239
      %p245 = scmp.eq.s32.totalorder %s25, 0
      %p246 = por %p244, %p245
      %p247 = scmp.ne.s32.totalorder %s236, %s239
      %p248 = scmp.eq.s32.totalorder %s30, 1
      %p249 = por %p247, %p248
      %p250 = scmp.ne.s32.totalorder %s239, %s240
      %p251 = scmp.eq.s32.totalorder %s30, 0
      %p252 = por %p250, %p251
      %p253 = scmp.ne.s32.totalorder %s239, %s240
      %p254 = scmp.eq.s32.totalorder %s31, 1
      %p255 = por %p253, %p254
      %p257 = scmp.ne.s32.totalorder %s240, %s256
      %p258 = scmp.eq.s32.totalorder %s31, 0
      %p259 = por %p257, %p258
      %p260 = scmp.le.s32.totalorder 1, %s25
      %p261 = scmp.lt.s32.totalorder %s25, 3
      %p262 = pnand %p260, %p261
      %p263 = pneg %p262
      // Predicated region
      $region9: #{rgcn_forward.5} parent=5 // pred_check
        _
      $region10: #{rgcn_forward.5} parent=5 // pred_check_branch
        %265 = sbr.rel (%p262) target = $region12
      $region11: #{rgcn_forward.5} parent=5 // pred_region
        %s266 = ssub.s32 %s25, 1
        // Predicated region
        $region13: #{rgcn_forward.5} parent=11 // pred_check
          %p267 = pneg %p184
        $region14: #{rgcn_forward.5} parent=11 // pred_check_branch
          %269 = sbr.rel (%p267) target = $region16
        $region15: #{rgcn_forward.5} parent=11 // pred_region
          %s270 = smul.u32 3, %s36
          %s272 = ssub.s32 3072, 3072
          %273 = vsyncadd [#allocation9], %s272
          %s274 = smul.addr %s270, 16
          %s275 = smul.addr %s274, 64
          %s276 = scalar_lea.hbm %s5, %s275
          %s277 = sshll.u32 [#allocation8], 4
          %s278 = int_to_ptr.vmem [resolvable:$true] %s277
          %283 = dma.hbm_to_vmem [thread:$0]  %s276, 3072, %s278, [#allocation9], 64, 64, 4
        $region16: #{rgcn_forward.5} parent=11 // pred_fallthru
          _
        // Predicated region
        $region17: #{rgcn_forward.5} parent=11 // pred_check
          %p284 = pneg %p205
        $region18: #{rgcn_forward.5} parent=11 // pred_check_branch
          %286 = sbr.rel (%p284) target = $region20
        $region19: #{rgcn_forward.5} parent=11 // pred_region
          _
        $region20: #{rgcn_forward.5} parent=11 // pred_fallthru
          _
        // Predicated region
        $region21: #{rgcn_forward.5} parent=11 // pred_check
          %p287 = pneg %p226
        $region22: #{rgcn_forward.5} parent=11 // pred_check_branch
          %289 = sbr.rel (%p287) target = $region24
        $region23: #{rgcn_forward.5} parent=11 // pred_region
          _
        $region24: #{rgcn_forward.5} parent=11 // pred_fallthru
          _
      $region12: #{rgcn_forward.5} parent=5 // pred_fallthru
        _
      %p290 = scmp.lt.s32.totalorder %s25, 2
      // Predicated region
      $region25: #{rgcn_forward.5} parent=5 // pred_check
        %p291 = pneg %p290
      $region26: #{rgcn_forward.5} parent=5 // pred_check_branch
        %293 = sbr.rel (%p291) target = $region28
      $region27: #{rgcn_forward.5} parent=5 // pred_region
        // Predicated region
        $region29: #{rgcn_forward.5} parent=27 // pred_check
          %p294 = pneg %p84
        $region30: #{rgcn_forward.5} parent=27 // pred_check_branch
          %296 = sbr.rel (%p294) target = $region32
        $region31: #{rgcn_forward.5} parent=27 // pred_region
          %s297 = sadd.s32 %s32, %s33
          %s298 = sshra.s32 %s34, 7
          %s299 = sand.u32 %s34, 127
          %s300 = sadd.s32 %s298, %s32
          %s301 = smul.u32 %s300, 128
          %s302 = sshra.s32 %s34, 7
          %s303 = sand.u32 %s34, 127
          %s304 = sadd.s32 %s301, %s303
          %s305 = sld [smem:[#allocation6 + %s304]]
          %s306 = smul.u32 24, %s297
          %p307 = scmp.lt.s32.totalorder %s306, 47
          %s308 = scalar_select %p307, %s306, 47
          %p309 = scmp.lt.s32.totalorder %s305, 0
          %s310 = scalar_select %p309, %s305, 0
          %s311 = sadd.s32 %s310, %s308
          %s312 = smul.addr %s311, 4
          %s313 = scalar_lea.vmem %s2, %s312
          %s314 = sadd.s32 %s32, %s33
          %s315 = sshra.s32 %s34, 7
          %s316 = sand.u32 %s34, 127
          %s317 = sadd.s32 %s315, %s32
          %s318 = smul.u32 %s317, 128
          %s319 = sshra.s32 %s34, 7
          %s320 = sand.u32 %s34, 127
          %s321 = sadd.s32 %s318, %s320
          %s322 = sld [smem:[#allocation6 + %s321]]
          %s323 = smul.u32 24, %s314
        $region32: #{rgcn_forward.5} parent=27 // pred_fallthru
          _
        // Predicated region
        $region33: #{rgcn_forward.5} parent=27 // pred_check
          %p324 = pneg %p126
        $region34: #{rgcn_forward.5} parent=27 // pred_check_branch
          %326 = sbr.rel (%p324) target = $region36
        $region35: #{rgcn_forward.5} parent=27 // pred_region
          %s327 = sshra.s32 %s34, 7
          %s328 = sand.u32 %s34, 127
          %s329 = sadd.s32 %s327, %s32
          %s330 = smul.u32 %s329, 128
          %s331 = sshra.s32 %s34, 7
          %s332 = sand.u32 %s34, 127
          %s333 = sadd.s32 %s330, %s332
          %s334 = sld [smem:[#allocation6 + %s333]]
          %s335 = smul.u32 16, %s334
          %p336 = scmp.lt.s32.totalorder %s335, 15
          %s337 = scalar_select %p336, %s335, 15
          %s338 = smul.addr %s337, 4
          %s339 = scalar_lea.vmem %s3, %s338
          %s340 = sshra.s32 %s34, 7
          %s341 = sand.u32 %s34, 127
          %s342 = sadd.s32 %s340, %s32
          %s343 = smul.u32 %s342, 128
          %s344 = sshra.s32 %s34, 7
          %s345 = sand.u32 %s34, 127
          %s346 = sadd.s32 %s343, %s345
          %s347 = sld [smem:[#allocation6 + %s346]]
          %s348 = smul.u32 16, %s347
        $region36: #{rgcn_forward.5} parent=27 // pred_fallthru
          _
        // Predicated region
        $region37: #{rgcn_forward.5} parent=27 // pred_check
          %p349 = pneg %p152
        $region38: #{rgcn_forward.5} parent=27 // pred_check_branch
          %351 = sbr.rel (%p349) target = $region40
        $region39: #{rgcn_forward.5} parent=27 // pred_region
          %s352 = smul.u32 8, %s32
          %p353 = scmp.lt.s32.totalorder %s352, 15
          %s354 = scalar_select %p353, %s352, 15
          %s355 = smul.addr %s354, 4
          %s356 = scalar_lea.vmem %s4, %s355
          %s357 = smul.u32 8, %s32
        $region40: #{rgcn_forward.5} parent=27 // pred_fallthru
          _
      $region28: #{rgcn_forward.5} parent=5 // pred_fallthru
        _
      %p358 = scmp.le.s32.totalorder 1, %s25
      %p359 = scmp.lt.s32.totalorder %s25, 3
      %p360 = pnand %p358, %p359
      %p361 = pneg %p360
      // Predicated region
      $region41: #{rgcn_forward.5} parent=5 // pred_check
        _
      $region42: #{rgcn_forward.5} parent=5 // pred_check_branch
        %363 = sbr.rel (%p360) target = $region44
      $region43: #{rgcn_forward.5} parent=5 // pred_region
        %s364 = ssub.s32 %s25, 1
        // Predicated region
        $region45: #{rgcn_forward.5} parent=43 // pred_check
          %p365 = pneg %p184
        $region46: #{rgcn_forward.5} parent=43 // pred_check_branch
          %367 = sbr.rel (%p365) target = $region48
        $region47: #{rgcn_forward.5} parent=43 // pred_region
          %368 = dma.done [#allocation9], 3072
        $region48: #{rgcn_forward.5} parent=43 // pred_fallthru
          _
        %s369 = sadd.s32 %s35, %s36
        %s370 = sshra.s32 %s37, 7
        %s371 = sand.u32 %s37, 127
        %s372 = sadd.s32 %s370, %s35
        %s373 = smul.u32 %s372, 128
        %s374 = sshra.s32 %s37, 7
        %s375 = sand.u32 %s37, 127
        %s376 = sadd.s32 %s373, %s375
        %s377 = sld [smem:[#allocation6 + %s376]]
        %s378 = smul.u32 24, %s369
        %p379 = scmp.lt.s32.totalorder %s378, 47
        %s380 = scalar_select %p379, %s378, 47
        %p381 = scmp.lt.s32.totalorder %s377, 0
        %s382 = scalar_select %p381, %s377, 0
        %s383 = sadd.s32 %s382, %s380
        %s384 = smul.addr %s383, 4
        %s385 = scalar_lea.vmem %s2, %s384
        %p386 = pneg %p90
        %p387 = pneg %p87
        %s388 = sshra.s32 %s37, 7
        %s389 = sand.u32 %s37, 127
        %s390 = sadd.s32 %s388, %s35
        %s391 = smul.u32 %s390, 128
        %s392 = sshra.s32 %s37, 7
        %s393 = sand.u32 %s37, 127
        %s394 = sadd.s32 %s391, %s393
        %s395 = sld [smem:[#allocation6 + %s394]]
        %s396 = smul.u32 16, %s395
        %p397 = scmp.lt.s32.totalorder %s396, 15
        %s398 = scalar_select %p397, %s396, 15
        %s399 = smul.addr %s398, 4
        %s400 = scalar_lea.vmem %s3, %s399
        %p401 = pneg %p132
        %p402 = pneg %p129
        %s403 = smul.u32 8, %s35
        %p404 = scmp.lt.s32.totalorder %s403, 15
        %s405 = scalar_select %p404, %s403, 15
        %s406 = smul.addr %s405, 4
        %s407 = scalar_lea.vmem %s4, %s406
        %p408 = pneg %p158
        %p409 = pneg %p155
        %p410 = pneg %p184
        %p411 = pneg %p181
        %p412 = pneg %p205
        %p413 = pneg %p202
        %p414 = pneg %p226
        %p415 = pneg %p223
        %p416 = pneg %p252
        %p417 = pneg %p249
        %s418 = smul.u32 8, %s35
        %p419 = scmp.lt.s32.totalorder %s418, 15
        %s420 = scalar_select %p419, %s418, 15
        %s421 = smul.addr %s420, 4
        %s422 = scalar_lea.vmem %s8, %s421
        %s423 = sadd.s32 %s35, %s36
        %s424 = sshra.s32 %s37, 7
        %s425 = sand.u32 %s37, 127
        %s426 = sadd.s32 %s424, %s35
        %s427 = smul.u32 %s426, 128
        %s428 = sshra.s32 %s37, 7
        %s429 = sand.u32 %s37, 127
        %s430 = sadd.s32 %s427, %s429
        %s431 = sld [smem:[#allocation6 + %s430]]
        %s432 = smul.u32 24, %s423
        %p433 = scmp.lt.s32.totalorder %s432, 47
        %s434 = scalar_select %p433, %s432, 47
        %p435 = scmp.lt.s32.totalorder %s431, 0
        %s436 = scalar_select %p435, %s431, 0
        %s437 = sadd.s32 %s436, %s434
        %s438 = smul.addr %s437, 4
        %s439 = scalar_lea.vmem %s2, %s438
        %s440 = sadd.s32 %s35, %s36
        %s441 = sshra.s32 %s37, 7
        %s442 = sand.u32 %s37, 127
        %s443 = sadd.s32 %s441, %s35
        %s444 = smul.u32 %s443, 128
        %s445 = sshra.s32 %s37, 7
        %s446 = sand.u32 %s37, 127
        %s447 = sadd.s32 %s444, %s446
        %s448 = sld [smem:[#allocation6 + %s447]]
        %s449 = smul.u32 24, %s440
        %s450 = sshra.s32 %s37, 7
        %s451 = sand.u32 %s37, 127
        %s452 = sadd.s32 %s450, %s35
        %s453 = smul.u32 %s452, 128
        %s454 = sshra.s32 %s37, 7
        %s455 = sand.u32 %s37, 127
        %s456 = sadd.s32 %s453, %s455
        %s457 = sld [smem:[#allocation6 + %s456]]
        %s458 = smul.u32 16, %s457
        %p459 = scmp.lt.s32.totalorder %s458, 15
        %s460 = scalar_select %p459, %s458, 15
        %s461 = smul.addr %s460, 4
        %s462 = scalar_lea.vmem %s3, %s461
        %s463 = sshra.s32 %s37, 7
        %s464 = sand.u32 %s37, 127
        %s465 = sadd.s32 %s463, %s35
        %s466 = smul.u32 %s465, 128
        %s467 = sshra.s32 %s37, 7
        %s468 = sand.u32 %s37, 127
        %s469 = sadd.s32 %s466, %s468
        %s470 = sld [smem:[#allocation6 + %s469]]
        %s471 = smul.u32 16, %s470
        %s472 = smul.u32 8, %s35
        %p473 = scmp.lt.s32.totalorder %s472, 15
        %s474 = scalar_select %p473, %s472, 15
        %s475 = smul.addr %s474, 4
        %s476 = scalar_lea.vmem %s4, %s475
        %s477 = smul.u32 8, %s35
        %s478 = smul.u32 3, %s36
        %s479 = smul.u32 8, %s35
        %p480 = scmp.lt.s32.totalorder %s479, 15
        %s481 = scalar_select %p480, %s479, 15
        %s482 = smul.addr %s481, 4
        %s483 = scalar_lea.vmem %s8, %s482
        %s484 = smul.u32 8, %s35
        %p486 = scmp.eq.s32.totalorder %s36, 0
        %p487 = scmp.eq.s32.totalorder %s37, 0
        %p488 = pnand %p486, %p487
        %p489 = pneg %p488
        // Predicated region
        $region49: #{rgcn_forward.5} parent=43 // pred_check
          _
        $region50: #{rgcn_forward.5} parent=43 // pred_check_branch
          %491 = sbr.rel (%p488) target = $region52
        $region51: #{rgcn_forward.5} parent=43 // pred_region
          %492 = vst [vmem:[#allocation4] sm:$0xff] 0.0
          %493 = vst [vmem:[#allocation4 + $0x8] sm:$0xff] 0.0
          %494 = vst [vmem:[#allocation4 + $0x10] sm:$0xff] 0.0
          %495 = vst [vmem:[#allocation4 + $0x18] sm:$0xff] 0.0
          %496 = vst [vmem:[#allocation4 + $0x20] sm:$0xff] 0.0
          %497 = vst [vmem:[#allocation4 + $0x28] sm:$0xff] 0.0
          %498 = vst [vmem:[#allocation4 + $0x30] sm:$0xff] 0.0
          %499 = vst [vmem:[#allocation4 + $0x38] sm:$0xff] 0.0
          %v500 = vld [vmem:[%s476] sm:$0xf]
          %v501 = vld [vmem:[%s476 + $0x4] sm:$0xf]
          %v502 = vld [vmem:[%s476 + $0x8] sm:$0xf]
          %v503 = vld [vmem:[%s476 + $0xc] sm:$0xf]
          %v504 = vld [vmem:[%s476 + $0x10] sm:$0xf]
          %v505 = vld [vmem:[%s476 + $0x14] sm:$0xf]
          %v506 = vld [vmem:[%s476 + $0x18] sm:$0xf]
          %v507 = vld [vmem:[%s476 + $0x1c] sm:$0xf]
          %v508 = vld [vmem:[%s6] sm:$0xf]
          %v509 = vld [vmem:[%s6 + $0x4] sm:$0xf]
          %v510 = vld [vmem:[%s6 + $0x8] sm:$0xf]
          %v511 = vld [vmem:[%s6 + $0xc] sm:$0xf]
          %v512 = vld [vmem:[%s6 + $0x10] sm:$0xf]
          %v513 = vld [vmem:[%s6 + $0x14] sm:$0xf]
          %v514 = vld [vmem:[%s6 + $0x18] sm:$0xf]
          %v515 = vld [vmem:[%s6 + $0x1c] sm:$0xf]
          %v516 = vld [vmem:[%s6 + $0x20] sm:$0xf]
          %v517 = vld [vmem:[%s6 + $0x24] sm:$0xf]
          %v518 = vld [vmem:[%s6 + $0x28] sm:$0xf]
          %v519 = vld [vmem:[%s6 + $0x2c] sm:$0xf]
          %v520 = vld [vmem:[%s6 + $0x30] sm:$0xf]
          %v521 = vld [vmem:[%s6 + $0x34] sm:$0xf]
          %v522 = vld [vmem:[%s6 + $0x38] sm:$0xf]
          %v523 = vld [vmem:[%s6 + $0x3c] sm:$0xf]
          %v532 = vunpack.c.l.b16 %v500
          %v533 = vunpack.c.l.b16 %v501
          %v534 = vunpack.c.l.b16 %v502
          %v535 = vunpack.c.l.b16 %v503
          %v536 = vunpack.c.l.b16 %v504
          %v537 = vunpack.c.l.b16 %v505
          %v538 = vunpack.c.l.b16 %v506
          %v539 = vunpack.c.l.b16 %v507
          %v540 = vpack.c.b16 %v533, %v532
          %v541 = vpack.c.b16 %v535, %v534
          %v542 = vpack.c.b16 %v537, %v536
          %v543 = vpack.c.b16 %v539, %v538
          %v564 = vunpack.c.l.b16 %v508
          %v565 = vunpack.c.l.b16 %v509
          %v566 = vunpack.c.l.b16 %v510
          %v567 = vunpack.c.l.b16 %v511
          %v568 = vunpack.c.l.b16 %v512
          %v569 = vunpack.c.l.b16 %v513
          %v570 = vunpack.c.l.b16 %v514
          %v571 = vunpack.c.l.b16 %v515
          %v572 = vunpack.c.l.b16 %v516
          %v573 = vunpack.c.l.b16 %v517
          %v574 = vunpack.c.l.b16 %v518
          %v575 = vunpack.c.l.b16 %v519
          %v576 = vunpack.c.l.b16 %v520
          %v577 = vunpack.c.l.b16 %v521
          %v578 = vunpack.c.l.b16 %v522
          %v579 = vunpack.c.l.b16 %v523
          %v580 = vpack.c.b16 %v565, %v564
          %v581 = vpack.c.b16 %v567, %v566
          %v582 = vpack.c.b16 %v569, %v568
          %v583 = vpack.c.b16 %v571, %v570
          %v584 = vpack.c.b16 %v573, %v572
          %v585 = vpack.c.b16 %v575, %v574
          %v586 = vpack.c.b16 %v577, %v576
          %v587 = vpack.c.b16 %v579, %v578
          %596 = vmatprep.subr.bf16.mxu0 0
          %597 = vmatpush1.bf16.msra.mxu0 %v587
          %598 = vmatprep.subr.bf16.mxu0 0
          %599 = vmatpush1.bf16.msra.mxu0 %v586
          %600 = vmatprep.subr.bf16.mxu0 0
          %601 = vmatpush1.bf16.msra.mxu0 %v585
          %602 = vmatprep.subr.bf16.mxu0 0
          %603 = vmatpush1.bf16.msra.mxu0 %v584
          %604 = vmatprep.subr.bf16.mxu0 0
          %605 = vmatpush1.bf16.msra.mxu0 %v583
          %606 = vmatprep.subr.bf16.mxu0 0
          %607 = vmatpush1.bf16.msra.mxu0 %v582
          %608 = vmatprep.subr.bf16.mxu0 0
          %609 = vmatpush1.bf16.msra.mxu0 %v581
          %610 = vmatprep.subr.bf16.mxu0 0
          %611 = vmatpush1.bf16.msra.mxu0 %v580
          %612 = vmatprep.subr.bf16.mxu0 0
          %613 = vmatpush2.bf16.msra.mxu0 0
          %614 = vmatprep.subr.bf16.mxu0 0
          %615 = vmatpush2.bf16.msra.mxu0 0
          %616 = vmatprep.subr.bf16.mxu0 0
          %617 = vmatpush2.bf16.msra.mxu0 0
          %618 = vmatprep.subr.bf16.mxu0 0
          %619 = vmatpush2.bf16.msra.mxu0 0
          %620 = vmatprep.subr.bf16.mxu0 0
          %621 = vmatpush2.bf16.msra.mxu0 0
          %622 = vmatprep.subr.bf16.mxu0 0
          %623 = vmatpush2.bf16.msra.mxu0 0
          %624 = vmatprep.subr.bf16.mxu0 0
          %625 = vmatpush2.bf16.msra.mxu0 0
          %626 = vmatprep.subr.bf16.mxu0 0
          %627 = vmatpush2.bf16.msra.mxu0 0
          %628 = vmatprep.mubr.bf16.mxu0 0
          %629 = vmatmul.mubr.bf16.gmra.mxu0 %v540
          %v630 = vpop.f32.mrf.mxu0
          %v631 = vadd.f32 0.0, %v630
          %v632 = vpop.f32.mrf.mxu0
          %v633 = vpop.f32.mrf.mxu0
          %v634 = vadd.f32 0.0, %v633
          %v635 = vpop.f32.mrf.mxu0
          %636 = vmatprep.mubr.bf16.mxu0 0
          %637 = vmatmul.mubr.bf16.gmra.mxu0 %v541
          %v638 = vpop.f32.mrf.mxu0
          %v639 = vadd.f32 0.0, %v638
          %v640 = vpop.f32.mrf.mxu0
          %v641 = vpop.f32.mrf.mxu0
          %v642 = vadd.f32 0.0, %v641
          %v643 = vpop.f32.mrf.mxu0
          %644 = vmatprep.mubr.bf16.mxu0 0
          %645 = vmatmul.mubr.bf16.gmra.mxu0 %v542
          %v646 = vpop.f32.mrf.mxu0
          %v647 = vadd.f32 0.0, %v646
          %v648 = vpop.f32.mrf.mxu0
          %v649 = vpop.f32.mrf.mxu0
          %v650 = vadd.f32 0.0, %v649
          %v651 = vpop.f32.mrf.mxu0
          %652 = vmatprep.mubr.bf16.mxu0 0
          %653 = vmatmul.mubr.bf16.gmra.mxu0 %v543
          %v654 = vpop.f32.mrf.mxu0
          %v655 = vadd.f32 0.0, %v654
          %v656 = vpop.f32.mrf.mxu0
          %v657 = vpop.f32.mrf.mxu0
          %v658 = vadd.f32 0.0, %v657
          %v659 = vpop.f32.mrf.mxu0
          %660 = vdwg.mxu0
          %661 = vst [vmem:[#allocation3] sm:$0xff] %v631
          %662 = vst [vmem:[#allocation3 + $0x8] sm:$0xff] %v634
          %663 = vst [vmem:[#allocation3 + $0x10] sm:$0xff] %v639
          %664 = vst [vmem:[#allocation3 + $0x18] sm:$0xff] %v642
          %665 = vst [vmem:[#allocation3 + $0x20] sm:$0xff] %v647
          %666 = vst [vmem:[#allocation3 + $0x28] sm:$0xff] %v650
          %667 = vst [vmem:[#allocation3 + $0x30] sm:$0xff] %v655
          %668 = vst [vmem:[#allocation3 + $0x38] sm:$0xff] %v658
        $region52: #{rgcn_forward.5} parent=43 // pred_fallthru
          _
        // Predicated region
        $region53: #{rgcn_forward.5} parent=43 // pred_check
          %p669 = pneg %p487
        $region54: #{rgcn_forward.5} parent=43 // pred_check_branch
          %671 = sbr.rel (%p669) target = $region56
        $region55: #{rgcn_forward.5} parent=43 // pred_region
          %672 = vst [vmem:[#allocation2] sm:$0xff] 0.0
          %673 = vst [vmem:[#allocation2 + $0x8] sm:$0xff] 0.0
          %674 = vst [vmem:[#allocation2 + $0x10] sm:$0xff] 0.0
          %675 = vst [vmem:[#allocation2 + $0x18] sm:$0xff] 0.0
          %676 = vst [vmem:[#allocation2 + $0x20] sm:$0xff] 0.0
          %677 = vst [vmem:[#allocation2 + $0x28] sm:$0xff] 0.0
          %678 = vst [vmem:[#allocation2 + $0x30] sm:$0xff] 0.0
          %679 = vst [vmem:[#allocation2 + $0x38] sm:$0xff] 0.0
          %680 = vst [vmem:[#allocation2 + $0x40] sm:$0xff] 0.0
          %681 = vst [vmem:[#allocation2 + $0x48] sm:$0xff] 0.0
          %682 = vst [vmem:[#allocation2 + $0x50] sm:$0xff] 0.0
          %683 = vst [vmem:[#allocation2 + $0x58] sm:$0xff] 0.0
          %684 = vst [vmem:[#allocation2 + $0x60] sm:$0xff] 0.0
          %685 = vst [vmem:[#allocation2 + $0x68] sm:$0xff] 0.0
          %686 = vst [vmem:[#allocation2 + $0x70] sm:$0xff] 0.0
          %687 = vst [vmem:[#allocation2 + $0x78] sm:$0xff] 0.0
          %688 = vst [vmem:[#allocation2 + $0x80] sm:$0xff] 0.0
          %689 = vst [vmem:[#allocation2 + $0x88] sm:$0xff] 0.0
          %690 = vst [vmem:[#allocation2 + $0x90] sm:$0xff] 0.0
          %691 = vst [vmem:[#allocation2 + $0x98] sm:$0xff] 0.0
          %692 = vst [vmem:[#allocation2 + $0xa0] sm:$0xff] 0.0
          %693 = vst [vmem:[#allocation2 + $0xa8] sm:$0xff] 0.0
          %694 = vst [vmem:[#allocation2 + $0xb0] sm:$0xff] 0.0
          %695 = vst [vmem:[#allocation2 + $0xb8] sm:$0xff] 0.0
        $region56: #{rgcn_forward.5} parent=43 // pred_fallthru
          _
        %s696 = sld [smem:[#allocation7 + %s35]]
        %p697 = scmp.lt.s32.totalorder %s37, %s696
        // Predicated region
        $region57: #{rgcn_forward.5} parent=43 // pred_check
          %p698 = pneg %p697
        $region58: #{rgcn_forward.5} parent=43 // pred_check_branch
          %700 = sbr.rel (%p698) target = $region60
        $region59: #{rgcn_forward.5} parent=43 // pred_region
          %v701 = vld [vmem:[#allocation2] sm:$0xff]
          %v702 = vld [vmem:[#allocation2 + $0x8] sm:$0xff]
          %v703 = vld [vmem:[#allocation2 + $0x10] sm:$0xff]
          %v704 = vld [vmem:[#allocation2 + $0x18] sm:$0xff]
          %v705 = vld [vmem:[#allocation2 + $0x20] sm:$0xff]
          %v706 = vld [vmem:[#allocation2 + $0x28] sm:$0xff]
          %v707 = vld [vmem:[#allocation2 + $0x30] sm:$0xff]
          %v708 = vld [vmem:[#allocation2 + $0x38] sm:$0xff]
          %v709 = vld [vmem:[#allocation2 + $0x40] sm:$0xff]
          %v710 = vld [vmem:[#allocation2 + $0x48] sm:$0xff]
          %v711 = vld [vmem:[#allocation2 + $0x50] sm:$0xff]
          %v712 = vld [vmem:[#allocation2 + $0x58] sm:$0xff]
          %v713 = vld [vmem:[#allocation2 + $0x60] sm:$0xff]
          %v714 = vld [vmem:[#allocation2 + $0x68] sm:$0xff]
          %v715 = vld [vmem:[#allocation2 + $0x70] sm:$0xff]
          %v716 = vld [vmem:[#allocation2 + $0x78] sm:$0xff]
          %v717 = vld [vmem:[#allocation2 + $0x80] sm:$0xff]
          %v718 = vld [vmem:[#allocation2 + $0x88] sm:$0xff]
          %v719 = vld [vmem:[#allocation2 + $0x90] sm:$0xff]
          %v720 = vld [vmem:[#allocation2 + $0x98] sm:$0xff]
          %v721 = vld [vmem:[#allocation2 + $0xa0] sm:$0xff]
          %v722 = vld [vmem:[#allocation2 + $0xa8] sm:$0xff]
          %v723 = vld [vmem:[#allocation2 + $0xb0] sm:$0xff]
          %v724 = vld [vmem:[#allocation2 + $0xb8] sm:$0xff]
          %v725 = vld [vmem:[%s439] sm:$0xf]
          %v726 = vld [vmem:[%s439 + $0x4] sm:$0xf]
          %v727 = vld [vmem:[%s439 + $0x8] sm:$0xf]
          %v728 = vld [vmem:[%s439 + $0xc] sm:$0xf]
          %v729 = vld [vmem:[%s439 + $0x10] sm:$0xf]
          %v730 = vld [vmem:[%s439 + $0x14] sm:$0xf]
          %v731 = vld [vmem:[%s439 + $0x18] sm:$0xf]
          %v732 = vld [vmem:[%s439 + $0x1c] sm:$0xf]
          %v733 = vld [vmem:[%s439 + $0x20] sm:$0xf]
          %v734 = vld [vmem:[%s439 + $0x24] sm:$0xf]
          %v735 = vld [vmem:[%s439 + $0x28] sm:$0xf]
          %v736 = vld [vmem:[%s439 + $0x2c] sm:$0xf]
          %v737 = vld [vmem:[%s439 + $0x30] sm:$0xf]
          %v738 = vld [vmem:[%s439 + $0x34] sm:$0xf]
          %v739 = vld [vmem:[%s439 + $0x38] sm:$0xf]
          %v740 = vld [vmem:[%s439 + $0x3c] sm:$0xf]
          %v741 = vld [vmem:[%s439 + $0x40] sm:$0xf]
          %v742 = vld [vmem:[%s439 + $0x44] sm:$0xf]
          %v743 = vld [vmem:[%s439 + $0x48] sm:$0xf]
          %v744 = vld [vmem:[%s439 + $0x4c] sm:$0xf]
          %v745 = vld [vmem:[%s439 + $0x50] sm:$0xf]
          %v746 = vld [vmem:[%s439 + $0x54] sm:$0xf]
          %v747 = vld [vmem:[%s439 + $0x58] sm:$0xf]
          %v748 = vld [vmem:[%s439 + $0x5c] sm:$0xf]
          %v749 = vld [vmem:[%s462] sm:$0xf]
          %v750 = vld [vmem:[%s462 + $0x4] sm:$0xf]
          %v751 = vld [vmem:[%s462 + $0x8] sm:$0xf]
          %v752 = vld [vmem:[%s462 + $0xc] sm:$0xf]
          %v753 = vld [vmem:[%s462 + $0x10] sm:$0xf]
          %v754 = vld [vmem:[%s462 + $0x14] sm:$0xf]
          %v755 = vld [vmem:[%s462 + $0x18] sm:$0xf]
          %v756 = vld [vmem:[%s462 + $0x1c] sm:$0xf]
          %v757 = vld [vmem:[%s462 + $0x20] sm:$0xf]
          %v758 = vld [vmem:[%s462 + $0x24] sm:$0xf]
          %v759 = vld [vmem:[%s462 + $0x28] sm:$0xf]
          %v760 = vld [vmem:[%s462 + $0x2c] sm:$0xf]
          %v761 = vld [vmem:[%s462 + $0x30] sm:$0xf]
          %v762 = vld [vmem:[%s462 + $0x34] sm:$0xf]
          %v763 = vld [vmem:[%s462 + $0x38] sm:$0xf]
          %v764 = vld [vmem:[%s462 + $0x3c] sm:$0xf]
          %v789 = vunpack.c.l.b16 %v725
          %v790 = vunpack.c.l.b16 %v726
          %v791 = vunpack.c.l.b16 %v727
          %v792 = vunpack.c.l.b16 %v728
          %v793 = vunpack.c.l.b16 %v729
          %v794 = vunpack.c.l.b16 %v730
          %v795 = vunpack.c.l.b16 %v731
          %v796 = vunpack.c.l.b16 %v732
          %v797 = vunpack.c.l.b16 %v733
          %v798 = vunpack.c.l.b16 %v734
          %v799 = vunpack.c.l.b16 %v735
          %v800 = vunpack.c.l.b16 %v736
          %v801 = vunpack.c.l.b16 %v737
          %v802 = vunpack.c.l.b16 %v738
          %v803 = vunpack.c.l.b16 %v739
          %v804 = vunpack.c.l.b16 %v740
          %v805 = vunpack.c.l.b16 %v741
          %v806 = vunpack.c.l.b16 %v742
          %v807 = vunpack.c.l.b16 %v743
          %v808 = vunpack.c.l.b16 %v744
          %v809 = vunpack.c.l.b16 %v745
          %v810 = vunpack.c.l.b16 %v746
          %v811 = vunpack.c.l.b16 %v747
          %v812 = vunpack.c.l.b16 %v748
          %v813 = vpack.c.b16 %v790, %v789
          %v814 = vpack.c.b16 %v792, %v791
          %v815 = vpack.c.b16 %v794, %v793
          %v816 = vpack.c.b16 %v796, %v795
          %v817 = vpack.c.b16 %v798, %v797
          %v818 = vpack.c.b16 %v800, %v799
          %v819 = vpack.c.b16 %v802, %v801
          %v820 = vpack.c.b16 %v804, %v803
          %v821 = vpack.c.b16 %v806, %v805
          %v822 = vpack.c.b16 %v808, %v807
          %v823 = vpack.c.b16 %v810, %v809
          %v824 = vpack.c.b16 %v812, %v811
          %v853 = vunpack.c.l.b16 %v749
          %v854 = vunpack.c.l.b16 %v750
          %v855 = vunpack.c.l.b16 %v751
          %v856 = vunpack.c.l.b16 %v752
          %v857 = vunpack.c.l.b16 %v753
          %v858 = vunpack.c.l.b16 %v754
          %v859 = vunpack.c.l.b16 %v755
          %v860 = vunpack.c.l.b16 %v756
          %v861 = vunpack.c.l.b16 %v757
          %v862 = vunpack.c.l.b16 %v758
          %v863 = vunpack.c.l.b16 %v759
          %v864 = vunpack.c.l.b16 %v760
          %v865 = vunpack.c.l.b16 %v761
          %v866 = vunpack.c.l.b16 %v762
          %v867 = vunpack.c.l.b16 %v763
          %v868 = vunpack.c.l.b16 %v764
          %v869 = vpack.c.b16 %v854, %v853
          %v870 = vpack.c.b16 %v856, %v855
          %v871 = vpack.c.b16 %v858, %v857
          %v872 = vpack.c.b16 %v860, %v859
          %v873 = vpack.c.b16 %v862, %v861
          %v874 = vpack.c.b16 %v864, %v863
          %v875 = vpack.c.b16 %v866, %v865
          %v876 = vpack.c.b16 %v868, %v867
          %885 = vmatprep.subr.bf16.mxu0 0
          %886 = vmatpush1.bf16.msra.mxu0 %v876
          %887 = vmatprep.subr.bf16.mxu0 0
          %888 = vmatpush1.bf16.msra.mxu0 %v875
          %889 = vmatprep.subr.bf16.mxu0 0
          %890 = vmatpush1.bf16.msra.mxu0 %v874
          %891 = vmatprep.subr.bf16.mxu0 0
          %892 = vmatpush1.bf16.msra.mxu0 %v873
          %893 = vmatprep.subr.bf16.mxu0 0
          %894 = vmatpush1.bf16.msra.mxu0 %v872
          %895 = vmatprep.subr.bf16.mxu0 0
          %896 = vmatpush1.bf16.msra.mxu0 %v871
          %897 = vmatprep.subr.bf16.mxu0 0
          %898 = vmatpush1.bf16.msra.mxu0 %v870
          %899 = vmatprep.subr.bf16.mxu0 0
          %900 = vmatpush1.bf16.msra.mxu0 %v869
          %901 = vmatprep.subr.bf16.mxu0 0
          %902 = vmatpush2.bf16.msra.mxu0 0
          %903 = vmatprep.subr.bf16.mxu0 0
          %904 = vmatpush2.bf16.msra.mxu0 0
          %905 = vmatprep.subr.bf16.mxu0 0
          %906 = vmatpush2.bf16.msra.mxu0 0
          %907 = vmatprep.subr.bf16.mxu0 0
          %908 = vmatpush2.bf16.msra.mxu0 0
          %909 = vmatprep.subr.bf16.mxu0 0
          %910 = vmatpush2.bf16.msra.mxu0 0
          %911 = vmatprep.subr.bf16.mxu0 0
          %912 = vmatpush2.bf16.msra.mxu0 0
          %913 = vmatprep.subr.bf16.mxu0 0
          %914 = vmatpush2.bf16.msra.mxu0 0
          %915 = vmatprep.subr.bf16.mxu0 0
          %916 = vmatpush2.bf16.msra.mxu0 0
          %917 = vmatprep.mubr.bf16.mxu0 0
          %918 = vmatmul.mubr.bf16.gmra.mxu0 %v813
          %v919 = vpop.f32.mrf.mxu0
          %v920 = vadd.f32 0.0, %v919
          %v921 = vpop.f32.mrf.mxu0
          %v922 = vpop.f32.mrf.mxu0
          %v923 = vadd.f32 0.0, %v922
          %v924 = vpop.f32.mrf.mxu0
          %925 = vmatprep.mubr.bf16.mxu0 0
          %926 = vmatmul.mubr.bf16.gmra.mxu0 %v814
          %v927 = vpop.f32.mrf.mxu0
          %v928 = vadd.f32 0.0, %v927
          %v929 = vpop.f32.mrf.mxu0
          %v930 = vpop.f32.mrf.mxu0
          %v931 = vadd.f32 0.0, %v930
          %v932 = vpop.f32.mrf.mxu0
          %933 = vmatprep.mubr.bf16.mxu0 0
          %934 = vmatmul.mubr.bf16.gmra.mxu0 %v815
          %v935 = vpop.f32.mrf.mxu0
          %v936 = vadd.f32 0.0, %v935
          %v937 = vpop.f32.mrf.mxu0
          %v938 = vpop.f32.mrf.mxu0
          %v939 = vadd.f32 0.0, %v938
          %v940 = vpop.f32.mrf.mxu0
          %941 = vmatprep.mubr.bf16.mxu0 0
          %942 = vmatmul.mubr.bf16.gmra.mxu0 %v816
          %v943 = vpop.f32.mrf.mxu0
          %v944 = vadd.f32 0.0, %v943
          %v945 = vpop.f32.mrf.mxu0
          %v946 = vpop.f32.mrf.mxu0
          %v947 = vadd.f32 0.0, %v946
          %v948 = vpop.f32.mrf.mxu0
          %949 = vmatprep.mubr.bf16.mxu0 0
          %950 = vmatmul.mubr.bf16.gmra.mxu0 %v817
          %v951 = vpop.f32.mrf.mxu0
          %v952 = vadd.f32 0.0, %v951
          %v953 = vpop.f32.mrf.mxu0
          %v954 = vpop.f32.mrf.mxu0
          %v955 = vadd.f32 0.0, %v954
          %v956 = vpop.f32.mrf.mxu0
          %957 = vmatprep.mubr.bf16.mxu0 0
          %958 = vmatmul.mubr.bf16.gmra.mxu0 %v818
          %v959 = vpop.f32.mrf.mxu0
          %v960 = vadd.f32 0.0, %v959
          %v961 = vpop.f32.mrf.mxu0
          %v962 = vpop.f32.mrf.mxu0
          %v963 = vadd.f32 0.0, %v962
          %v964 = vpop.f32.mrf.mxu0
          %965 = vmatprep.mubr.bf16.mxu0 0
          %966 = vmatmul.mubr.bf16.gmra.mxu0 %v819
          %v967 = vpop.f32.mrf.mxu0
          %v968 = vadd.f32 0.0, %v967
          %v969 = vpop.f32.mrf.mxu0
          %v970 = vpop.f32.mrf.mxu0
          %v971 = vadd.f32 0.0, %v970
          %v972 = vpop.f32.mrf.mxu0
          %973 = vmatprep.mubr.bf16.mxu0 0
          %974 = vmatmul.mubr.bf16.gmra.mxu0 %v820
          %v975 = vpop.f32.mrf.mxu0
          %v976 = vadd.f32 0.0, %v975
          %v977 = vpop.f32.mrf.mxu0
          %v978 = vpop.f32.mrf.mxu0
          %v979 = vadd.f32 0.0, %v978
          %v980 = vpop.f32.mrf.mxu0
          %981 = vmatprep.mubr.bf16.mxu0 0
          %982 = vmatmul.mubr.bf16.gmra.mxu0 %v821
          %v983 = vpop.f32.mrf.mxu0
          %v984 = vadd.f32 0.0, %v983
          %v985 = vpop.f32.mrf.mxu0
          %v986 = vpop.f32.mrf.mxu0
          %v987 = vadd.f32 0.0, %v986
          %v988 = vpop.f32.mrf.mxu0
          %989 = vmatprep.mubr.bf16.mxu0 0
          %990 = vmatmul.mubr.bf16.gmra.mxu0 %v822
          %v991 = vpop.f32.mrf.mxu0
          %v992 = vadd.f32 0.0, %v991
          %v993 = vpop.f32.mrf.mxu0
          %v994 = vpop.f32.mrf.mxu0
          %v995 = vadd.f32 0.0, %v994
          %v996 = vpop.f32.mrf.mxu0
          %997 = vmatprep.mubr.bf16.mxu0 0
          %998 = vmatmul.mubr.bf16.gmra.mxu0 %v823
          %v999 = vpop.f32.mrf.mxu0
          %v1000 = vadd.f32 0.0, %v999
          %v1001 = vpop.f32.mrf.mxu0
          %v1002 = vpop.f32.mrf.mxu0
          %v1003 = vadd.f32 0.0, %v1002
          %v1004 = vpop.f32.mrf.mxu0
          %1005 = vmatprep.mubr.bf16.mxu0 0
          %1006 = vmatmul.mubr.bf16.gmra.mxu0 %v824
          %v1007 = vpop.f32.mrf.mxu0
          %v1008 = vadd.f32 0.0, %v1007
          %v1009 = vpop.f32.mrf.mxu0
          %v1010 = vpop.f32.mrf.mxu0
          %v1011 = vadd.f32 0.0, %v1010
          %v1012 = vpop.f32.mrf.mxu0
          %1013 = vdwg.mxu0
          %v1014 = vadd.f32 %v701, %v920
          %v1015 = vadd.f32 %v702, %v923
          %v1016 = vadd.f32 %v703, %v928
          %v1017 = vadd.f32 %v704, %v931
          %v1018 = vadd.f32 %v705, %v936
          %v1019 = vadd.f32 %v706, %v939
          %v1020 = vadd.f32 %v707, %v944
          %v1021 = vadd.f32 %v708, %v947
          %v1022 = vadd.f32 %v709, %v952
          %v1023 = vadd.f32 %v710, %v955
          %v1024 = vadd.f32 %v711, %v960
          %v1025 = vadd.f32 %v712, %v963
          %v1026 = vadd.f32 %v713, %v968
          %v1027 = vadd.f32 %v714, %v971
          %v1028 = vadd.f32 %v715, %v976
          %v1029 = vadd.f32 %v716, %v979
          %v1030 = vadd.f32 %v717, %v984
          %v1031 = vadd.f32 %v718, %v987
          %v1032 = vadd.f32 %v719, %v992
          %v1033 = vadd.f32 %v720, %v995
          %v1034 = vadd.f32 %v721, %v1000
          %v1035 = vadd.f32 %v722, %v1003
          %v1036 = vadd.f32 %v723, %v1008
          %v1037 = vadd.f32 %v724, %v1011
          %1038 = vst [vmem:[#allocation2] sm:$0xff] %v1014
          %1039 = vst [vmem:[#allocation2 + $0x8] sm:$0xff] %v1015
          %1040 = vst [vmem:[#allocation2 + $0x10] sm:$0xff] %v1016
          %1041 = vst [vmem:[#allocation2 + $0x18] sm:$0xff] %v1017
          %1042 = vst [vmem:[#allocation2 + $0x20] sm:$0xff] %v1018
          %1043 = vst [vmem:[#allocation2 + $0x28] sm:$0xff] %v1019
          %1044 = vst [vmem:[#allocation2 + $0x30] sm:$0xff] %v1020
          %1045 = vst [vmem:[#allocation2 + $0x38] sm:$0xff] %v1021
          %1046 = vst [vmem:[#allocation2 + $0x40] sm:$0xff] %v1022
          %1047 = vst [vmem:[#allocation2 + $0x48] sm:$0xff] %v1023
          %1048 = vst [vmem:[#allocation2 + $0x50] sm:$0xff] %v1024
          %1049 = vst [vmem:[#allocation2 + $0x58] sm:$0xff] %v1025
          %1050 = vst [vmem:[#allocation2 + $0x60] sm:$0xff] %v1026
          %1051 = vst [vmem:[#allocation2 + $0x68] sm:$0xff] %v1027
          %1052 = vst [vmem:[#allocation2 + $0x70] sm:$0xff] %v1028
          %1053 = vst [vmem:[#allocation2 + $0x78] sm:$0xff] %v1029
          %1054 = vst [vmem:[#allocation2 + $0x80] sm:$0xff] %v1030
          %1055 = vst [vmem:[#allocation2 + $0x88] sm:$0xff] %v1031
          %1056 = vst [vmem:[#allocation2 + $0x90] sm:$0xff] %v1032
          %1057 = vst [vmem:[#allocation2 + $0x98] sm:$0xff] %v1033
          %1058 = vst [vmem:[#allocation2 + $0xa0] sm:$0xff] %v1034
          %1059 = vst [vmem:[#allocation2 + $0xa8] sm:$0xff] %v1035
          %1060 = vst [vmem:[#allocation2 + $0xb0] sm:$0xff] %v1036
          %1061 = vst [vmem:[#allocation2 + $0xb8] sm:$0xff] %v1037
        $region60: #{rgcn_forward.5} parent=43 // pred_fallthru
          _
        // Predicated region
        $region61: #{rgcn_forward.5} parent=43 // pred_check
          %p1062 = pneg %p487
        $region62: #{rgcn_forward.5} parent=43 // pred_check_branch
          %1064 = sbr.rel (%p1062) target = $region64
        $region63: #{rgcn_forward.5} parent=43 // pred_region
          %v1065 = vld [vmem:[#allocation4] sm:$0xff]
          %v1066 = vld [vmem:[#allocation4 + $0x8] sm:$0xff]
          %v1067 = vld [vmem:[#allocation4 + $0x10] sm:$0xff]
          %v1068 = vld [vmem:[#allocation4 + $0x18] sm:$0xff]
          %v1069 = vld [vmem:[#allocation4 + $0x20] sm:$0xff]
          %v1070 = vld [vmem:[#allocation4 + $0x28] sm:$0xff]
          %v1071 = vld [vmem:[#allocation4 + $0x30] sm:$0xff]
          %v1072 = vld [vmem:[#allocation4 + $0x38] sm:$0xff]
          %v1073 = vld [vmem:[#allocation2] sm:$0xff]
          %v1074 = vld [vmem:[#allocation2 + $0x8] sm:$0xff]
          %v1075 = vld [vmem:[#allocation2 + $0x10] sm:$0xff]
          %v1076 = vld [vmem:[#allocation2 + $0x18] sm:$0xff]
          %v1077 = vld [vmem:[#allocation2 + $0x20] sm:$0xff]
          %v1078 = vld [vmem:[#allocation2 + $0x28] sm:$0xff]
          %v1079 = vld [vmem:[#allocation2 + $0x30] sm:$0xff]
          %v1080 = vld [vmem:[#allocation2 + $0x38] sm:$0xff]
          %v1081 = vld [vmem:[#allocation8] sm:$0xf]
          %v1082 = vld [vmem:[#allocation8 + $0x4] sm:$0xf]
          %v1083 = vld [vmem:[#allocation8 + $0x8] sm:$0xf]
          %v1084 = vld [vmem:[#allocation8 + $0xc] sm:$0xf]
          %v1085 = vld [vmem:[#allocation8 + $0x10] sm:$0xf]
          %v1086 = vld [vmem:[#allocation8 + $0x14] sm:$0xf]
          %v1087 = vld [vmem:[#allocation8 + $0x18] sm:$0xf]
          %v1088 = vld [vmem:[#allocation8 + $0x1c] sm:$0xf]
          %v1089 = vld [vmem:[#allocation8 + $0x20] sm:$0xf]
          %v1090 = vld [vmem:[#allocation8 + $0x24] sm:$0xf]
          %v1091 = vld [vmem:[#allocation8 + $0x28] sm:$0xf]
          %v1092 = vld [vmem:[#allocation8 + $0x2c] sm:$0xf]
          %v1093 = vld [vmem:[#allocation8 + $0x30] sm:$0xf]
          %v1094 = vld [vmem:[#allocation8 + $0x34] sm:$0xf]
          %v1095 = vld [vmem:[#allocation8 + $0x38] sm:$0xf]
          %v1096 = vld [vmem:[#allocation8 + $0x3c] sm:$0xf]
          %v1097 = vunpack.c.l.bf16 %v1081
          %v1098 = vunpack.c.l.bf16 %v1082
          %v1099 = vunpack.c.l.bf16 %v1083
          %v1100 = vunpack.c.l.bf16 %v1084
          %v1101 = vunpack.c.l.bf16 %v1085
          %v1102 = vunpack.c.l.bf16 %v1086
          %v1103 = vunpack.c.l.bf16 %v1087
          %v1104 = vunpack.c.l.bf16 %v1088
          %v1105 = vunpack.c.l.bf16 %v1089
          %v1106 = vunpack.c.l.bf16 %v1090
          %v1107 = vunpack.c.l.bf16 %v1091
          %v1108 = vunpack.c.l.bf16 %v1092
          %v1109 = vunpack.c.l.bf16 %v1093
          %v1110 = vunpack.c.l.bf16 %v1094
          %v1111 = vunpack.c.l.bf16 %v1095
          %v1112 = vunpack.c.l.bf16 %v1096
          %1113 = vmatprep.subr.mxu0 0.0
          %1114 = vmatpush1.msra.mxu0 %v1112
          %1115 = vmatprep.subr.mxu0 0.0
          %1116 = vmatpush1.msra.mxu0 %v1111
          %1117 = vmatprep.subr.mxu0 0.0
          %1118 = vmatpush1.msra.mxu0 %v1110
          %1119 = vmatprep.subr.mxu0 0.0
          %1120 = vmatpush1.msra.mxu0 %v1109
          %1121 = vmatprep.subr.mxu0 0.0
          %1122 = vmatpush1.msra.mxu0 %v1108
          %1123 = vmatprep.subr.mxu0 0.0
          %1124 = vmatpush1.msra.mxu0 %v1107
          %1125 = vmatprep.subr.mxu0 0.0
          %1126 = vmatpush1.msra.mxu0 %v1106
          %1127 = vmatprep.subr.mxu0 0.0
          %1128 = vmatpush1.msra.mxu0 %v1105
          %1129 = vmatprep.subr.mxu0 0.0
          %1130 = vmatpush1.msra.mxu0 %v1104
          %1131 = vmatprep.subr.mxu0 0.0
          %1132 = vmatpush1.msra.mxu0 %v1103
          %1133 = vmatprep.subr.mxu0 0.0
          %1134 = vmatpush1.msra.mxu0 %v1102
          %1135 = vmatprep.subr.mxu0 0.0
          %1136 = vmatpush1.msra.mxu0 %v1101
          %1137 = vmatprep.subr.mxu0 0.0
          %1138 = vmatpush1.msra.mxu0 %v1100
          %1139 = vmatprep.subr.mxu0 0.0
          %1140 = vmatpush1.msra.mxu0 %v1099
          %1141 = vmatprep.subr.mxu0 0.0
          %1142 = vmatpush1.msra.mxu0 %v1098
          %1143 = vmatprep.subr.mxu0 0.0
          %1144 = vmatpush1.msra.mxu0 %v1097
          %1145 = vmatprep.subr.mxu0 0.0
          %1146 = vmatpush2.msra.mxu0 0.0
          %1147 = vmatprep.subr.mxu0 0.0
          %1148 = vmatpush2.msra.mxu0 0.0
          %1149 = vmatprep.subr.mxu0 0.0
          %1150 = vmatpush2.msra.mxu0 0.0
          %1151 = vmatprep.subr.mxu0 0.0
          %1152 = vmatpush2.msra.mxu0 0.0
          %1153 = vmatprep.subr.mxu0 0.0
          %1154 = vmatpush2.msra.mxu0 0.0
          %1155 = vmatprep.subr.mxu0 0.0
          %1156 = vmatpush2.msra.mxu0 0.0
          %1157 = vmatprep.subr.mxu0 0.0
          %1158 = vmatpush2.msra.mxu0 0.0
          %1159 = vmatprep.subr.mxu0 0.0
          %1160 = vmatpush2.msra.mxu0 0.0
          %1161 = vmatprep.subr.mxu0 0.0
          %1162 = vmatpush2.msra.mxu0 0.0
          %1163 = vmatprep.subr.mxu0 0.0
          %1164 = vmatpush2.msra.mxu0 0.0
          %1165 = vmatprep.subr.mxu0 0.0
          %1166 = vmatpush2.msra.mxu0 0.0
          %1167 = vmatprep.subr.mxu0 0.0
          %1168 = vmatpush2.msra.mxu0 0.0
          %1169 = vmatprep.subr.mxu0 0.0
          %1170 = vmatpush2.msra.mxu0 0.0
          %1171 = vmatprep.subr.mxu0 0.0
          %1172 = vmatpush2.msra.mxu0 0.0
          %1173 = vmatprep.subr.mxu0 0.0
          %1174 = vmatpush2.msra.mxu0 0.0
          %1175 = vmatprep.subr.mxu0 0.0
          %1176 = vmatpush2.msra.mxu0 0.0
          %1177 = vmatprep.mubr.f32.mxu0 0.0
          %1178 = vmatmul.mubr.f32.gmra.mxu0 %v1073
          %v1179 = vpop.f32.mrf.mxu0
          %v1180 = vadd.f32 0.0, %v1179
          %v1181 = vpop.f32.mrf.mxu0
          %1182 = vmatprep.mubr.f32.mxu0 0.0
          %1183 = vmatmul.mubr.f32.gmra.mxu0 %v1074
          %v1184 = vpop.f32.mrf.mxu0
          %v1185 = vadd.f32 0.0, %v1184
          %v1186 = vpop.f32.mrf.mxu0
          %1187 = vmatprep.mubr.f32.mxu0 0.0
          %1188 = vmatmul.mubr.f32.gmra.mxu0 %v1075
          %v1189 = vpop.f32.mrf.mxu0
          %v1190 = vadd.f32 0.0, %v1189
          %v1191 = vpop.f32.mrf.mxu0
          %1192 = vmatprep.mubr.f32.mxu0 0.0
          %1193 = vmatmul.mubr.f32.gmra.mxu0 %v1076
          %v1194 = vpop.f32.mrf.mxu0
          %v1195 = vadd.f32 0.0, %v1194
          %v1196 = vpop.f32.mrf.mxu0
          %1197 = vmatprep.mubr.f32.mxu0 0.0
          %1198 = vmatmul.mubr.f32.gmra.mxu0 %v1077
          %v1199 = vpop.f32.mrf.mxu0
          %v1200 = vadd.f32 0.0, %v1199
          %v1201 = vpop.f32.mrf.mxu0
          %1202 = vmatprep.mubr.f32.mxu0 0.0
          %1203 = vmatmul.mubr.f32.gmra.mxu0 %v1078
          %v1204 = vpop.f32.mrf.mxu0
          %v1205 = vadd.f32 0.0, %v1204
          %v1206 = vpop.f32.mrf.mxu0
          %1207 = vmatprep.mubr.f32.mxu0 0.0
          %1208 = vmatmul.mubr.f32.gmra.mxu0 %v1079
          %v1209 = vpop.f32.mrf.mxu0
          %v1210 = vadd.f32 0.0, %v1209
          %v1211 = vpop.f32.mrf.mxu0
          %1212 = vmatprep.mubr.f32.mxu0 0.0
          %1213 = vmatmul.mubr.f32.gmra.mxu0 %v1080
          %v1214 = vpop.f32.mrf.mxu0
          %v1215 = vadd.f32 0.0, %v1214
          %v1216 = vpop.f32.mrf.mxu0
          %1217 = vdwg.mxu0
          %v1218 = vadd.f32 %v1065, %v1180
          %v1219 = vadd.f32 %v1066, %v1185
          %v1220 = vadd.f32 %v1067, %v1190
          %v1221 = vadd.f32 %v1068, %v1195
          %v1222 = vadd.f32 %v1069, %v1200
          %v1223 = vadd.f32 %v1070, %v1205
          %v1224 = vadd.f32 %v1071, %v1210
          %v1225 = vadd.f32 %v1072, %v1215
          %v1226 = vld [vmem:[#allocation2 + $0x40] sm:$0xff]
          %v1227 = vld [vmem:[#allocation2 + $0x48] sm:$0xff]
          %v1228 = vld [vmem:[#allocation2 + $0x50] sm:$0xff]
          %v1229 = vld [vmem:[#allocation2 + $0x58] sm:$0xff]
          %v1230 = vld [vmem:[#allocation2 + $0x60] sm:$0xff]
          %v1231 = vld [vmem:[#allocation2 + $0x68] sm:$0xff]
          %v1232 = vld [vmem:[#allocation2 + $0x70] sm:$0xff]
          %v1233 = vld [vmem:[#allocation2 + $0x78] sm:$0xff]
          %s1234 = scalar_lea.vmem [#allocation8], 64
          %v1235 = vld [vmem:[%s1234] sm:$0xf]
          %v1236 = vld [vmem:[%s1234 + $0x4] sm:$0xf]
          %v1237 = vld [vmem:[%s1234 + $0x8] sm:$0xf]
          %v1238 = vld [vmem:[%s1234 + $0xc] sm:$0xf]
          %v1239 = vld [vmem:[%s1234 + $0x10] sm:$0xf]
          %v1240 = vld [vmem:[%s1234 + $0x14] sm:$0xf]
          %v1241 = vld [vmem:[%s1234 + $0x18] sm:$0xf]
          %v1242 = vld [vmem:[%s1234 + $0x1c] sm:$0xf]
          %v1243 = vld [vmem:[%s1234 + $0x20] sm:$0xf]
          %v1244 = vld [vmem:[%s1234 + $0x24] sm:$0xf]
          %v1245 = vld [vmem:[%s1234 + $0x28] sm:$0xf]
          %v1246 = vld [vmem:[%s1234 + $0x2c] sm:$0xf]
          %v1247 = vld [vmem:[%s1234 + $0x30] sm:$0xf]
          %v1248 = vld [vmem:[%s1234 + $0x34] sm:$0xf]
          %v1249 = vld [vmem:[%s1234 + $0x38] sm:$0xf]
          %v1250 = vld [vmem:[%s1234 + $0x3c] sm:$0xf]
          %v1251 = vunpack.c.l.bf16 %v1235
          %v1252 = vunpack.c.l.bf16 %v1236
          %v1253 = vunpack.c.l.bf16 %v1237
          %v1254 = vunpack.c.l.bf16 %v1238
          %v1255 = vunpack.c.l.bf16 %v1239
          %v1256 = vunpack.c.l.bf16 %v1240
          %v1257 = vunpack.c.l.bf16 %v1241
          %v1258 = vunpack.c.l.bf16 %v1242
          %v1259 = vunpack.c.l.bf16 %v1243
          %v1260 = vunpack.c.l.bf16 %v1244
          %v1261 = vunpack.c.l.bf16 %v1245
          %v1262 = vunpack.c.l.bf16 %v1246
          %v1263 = vunpack.c.l.bf16 %v1247
          %v1264 = vunpack.c.l.bf16 %v1248
          %v1265 = vunpack.c.l.bf16 %v1249
          %v1266 = vunpack.c.l.bf16 %v1250
          %1267 = vmatprep.subr.mxu0 0.0
          %1268 = vmatpush1.msra.mxu0 %v1266
          %1269 = vmatprep.subr.mxu0 0.0
          %1270 = vmatpush1.msra.mxu0 %v1265
          %1271 = vmatprep.subr.mxu0 0.0
          %1272 = vmatpush1.msra.mxu0 %v1264
          %1273 = vmatprep.subr.mxu0 0.0
          %1274 = vmatpush1.msra.mxu0 %v1263
          %1275 = vmatprep.subr.mxu0 0.0
          %1276 = vmatpush1.msra.mxu0 %v1262
          %1277 = vmatprep.subr.mxu0 0.0
          %1278 = vmatpush1.msra.mxu0 %v1261
          %1279 = vmatprep.subr.mxu0 0.0
          %1280 = vmatpush1.msra.mxu0 %v1260
          %1281 = vmatprep.subr.mxu0 0.0
          %1282 = vmatpush1.msra.mxu0 %v1259
          %1283 = vmatprep.subr.mxu0 0.0
          %1284 = vmatpush1.msra.mxu0 %v1258
          %1285 = vmatprep.subr.mxu0 0.0
          %1286 = vmatpush1.msra.mxu0 %v1257
          %1287 = vmatprep.subr.mxu0 0.0
          %1288 = vmatpush1.msra.mxu0 %v1256
          %1289 = vmatprep.subr.mxu0 0.0
          %1290 = vmatpush1.msra.mxu0 %v1255
          %1291 = vmatprep.subr.mxu0 0.0
          %1292 = vmatpush1.msra.mxu0 %v1254
          %1293 = vmatprep.subr.mxu0 0.0
          %1294 = vmatpush1.msra.mxu0 %v1253
          %1295 = vmatprep.subr.mxu0 0.0
          %1296 = vmatpush1.msra.mxu0 %v1252
          %1297 = vmatprep.subr.mxu0 0.0
          %1298 = vmatpush1.msra.mxu0 %v1251
          %1299 = vmatprep.subr.mxu0 0.0
          %1300 = vmatpush2.msra.mxu0 0.0
          %1301 = vmatprep.subr.mxu0 0.0
          %1302 = vmatpush2.msra.mxu0 0.0
          %1303 = vmatprep.subr.mxu0 0.0
          %1304 = vmatpush2.msra.mxu0 0.0
          %1305 = vmatprep.subr.mxu0 0.0
          %1306 = vmatpush2.msra.mxu0 0.0
          %1307 = vmatprep.subr.mxu0 0.0
          %1308 = vmatpush2.msra.mxu0 0.0
          %1309 = vmatprep.subr.mxu0 0.0
          %1310 = vmatpush2.msra.mxu0 0.0
          %1311 = vmatprep.subr.mxu0 0.0
          %1312 = vmatpush2.msra.mxu0 0.0
          %1313 = vmatprep.subr.mxu0 0.0
          %1314 = vmatpush2.msra.mxu0 0.0
          %1315 = vmatprep.subr.mxu0 0.0
          %1316 = vmatpush2.msra.mxu0 0.0
          %1317 = vmatprep.subr.mxu0 0.0
          %1318 = vmatpush2.msra.mxu0 0.0
          %1319 = vmatprep.subr.mxu0 0.0
          %1320 = vmatpush2.msra.mxu0 0.0
          %1321 = vmatprep.subr.mxu0 0.0
          %1322 = vmatpush2.msra.mxu0 0.0
          %1323 = vmatprep.subr.mxu0 0.0
          %1324 = vmatpush2.msra.mxu0 0.0
          %1325 = vmatprep.subr.mxu0 0.0
          %1326 = vmatpush2.msra.mxu0 0.0
          %1327 = vmatprep.subr.mxu0 0.0
          %1328 = vmatpush2.msra.mxu0 0.0
          %1329 = vmatprep.subr.mxu0 0.0
          %1330 = vmatpush2.msra.mxu0 0.0
          %1331 = vmatprep.mubr.f32.mxu0 0.0
          %1332 = vmatmul.mubr.f32.gmra.mxu0 %v1226
          %v1333 = vpop.f32.mrf.mxu0
          %v1334 = vadd.f32 0.0, %v1333
          %v1335 = vpop.f32.mrf.mxu0
          %1336 = vmatprep.mubr.f32.mxu0 0.0
          %1337 = vmatmul.mubr.f32.gmra.mxu0 %v1227
          %v1338 = vpop.f32.mrf.mxu0
          %v1339 = vadd.f32 0.0, %v1338
          %v1340 = vpop.f32.mrf.mxu0
          %1341 = vmatprep.mubr.f32.mxu0 0.0
          %1342 = vmatmul.mubr.f32.gmra.mxu0 %v1228
          %v1343 = vpop.f32.mrf.mxu0
          %v1344 = vadd.f32 0.0, %v1343
          %v1345 = vpop.f32.mrf.mxu0
          %1346 = vmatprep.mubr.f32.mxu0 0.0
          %1347 = vmatmul.mubr.f32.gmra.mxu0 %v1229
          %v1348 = vpop.f32.mrf.mxu0
          %v1349 = vadd.f32 0.0, %v1348
          %v1350 = vpop.f32.mrf.mxu0
          %1351 = vmatprep.mubr.f32.mxu0 0.0
          %1352 = vmatmul.mubr.f32.gmra.mxu0 %v1230
          %v1353 = vpop.f32.mrf.mxu0
          %v1354 = vadd.f32 0.0, %v1353
          %v1355 = vpop.f32.mrf.mxu0
          %1356 = vmatprep.mubr.f32.mxu0 0.0
          %1357 = vmatmul.mubr.f32.gmra.mxu0 %v1231
          %v1358 = vpop.f32.mrf.mxu0
          %v1359 = vadd.f32 0.0, %v1358
          %v1360 = vpop.f32.mrf.mxu0
          %1361 = vmatprep.mubr.f32.mxu0 0.0
          %1362 = vmatmul.mubr.f32.gmra.mxu0 %v1232
          %v1363 = vpop.f32.mrf.mxu0
          %v1364 = vadd.f32 0.0, %v1363
          %v1365 = vpop.f32.mrf.mxu0
          %1366 = vmatprep.mubr.f32.mxu0 0.0
          %1367 = vmatmul.mubr.f32.gmra.mxu0 %v1233
          %v1368 = vpop.f32.mrf.mxu0
          %v1369 = vadd.f32 0.0, %v1368
          %v1370 = vpop.f32.mrf.mxu0
          %1371 = vdwg.mxu0
          %v1372 = vadd.f32 %v1218, %v1334
          %v1373 = vadd.f32 %v1219, %v1339
          %v1374 = vadd.f32 %v1220, %v1344
          %v1375 = vadd.f32 %v1221, %v1349
          %v1376 = vadd.f32 %v1222, %v1354
          %v1377 = vadd.f32 %v1223, %v1359
          %v1378 = vadd.f32 %v1224, %v1364
          %v1379 = vadd.f32 %v1225, %v1369
          %v1380 = vld [vmem:[#allocation2 + $0x80] sm:$0xff]
          %v1381 = vld [vmem:[#allocation2 + $0x88] sm:$0xff]
          %v1382 = vld [vmem:[#allocation2 + $0x90] sm:$0xff]
          %v1383 = vld [vmem:[#allocation2 + $0x98] sm:$0xff]
          %v1384 = vld [vmem:[#allocation2 + $0xa0] sm:$0xff]
          %v1385 = vld [vmem:[#allocation2 + $0xa8] sm:$0xff]
          %v1386 = vld [vmem:[#allocation2 + $0xb0] sm:$0xff]
          %v1387 = vld [vmem:[#allocation2 + $0xb8] sm:$0xff]
          %s1388 = scalar_lea.vmem [#allocation8], 128
          %v1389 = vld [vmem:[%s1388] sm:$0xf]
          %v1390 = vld [vmem:[%s1388 + $0x4] sm:$0xf]
          %v1391 = vld [vmem:[%s1388 + $0x8] sm:$0xf]
          %v1392 = vld [vmem:[%s1388 + $0xc] sm:$0xf]
          %v1393 = vld [vmem:[%s1388 + $0x10] sm:$0xf]
          %v1394 = vld [vmem:[%s1388 + $0x14] sm:$0xf]
          %v1395 = vld [vmem:[%s1388 + $0x18] sm:$0xf]
          %v1396 = vld [vmem:[%s1388 + $0x1c] sm:$0xf]
          %v1397 = vld [vmem:[%s1388 + $0x20] sm:$0xf]
          %v1398 = vld [vmem:[%s1388 + $0x24] sm:$0xf]
          %v1399 = vld [vmem:[%s1388 + $0x28] sm:$0xf]
          %v1400 = vld [vmem:[%s1388 + $0x2c] sm:$0xf]
          %v1401 = vld [vmem:[%s1388 + $0x30] sm:$0xf]
          %v1402 = vld [vmem:[%s1388 + $0x34] sm:$0xf]
          %v1403 = vld [vmem:[%s1388 + $0x38] sm:$0xf]
          %v1404 = vld [vmem:[%s1388 + $0x3c] sm:$0xf]
          %v1405 = vunpack.c.l.bf16 %v1389
          %v1406 = vunpack.c.l.bf16 %v1390
          %v1407 = vunpack.c.l.bf16 %v1391
          %v1408 = vunpack.c.l.bf16 %v1392
          %v1409 = vunpack.c.l.bf16 %v1393
          %v1410 = vunpack.c.l.bf16 %v1394
          %v1411 = vunpack.c.l.bf16 %v1395
          %v1412 = vunpack.c.l.bf16 %v1396
          %v1413 = vunpack.c.l.bf16 %v1397
          %v1414 = vunpack.c.l.bf16 %v1398
          %v1415 = vunpack.c.l.bf16 %v1399
          %v1416 = vunpack.c.l.bf16 %v1400
          %v1417 = vunpack.c.l.bf16 %v1401
          %v1418 = vunpack.c.l.bf16 %v1402
          %v1419 = vunpack.c.l.bf16 %v1403
          %v1420 = vunpack.c.l.bf16 %v1404
          %1421 = vmatprep.subr.mxu0 0.0
          %1422 = vmatpush1.msra.mxu0 %v1420
          %1423 = vmatprep.subr.mxu0 0.0
          %1424 = vmatpush1.msra.mxu0 %v1419
          %1425 = vmatprep.subr.mxu0 0.0
          %1426 = vmatpush1.msra.mxu0 %v1418
          %1427 = vmatprep.subr.mxu0 0.0
          %1428 = vmatpush1.msra.mxu0 %v1417
          %1429 = vmatprep.subr.mxu0 0.0
          %1430 = vmatpush1.msra.mxu0 %v1416
          %1431 = vmatprep.subr.mxu0 0.0
          %1432 = vmatpush1.msra.mxu0 %v1415
          %1433 = vmatprep.subr.mxu0 0.0
          %1434 = vmatpush1.msra.mxu0 %v1414
          %1435 = vmatprep.subr.mxu0 0.0
          %1436 = vmatpush1.msra.mxu0 %v1413
          %1437 = vmatprep.subr.mxu0 0.0
          %1438 = vmatpush1.msra.mxu0 %v1412
          %1439 = vmatprep.subr.mxu0 0.0
          %1440 = vmatpush1.msra.mxu0 %v1411
          %1441 = vmatprep.subr.mxu0 0.0
          %1442 = vmatpush1.msra.mxu0 %v1410
          %1443 = vmatprep.subr.mxu0 0.0
          %1444 = vmatpush1.msra.mxu0 %v1409
          %1445 = vmatprep.subr.mxu0 0.0
          %1446 = vmatpush1.msra.mxu0 %v1408
          %1447 = vmatprep.subr.mxu0 0.0
          %1448 = vmatpush1.msra.mxu0 %v1407
          %1449 = vmatprep.subr.mxu0 0.0
          %1450 = vmatpush1.msra.mxu0 %v1406
          %1451 = vmatprep.subr.mxu0 0.0
          %1452 = vmatpush1.msra.mxu0 %v1405
          %1453 = vmatprep.subr.mxu0 0.0
          %1454 = vmatpush2.msra.mxu0 0.0
          %1455 = vmatprep.subr.mxu0 0.0
          %1456 = vmatpush2.msra.mxu0 0.0
          %1457 = vmatprep.subr.mxu0 0.0
          %1458 = vmatpush2.msra.mxu0 0.0
          %1459 = vmatprep.subr.mxu0 0.0
          %1460 = vmatpush2.msra.mxu0 0.0
          %1461 = vmatprep.subr.mxu0 0.0
          %1462 = vmatpush2.msra.mxu0 0.0
          %1463 = vmatprep.subr.mxu0 0.0
          %1464 = vmatpush2.msra.mxu0 0.0
          %1465 = vmatprep.subr.mxu0 0.0
          %1466 = vmatpush2.msra.mxu0 0.0
          %1467 = vmatprep.subr.mxu0 0.0
          %1468 = vmatpush2.msra.mxu0 0.0
          %1469 = vmatprep.subr.mxu0 0.0
          %1470 = vmatpush2.msra.mxu0 0.0
          %1471 = vmatprep.subr.mxu0 0.0
          %1472 = vmatpush2.msra.mxu0 0.0
          %1473 = vmatprep.subr.mxu0 0.0
          %1474 = vmatpush2.msra.mxu0 0.0
          %1475 = vmatprep.subr.mxu0 0.0
          %1476 = vmatpush2.msra.mxu0 0.0
          %1477 = vmatprep.subr.mxu0 0.0
          %1478 = vmatpush2.msra.mxu0 0.0
          %1479 = vmatprep.subr.mxu0 0.0
          %1480 = vmatpush2.msra.mxu0 0.0
          %1481 = vmatprep.subr.mxu0 0.0
          %1482 = vmatpush2.msra.mxu0 0.0
          %1483 = vmatprep.subr.mxu0 0.0
          %1484 = vmatpush2.msra.mxu0 0.0
          %1485 = vmatprep.mubr.f32.mxu0 0.0
          %1486 = vmatmul.mubr.f32.gmra.mxu0 %v1380
          %v1487 = vpop.f32.mrf.mxu0
          %v1488 = vadd.f32 0.0, %v1487
          %v1489 = vpop.f32.mrf.mxu0
          %1490 = vmatprep.mubr.f32.mxu0 0.0
          %1491 = vmatmul.mubr.f32.gmra.mxu0 %v1381
          %v1492 = vpop.f32.mrf.mxu0
          %v1493 = vadd.f32 0.0, %v1492
          %v1494 = vpop.f32.mrf.mxu0
          %1495 = vmatprep.mubr.f32.mxu0 0.0
          %1496 = vmatmul.mubr.f32.gmra.mxu0 %v1382
          %v1497 = vpop.f32.mrf.mxu0
          %v1498 = vadd.f32 0.0, %v1497
          %v1499 = vpop.f32.mrf.mxu0
          %1500 = vmatprep.mubr.f32.mxu0 0.0
          %1501 = vmatmul.mubr.f32.gmra.mxu0 %v1383
          %v1502 = vpop.f32.mrf.mxu0
          %v1503 = vadd.f32 0.0, %v1502
          %v1504 = vpop.f32.mrf.mxu0
          %1505 = vmatprep.mubr.f32.mxu0 0.0
          %1506 = vmatmul.mubr.f32.gmra.mxu0 %v1384
          %v1507 = vpop.f32.mrf.mxu0
          %v1508 = vadd.f32 0.0, %v1507
          %v1509 = vpop.f32.mrf.mxu0
          %1510 = vmatprep.mubr.f32.mxu0 0.0
          %1511 = vmatmul.mubr.f32.gmra.mxu0 %v1385
          %v1512 = vpop.f32.mrf.mxu0
          %v1513 = vadd.f32 0.0, %v1512
          %v1514 = vpop.f32.mrf.mxu0
          %1515 = vmatprep.mubr.f32.mxu0 0.0
          %1516 = vmatmul.mubr.f32.gmra.mxu0 %v1386
          %v1517 = vpop.f32.mrf.mxu0
          %v1518 = vadd.f32 0.0, %v1517
          %v1519 = vpop.f32.mrf.mxu0
          %1520 = vmatprep.mubr.f32.mxu0 0.0
          %1521 = vmatmul.mubr.f32.gmra.mxu0 %v1387
          %v1522 = vpop.f32.mrf.mxu0
          %v1523 = vadd.f32 0.0, %v1522
          %v1524 = vpop.f32.mrf.mxu0
          %1525 = vdwg.mxu0
          %v1526 = vadd.f32 %v1372, %v1488
          %v1527 = vadd.f32 %v1373, %v1493
          %v1528 = vadd.f32 %v1374, %v1498
          %v1529 = vadd.f32 %v1375, %v1503
          %v1530 = vadd.f32 %v1376, %v1508
          %v1531 = vadd.f32 %v1377, %v1513
          %v1532 = vadd.f32 %v1378, %v1518
          %v1533 = vadd.f32 %v1379, %v1523
          %1534 = vst [vmem:[#allocation4] sm:$0xff] %v1526
          %1535 = vst [vmem:[#allocation4 + $0x8] sm:$0xff] %v1527
          %1536 = vst [vmem:[#allocation4 + $0x10] sm:$0xff] %v1528
          %1537 = vst [vmem:[#allocation4 + $0x18] sm:$0xff] %v1529
          %1538 = vst [vmem:[#allocation4 + $0x20] sm:$0xff] %v1530
          %1539 = vst [vmem:[#allocation4 + $0x28] sm:$0xff] %v1531
          %1540 = vst [vmem:[#allocation4 + $0x30] sm:$0xff] %v1532
          %1541 = vst [vmem:[#allocation4 + $0x38] sm:$0xff] %v1533
        $region64: #{rgcn_forward.5} parent=43 // pred_fallthru
          _
        // Predicated region
        $region65: #{rgcn_forward.5} parent=43 // pred_check
          _
        $region66: #{rgcn_forward.5} parent=43 // pred_check_branch
          %1543 = sbr.rel (%p488) target = $region68
        $region67: #{rgcn_forward.5} parent=43 // pred_region
          %v1544 = vld [vmem:[#allocation4] sm:$0xff]
          %v1545 = vld [vmem:[#allocation4 + $0x8] sm:$0xff]
          %v1546 = vld [vmem:[#allocation4 + $0x10] sm:$0xff]
          %v1547 = vld [vmem:[#allocation4 + $0x18] sm:$0xff]
          %v1548 = vld [vmem:[#allocation4 + $0x20] sm:$0xff]
          %v1549 = vld [vmem:[#allocation4 + $0x28] sm:$0xff]
          %v1550 = vld [vmem:[#allocation4 + $0x30] sm:$0xff]
          %v1551 = vld [vmem:[#allocation4 + $0x38] sm:$0xff]
          %v1552 = vld [vmem:[%s7] sm:$0xf]
          %v1553 = vlaneseq
          %v1554 = vshrl.u32 %v1553, 7
          %v1555 = vsub.s32 3, %v1554
          %v1556 = vrot.slane %v1552, %v1555
          %v1557 = vmul.f32 %v1544, %v1556
          %v1558 = vmul.f32 %v1545, %v1556
          %v1559 = vmul.f32 %v1546, %v1556
          %v1560 = vmul.f32 %v1547, %v1556
          %v1561 = vmul.f32 %v1548, %v1556
          %v1562 = vmul.f32 %v1549, %v1556
          %v1563 = vmul.f32 %v1550, %v1556
          %v1564 = vmul.f32 %v1551, %v1556
          %1565 = vadd.xlane.f32.xlu0 %v1557
          %v1566 = vpop.xlane.xlu0 %1565
          %1567 = vadd.xlane.f32.xlu0 %v1558
          %v1568 = vpop.xlane.xlu0 %1567
          %1569 = vadd.xlane.f32.xlu0 %v1559
          %v1570 = vpop.xlane.xlu0 %1569
          %1571 = vadd.xlane.f32.xlu0 %v1560
          %v1572 = vpop.xlane.xlu0 %1571
          %1573 = vadd.xlane.f32.xlu0 %v1561
          %v1574 = vpop.xlane.xlu0 %1573
          %1575 = vadd.xlane.f32.xlu0 %v1562
          %v1576 = vpop.xlane.xlu0 %1575
          %1577 = vadd.xlane.f32.xlu0 %v1563
          %v1578 = vpop.xlane.xlu0 %1577
          %1579 = vadd.xlane.f32.xlu0 %v1564
          %v1580 = vpop.xlane.xlu0 %1579
          %v1581 = vmul.f32 %v1566, 0.03125
          %v1582 = vmul.f32 %v1568, 0.03125
          %v1583 = vmul.f32 %v1570, 0.03125
          %v1584 = vmul.f32 %v1572, 0.03125
          %v1585 = vmul.f32 %v1574, 0.03125
          %v1586 = vmul.f32 %v1576, 0.03125
          %v1587 = vmul.f32 %v1578, 0.03125
          %v1588 = vmul.f32 %v1580, 0.03125
          %v1589 = vsub.f32 %v1544, %v1581
          %v1590 = vsub.f32 %v1545, %v1582
          %v1591 = vsub.f32 %v1546, %v1583
          %v1592 = vsub.f32 %v1547, %v1584
          %v1593 = vsub.f32 %v1548, %v1585
          %v1594 = vsub.f32 %v1549, %v1586
          %v1595 = vsub.f32 %v1550, %v1587
          %v1596 = vsub.f32 %v1551, %v1588
          %v1597 = vmul.f32 %v1589, %v1556
          %v1598 = vmul.f32 %v1590, %v1556
          %v1599 = vmul.f32 %v1591, %v1556
          %v1600 = vmul.f32 %v1592, %v1556
          %v1601 = vmul.f32 %v1593, %v1556
          %v1602 = vmul.f32 %v1594, %v1556
          %v1603 = vmul.f32 %v1595, %v1556
          %v1604 = vmul.f32 %v1596, %v1556
          %v1605 = vmul.f32 %v1597, %v1597
          %v1606 = vmul.f32 %v1598, %v1598
          %v1607 = vmul.f32 %v1599, %v1599
          %v1608 = vmul.f32 %v1600, %v1600
          %v1609 = vmul.f32 %v1601, %v1601
          %v1610 = vmul.f32 %v1602, %v1602
          %v1611 = vmul.f32 %v1603, %v1603
          %v1612 = vmul.f32 %v1604, %v1604
          %1613 = vadd.xlane.f32.xlu0 %v1605
          %v1614 = vpop.xlane.xlu0 %1613
          %1615 = vadd.xlane.f32.xlu0 %v1606
          %v1616 = vpop.xlane.xlu0 %1615
          %1617 = vadd.xlane.f32.xlu0 %v1607
          %v1618 = vpop.xlane.xlu0 %1617
          %1619 = vadd.xlane.f32.xlu0 %v1608
          %v1620 = vpop.xlane.xlu0 %1619
          %1621 = vadd.xlane.f32.xlu0 %v1609
          %v1622 = vpop.xlane.xlu0 %1621
          %1623 = vadd.xlane.f32.xlu0 %v1610
          %v1624 = vpop.xlane.xlu0 %1623
          %1625 = vadd.xlane.f32.xlu0 %v1611
          %v1626 = vpop.xlane.xlu0 %1625
          %1627 = vadd.xlane.f32.xlu0 %v1612
          %v1628 = vpop.xlane.xlu0 %1627
          %v1629 = vmul.f32 %v1614, 0.03125
          %v1630 = vmul.f32 %v1616, 0.03125
          %v1631 = vmul.f32 %v1618, 0.03125
          %v1632 = vmul.f32 %v1620, 0.03125
          %v1633 = vmul.f32 %v1622, 0.03125
          %v1634 = vmul.f32 %v1624, 0.03125
          %v1635 = vmul.f32 %v1626, 0.03125
          %v1636 = vmul.f32 %v1628, 0.03125
          %v1637 = vadd.f32 %v1629, 1e-05
          %v1638 = vadd.f32 %v1630, 1e-05
          %v1639 = vadd.f32 %v1631, 1e-05
          %v1640 = vadd.f32 %v1632, 1e-05
          %v1641 = vadd.f32 %v1633, 1e-05
          %v1642 = vadd.f32 %v1634, 1e-05
          %v1643 = vadd.f32 %v1635, 1e-05
          %v1644 = vadd.f32 %v1636, 1e-05
          %v1645 = vrsqrt.pop %v1637
          %v1646 = vrsqrt.pop %v1638
          %v1647 = vrsqrt.pop %v1639
          %v1648 = vrsqrt.pop %v1640
          %v1649 = vrsqrt.pop %v1641
          %v1650 = vrsqrt.pop %v1642
          %v1651 = vrsqrt.pop %v1643
          %v1652 = vrsqrt.pop %v1644
          %v1653 = vmul.f32 %v1597, %v1645
          %v1654 = vmul.f32 %v1598, %v1646
          %v1655 = vmul.f32 %v1599, %v1647
          %v1656 = vmul.f32 %v1600, %v1648
          %v1657 = vmul.f32 %v1601, %v1649
          %v1658 = vmul.f32 %v1602, %v1650
          %v1659 = vmul.f32 %v1603, %v1651
          %v1660 = vmul.f32 %v1604, %v1652
          %v1661 = vlaneseq
          %v1662 = vshrl.u32 %v1661, 7
          %v1663 = vsub.s32 0, %v1662
          %v1664 = vrot.slane %v1552, %v1663
          %v1665 = vmul.f32 %v1653, %v1664
          %v1666 = vmul.f32 %v1654, %v1664
          %v1667 = vmul.f32 %v1655, %v1664
          %v1668 = vmul.f32 %v1656, %v1664
          %v1669 = vmul.f32 %v1657, %v1664
          %v1670 = vmul.f32 %v1658, %v1664
          %v1671 = vmul.f32 %v1659, %v1664
          %v1672 = vmul.f32 %v1660, %v1664
          %v1673 = vlaneseq
          %v1674 = vshrl.u32 %v1673, 7
          %v1675 = vsub.s32 1, %v1674
          %v1676 = vrot.slane %v1552, %v1675
          %v1677 = vadd.f32 %v1665, %v1676
          %v1678 = vadd.f32 %v1666, %v1676
          %v1679 = vadd.f32 %v1667, %v1676
          %v1680 = vadd.f32 %v1668, %v1676
          %v1681 = vadd.f32 %v1669, %v1676
          %v1682 = vadd.f32 %v1670, %v1676
          %v1683 = vadd.f32 %v1671, %v1676
          %v1684 = vadd.f32 %v1672, %v1676
          %v1685 = vlaneseq
          %v1686 = vshrl.u32 %v1685, 7
          %v1687 = vsub.s32 2, %v1686
          %v1688 = vrot.slane %v1552, %v1687
          %v1689 = vadd.f32 %v1677, %v1688
          %v1690 = vadd.f32 %v1678, %v1688
          %v1691 = vadd.f32 %v1679, %v1688
          %v1692 = vadd.f32 %v1680, %v1688
          %v1693 = vadd.f32 %v1681, %v1688
          %v1694 = vadd.f32 %v1682, %v1688
          %v1695 = vadd.f32 %v1683, %v1688
          %v1696 = vadd.f32 %v1684, %v1688
          %v1697 = vld [vmem:[#allocation3] sm:$0xff]
          %v1698 = vld [vmem:[#allocation3 + $0x8] sm:$0xff]
          %v1699 = vld [vmem:[#allocation3 + $0x10] sm:$0xff]
          %v1700 = vld [vmem:[#allocation3 + $0x18] sm:$0xff]
          %v1701 = vld [vmem:[#allocation3 + $0x20] sm:$0xff]
          %v1702 = vld [vmem:[#allocation3 + $0x28] sm:$0xff]
          %v1703 = vld [vmem:[#allocation3 + $0x30] sm:$0xff]
          %v1704 = vld [vmem:[#allocation3 + $0x38] sm:$0xff]
          %v1705 = vadd.f32 %v1689, %v1697
          %v1706 = vadd.f32 %v1690, %v1698
          %v1707 = vadd.f32 %v1691, %v1699
          %v1708 = vadd.f32 %v1692, %v1700
          %v1709 = vadd.f32 %v1693, %v1701
          %v1710 = vadd.f32 %v1694, %v1702
          %v1711 = vadd.f32 %v1695, %v1703
          %v1712 = vadd.f32 %v1696, %v1704
          %v1713 = vmax.f32 %v1705, 0.0
          %v1714 = vmax.f32 %v1706, 0.0
          %v1715 = vmax.f32 %v1707, 0.0
          %v1716 = vmax.f32 %v1708, 0.0
          %v1717 = vmax.f32 %v1709, 0.0
          %v1718 = vmax.f32 %v1710, 0.0
          %v1719 = vmax.f32 %v1711, 0.0
          %v1720 = vmax.f32 %v1712, 0.0
          %v1721 = vpack.c.bf16 %v1714, %v1713
          %v1722 = vpack.c.bf16 %v1716, %v1715
          %v1723 = vpack.c.bf16 %v1718, %v1717
          %v1724 = vpack.c.bf16 %v1720, %v1719
          %v1729 = vunpack.c.l.b16 %v1721
          %v1730 = vunpack.c.h.b16 %v1721
          %v1731 = vunpack.c.l.b16 %v1722
          %v1732 = vunpack.c.h.b16 %v1722
          %v1733 = vunpack.c.l.b16 %v1723
          %v1734 = vunpack.c.h.b16 %v1723
          %v1735 = vunpack.c.l.b16 %v1724
          %v1736 = vunpack.c.h.b16 %v1724
          %v1737 = vpack.c.b16 %v1729, %v1729
          %v1738 = vpack.c.b16 %v1730, %v1730
          %v1739 = vpack.c.b16 %v1731, %v1731
          %v1740 = vpack.c.b16 %v1732, %v1732
          %v1741 = vpack.c.b16 %v1733, %v1733
          %v1742 = vpack.c.b16 %v1734, %v1734
          %v1743 = vpack.c.b16 %v1735, %v1735
          %v1744 = vpack.c.b16 %v1736, %v1736
          %1753 = vst [vmem:[%s483] sm:$0xf] %v1737
          %1754 = vst [vmem:[%s483 + $0x4] sm:$0xf] %v1738
          %1755 = vst [vmem:[%s483 + $0x8] sm:$0xf] %v1739
          %1756 = vst [vmem:[%s483 + $0xc] sm:$0xf] %v1740
          %1757 = vst [vmem:[%s483 + $0x10] sm:$0xf] %v1741
          %1758 = vst [vmem:[%s483 + $0x14] sm:$0xf] %v1742
          %1759 = vst [vmem:[%s483 + $0x18] sm:$0xf] %v1743
          %1760 = vst [vmem:[%s483 + $0x1c] sm:$0xf] %v1744
        $region68: #{rgcn_forward.5} parent=43 // pred_fallthru
          _
        %s1761 = smul.u32 8, %s35
        %p1762 = scmp.lt.s32.totalorder %s1761, 15
        %s1763 = scalar_select %p1762, %s1761, 15
        %s1764 = smul.addr %s1763, 4
        %s1765 = scalar_lea.vmem %s8, %s1764
        // Predicated region
        $region69: #{rgcn_forward.5} parent=43 // pred_check
          %p1766 = pneg %p249
        $region70: #{rgcn_forward.5} parent=43 // pred_check_branch
          %1768 = sbr.rel (%p1766) target = $region72
        $region71: #{rgcn_forward.5} parent=43 // pred_region
          %s1769 = smul.u32 8, %s35
        $region72: #{rgcn_forward.5} parent=43 // pred_fallthru
          _
      $region44: #{rgcn_forward.5} parent=5 // pred_fallthru
        _
      %p1770 = scmp.le.s32.totalorder 2, %s25
      // Predicated region
      $region73: #{rgcn_forward.5} parent=5 // pred_check
        %p1771 = pneg %p1770
      $region74: #{rgcn_forward.5} parent=5 // pred_check_branch
        %1773 = sbr.rel (%p1771) target = $region76
      $region75: #{rgcn_forward.5} parent=5 // pred_region
        %s1774 = ssub.s32 %s25, 2
        // Predicated region
        $region77: #{rgcn_forward.5} parent=75 // pred_check
          %p1775 = pneg %p255
        $region78: #{rgcn_forward.5} parent=75 // pred_check_branch
          %1777 = sbr.rel (%p1775) target = $region80
        $region79: #{rgcn_forward.5} parent=75 // pred_region
          %s1778 = smul.u32 8, %s38
          %p1779 = scmp.lt.s32.totalorder %s1778, 15
          %s1780 = scalar_select %p1779, %s1778, 15
          %s1781 = smul.addr %s1780, 4
          %s1782 = scalar_lea.vmem %s8, %s1781
        $region80: #{rgcn_forward.5} parent=75 // pred_fallthru
          _
      $region76: #{rgcn_forward.5} parent=5 // pred_fallthru
        _
    $region6: #{rgcn_forward.5} parent=1 // loop_footer
      %s29 = sadd.s32 1, %s25
    $region7: #{rgcn_forward.5} parent=1 // loop_footer_branch
      %24 = sbr.rel target = $region3
    $region8: #{rgcn_forward.5} parent=1 // loop_exit
      _
    %1783 = vsyncpa [#allocation9], 1
    %s1784 = scalar_lea.sflag [#allocation9], 1
    %1785 = vsyncpa %s1784, 1

// kernel: rgcn_forward.6
$region0: #{rgcn_forward.6}
  #allocation0 [shape = 'u32[]', space=smem, size = 0x4, offset = 0x4, fixed_abs, tag = 'smem constant byte address 0x4 - core index']
  #allocation1 [shape = 'u32[144,128]{1,0:T(1,128)}', space=vmem, size = 0x12000, scoped, tag = 'internal scratch']
  #allocation2 [shape = 'f32[192,128]{1,0:T(8,128)}', space=vmem, size = 0x18000, scoped, tag = 'scratch operand']
  #allocation3 [shape = 'f32[64,128]{1,0:T(8,128)}', space=vmem, size = 0x8000, scoped, tag = 'scratch operand']
  #allocation4 [shape = 'f32[64,128]{1,0:T(8,128)}', space=vmem, size = 0x8000, scoped, tag = 'scratch operand']
  #allocation5 [shape = 's32[1]{0}', space=sflag, size = 0x4, scoped, tag = 'scoped memory for rgcn_forward.6']
  #allocation6 [shape = 'u8[1024]{0}', space=smem, size = 0x400, scoped, tag = 'prefetched SMEM operand 0']
  #allocation7 [shape = 'u8[512]{0}', space=smem, size = 0x200, scoped, tag = 'prefetched SMEM operand 1']
  %s0 = inlined_call_operand.vmem [shape: s32[2,1], index: 0, kind: input, shape index: {}]
  %s1 = inlined_call_operand.vmem [shape: s32[2], index: 1, kind: input, shape index: {}]
  %s2 = inlined_call_operand.vmem [shape: bf16[384,128], index: 2, kind: input, shape index: {}]
  %s3 = inlined_call_operand.vmem [shape: bf16[128,128], index: 3, kind: input, shape index: {}, may-alias: {3,4}]
  %s4 = inlined_call_operand.vmem [shape: bf16[128,128], index: 4, kind: input, shape index: {}, may-alias: {3,4}]
  %s5 = inlined_call_operand.vmem [shape: bf16[3,128,128], index: 5, kind: input, shape index: {}]
  %s6 = inlined_call_operand.vmem [shape: bf16[128,128], index: 6, kind: input, shape index: {}]
  %s7 = inlined_call_operand.vmem [shape: f32[4,128], index: 7, kind: input, shape index: {}]
  %s8 = inlined_call_operand.vmem [shape: bf16[128,128], index: 8, kind: output, shape index: {}]
  %s9 = sld [smem:[#allocation0]]
  $region77: #{rgcn_forward.6} parent=0
    _
  %s11 = ssub.s32 1, %s9
  %s12 = scalar_select 0, %s11, %s9
  %s13 = sshll.u32 %s0, 4
  %s14 = int_to_ptr.vmem [resolvable:$true] %s13
  %16 = dma.vmem_to_smem %s14, 32, [#allocation6], [#allocation5]
  %s17 = sshll.u32 %s1, 4
  %s18 = int_to_ptr.vmem [resolvable:$true] %s17
  %20 = dma.vmem_to_smem %s18, 16, [#allocation7], [#allocation5]
  %21 = dma.done [#allocation5], 48
  %22 = sfence
  loop: start=0, step=1, limit=4
  $region2: #{rgcn_forward.6} parent=0 // loop_pre_header
    _
  $region3: #{rgcn_forward.6} parent=0 // loop_header
    %s24 = sphi 0, %s28
    %p25 = scmp.ge.s32.totalorder %s24, 4
    %s31 = sphi 0, %s50
    %s32 = sphi 0, %s46
    %s33 = sphi 0, %s42
    %s34 = sphi 0, %s31
    %s35 = sphi 0, %s32
    %s36 = sphi 0, %s33
    %s37 = sphi 0, %s34
    %s38 = sphi 0, %s35
    %s39 = sphi 0, %s36
    %s73 = sphi 0, %s75
    %s76 = sphi 0, %s73
    %s77 = sphi 0, %s76
    %s93 = sphi 0, %s77
    %s115 = sphi 0, %s117
    %s118 = sphi 0, %s115
    %s119 = sphi 0, %s118
    %s135 = sphi 0, %s119
    %s141 = sphi 0, %s143
    %s144 = sphi 0, %s141
    %s145 = sphi 0, %s144
    %s161 = sphi 0, %s145
    %s167 = sphi 0, %s169
    %s170 = sphi 0, %s167
    %s171 = sphi 0, %s170
    %s187 = sphi 0, %s171
    %s191 = sphi 0, %s191
    %s193 = sphi 0, %s191
    %s194 = sphi 0, %s193
    %s208 = sphi 0, %s194
    %s212 = sphi 0, %s212
    %s214 = sphi 0, %s212
    %s215 = sphi 0, %s214
    %s229 = sphi 0, %s215
    %s235 = sphi 0, %s237
    %s238 = sphi 0, %s235
    %s239 = sphi 0, %s238
    %s255 = sphi 0, %s239
  $region4: #{rgcn_forward.6} parent=0 // loop_header_branch
    %27 = sbr.rel (%p25) target = $region8
  $region5: #{rgcn_forward.6} parent=0 // loop_body
    %s29 = ssub.s32 %s24, 1
    %s30 = ssub.s32 %s24, 2
    %s40 = sadd.s32 1, %s33
    %p41 = scmp.ge.s32.totalorder %s40, 1
    %s42 = scalar_select %p41, 0, %s40
    %s43 = sadd.s32 1, %s32
    %s44 = scalar_select %p41, %s43, %s32
    %p45 = scmp.ge.s32.totalorder %s44, 1
    %s46 = scalar_select %p45, 0, %s44
    %s47 = sadd.s32 1, %s31
    %s48 = scalar_select %p45, %s47, %s31
    %p49 = scmp.ge.s32.totalorder %s48, 2
    %s50 = scalar_select %p49, 0, %s48
    %s51 = sadd.s32 %s31, %s32
    %s52 = sshra.s32 %s33, 7
    %s53 = sand.u32 %s33, 127
    %s54 = sadd.s32 %s52, %s31
    %s55 = smul.u32 %s54, 128
    %s56 = sshra.s32 %s33, 7
    %s57 = sand.u32 %s33, 127
    %s58 = sadd.s32 %s55, %s57
    %s59 = sld [smem:[#allocation6 + %s58]]
    %s60 = sadd.s32 %s50, %s46
    %s61 = sshra.s32 %s42, 7
    %s62 = sand.u32 %s42, 127
    %s63 = sadd.s32 %s61, %s50
    %s64 = smul.u32 %s63, 128
    %s65 = sshra.s32 %s42, 7
    %s66 = sand.u32 %s42, 127
    %s67 = sadd.s32 %s64, %s66
    %s68 = sld [smem:[#allocation6 + %s67]]
    %s69 = ssub.s32 %s51, %s60
    %s70 = ssub.s32 %s59, %s68
    %s71 = sor.u32 %s69, %s70
    %p72 = scmp.eq.s32.totalorder %s71, 0
    %s74 = sadd.s32 %s73, 1
    %s75 = scalar_select %p72, %s73, %s74
    %p78 = pneg %p72
    %p79 = scmp.eq.s32.totalorder %s24, 1
    %p80 = por %p78, %p79
    %p81 = scmp.ne.s32.totalorder %s73, %s76
    %p82 = scmp.eq.s32.totalorder %s24, 0
    %p83 = por %p81, %p82
    %p84 = scmp.ne.s32.totalorder %s73, %s76
    %p85 = scmp.eq.s32.totalorder %s29, 1
    %p86 = por %p84, %p85
    %p87 = scmp.ne.s32.totalorder %s76, %s77
    %p88 = scmp.eq.s32.totalorder %s29, 0
    %p89 = por %p87, %p88
    %p90 = scmp.ne.s32.totalorder %s76, %s77
    %p91 = scmp.eq.s32.totalorder %s30, 1
    %p92 = por %p90, %p91
    %p94 = scmp.ne.s32.totalorder %s77, %s93
    %p95 = scmp.eq.s32.totalorder %s30, 0
    %p96 = por %p94, %p95
    %s97 = sshra.s32 %s33, 7
    %s98 = sand.u32 %s33, 127
    %s99 = sadd.s32 %s97, %s31
    %s100 = smul.u32 %s99, 128
    %s101 = sshra.s32 %s33, 7
    %s102 = sand.u32 %s33, 127
    %s103 = sadd.s32 %s100, %s102
    %s104 = sld [smem:[#allocation6 + %s103]]
    %s105 = sshra.s32 %s42, 7
    %s106 = sand.u32 %s42, 127
    %s107 = sadd.s32 %s105, %s50
    %s108 = smul.u32 %s107, 128
    %s109 = sshra.s32 %s42, 7
    %s110 = sand.u32 %s42, 127
    %s111 = sadd.s32 %s108, %s110
    %s112 = sld [smem:[#allocation6 + %s111]]
    %s113 = ssub.s32 %s104, %s112
    %p114 = scmp.eq.s32.totalorder %s113, 0
    %s116 = sadd.s32 %s115, 1
    %s117 = scalar_select %p114, %s115, %s116
    %p120 = pneg %p114
    %p121 = scmp.eq.s32.totalorder %s24, 1
    %p122 = por %p120, %p121
    %p123 = scmp.ne.s32.totalorder %s115, %s118
    %p124 = scmp.eq.s32.totalorder %s24, 0
    %p125 = por %p123, %p124
    %p126 = scmp.ne.s32.totalorder %s115, %s118
    %p127 = scmp.eq.s32.totalorder %s29, 1
    %p128 = por %p126, %p127
    %p129 = scmp.ne.s32.totalorder %s118, %s119
    %p130 = scmp.eq.s32.totalorder %s29, 0
    %p131 = por %p129, %p130
    %p132 = scmp.ne.s32.totalorder %s118, %s119
    %p133 = scmp.eq.s32.totalorder %s30, 1
    %p134 = por %p132, %p133
    %p136 = scmp.ne.s32.totalorder %s119, %s135
    %p137 = scmp.eq.s32.totalorder %s30, 0
    %p138 = por %p136, %p137
    %s139 = ssub.s32 %s31, %s50
    %p140 = scmp.eq.s32.totalorder %s139, 0
    %s142 = sadd.s32 %s141, 1
    %s143 = scalar_select %p140, %s141, %s142
    %p146 = pneg %p140
    %p147 = scmp.eq.s32.totalorder %s24, 1
    %p148 = por %p146, %p147
    %p149 = scmp.ne.s32.totalorder %s141, %s144
    %p150 = scmp.eq.s32.totalorder %s24, 0
    %p151 = por %p149, %p150
    %p152 = scmp.ne.s32.totalorder %s141, %s144
    %p153 = scmp.eq.s32.totalorder %s29, 1
    %p154 = por %p152, %p153
    %p155 = scmp.ne.s32.totalorder %s144, %s145
    %p156 = scmp.eq.s32.totalorder %s29, 0
    %p157 = por %p155, %p156
    %p158 = scmp.ne.s32.totalorder %s144, %s145
    %p159 = scmp.eq.s32.totalorder %s30, 1
    %p160 = por %p158, %p159
    %p162 = scmp.ne.s32.totalorder %s145, %s161
    %p163 = scmp.eq.s32.totalorder %s30, 0
    %p164 = por %p162, %p163
    %s165 = ssub.s32 %s32, %s46
    %p166 = scmp.eq.s32.totalorder %s165, 0
    %s168 = sadd.s32 %s167, 1
    %s169 = scalar_select %p166, %s167, %s168
    %p172 = pneg %p166
    %p173 = scmp.eq.s32.totalorder %s24, 1
    %p174 = por %p172, %p173
    %p175 = scmp.ne.s32.totalorder %s167, %s170
    %p176 = scmp.eq.s32.totalorder %s24, 0
    %p177 = por %p175, %p176
    %p178 = scmp.ne.s32.totalorder %s167, %s170
    %p179 = scmp.eq.s32.totalorder %s29, 1
    %p180 = por %p178, %p179
    %p181 = scmp.ne.s32.totalorder %s170, %s171
    %p182 = scmp.eq.s32.totalorder %s29, 0
    %p183 = por %p181, %p182
    %p184 = scmp.ne.s32.totalorder %s170, %s171
    %p185 = scmp.eq.s32.totalorder %s30, 1
    %p186 = por %p184, %p185
    %p188 = scmp.ne.s32.totalorder %s171, %s187
    %p189 = scmp.eq.s32.totalorder %s30, 0
    %p190 = por %p188, %p189
    %s192 = sadd.s32 %s191, 1
    %p195 = scmp.eq.s32.totalorder %s24, 1
    %p196 = scmp.ne.s32.totalorder %s191, %s193
    %p197 = scmp.eq.s32.totalorder %s24, 0
    %p198 = por %p196, %p197
    %p199 = scmp.ne.s32.totalorder %s191, %s193
    %p200 = scmp.eq.s32.totalorder %s29, 1
    %p201 = por %p199, %p200
    %p202 = scmp.ne.s32.totalorder %s193, %s194
    %p203 = scmp.eq.s32.totalorder %s29, 0
    %p204 = por %p202, %p203
    %p205 = scmp.ne.s32.totalorder %s193, %s194
    %p206 = scmp.eq.s32.totalorder %s30, 1
    %p207 = por %p205, %p206
    %p209 = scmp.ne.s32.totalorder %s194, %s208
    %p210 = scmp.eq.s32.totalorder %s30, 0
    %p211 = por %p209, %p210
    %s213 = sadd.s32 %s212, 1
    %p216 = scmp.eq.s32.totalorder %s24, 1
    %p217 = scmp.ne.s32.totalorder %s212, %s214
    %p218 = scmp.eq.s32.totalorder %s24, 0
    %p219 = por %p217, %p218
    %p220 = scmp.ne.s32.totalorder %s212, %s214
    %p221 = scmp.eq.s32.totalorder %s29, 1
    %p222 = por %p220, %p221
    %p223 = scmp.ne.s32.totalorder %s214, %s215
    %p224 = scmp.eq.s32.totalorder %s29, 0
    %p225 = por %p223, %p224
    %p226 = scmp.ne.s32.totalorder %s214, %s215
    %p227 = scmp.eq.s32.totalorder %s30, 1
    %p228 = por %p226, %p227
    %p230 = scmp.ne.s32.totalorder %s215, %s229
    %p231 = scmp.eq.s32.totalorder %s30, 0
    %p232 = por %p230, %p231
    %s233 = ssub.s32 %s31, %s50
    %p234 = scmp.eq.s32.totalorder %s233, 0
    %s236 = sadd.s32 %s235, 1
    %s237 = scalar_select %p234, %s235, %s236
    %p240 = pneg %p234
    %p241 = scmp.eq.s32.totalorder %s24, 1
    %p242 = por %p240, %p241
    %p243 = scmp.ne.s32.totalorder %s235, %s238
    %p244 = scmp.eq.s32.totalorder %s24, 0
    %p245 = por %p243, %p244
    %p246 = scmp.ne.s32.totalorder %s235, %s238
    %p247 = scmp.eq.s32.totalorder %s29, 1
    %p248 = por %p246, %p247
    %p249 = scmp.ne.s32.totalorder %s238, %s239
    %p250 = scmp.eq.s32.totalorder %s29, 0
    %p251 = por %p249, %p250
    %p252 = scmp.ne.s32.totalorder %s238, %s239
    %p253 = scmp.eq.s32.totalorder %s30, 1
    %p254 = por %p252, %p253
    %p256 = scmp.ne.s32.totalorder %s239, %s255
    %p257 = scmp.eq.s32.totalorder %s30, 0
    %p258 = por %p256, %p257
    %p259 = scmp.le.s32.totalorder 1, %s24
    %p260 = scmp.lt.s32.totalorder %s24, 3
    %p261 = pnand %p259, %p260
    %p262 = pneg %p261
    // Predicated region
    $region9: #{rgcn_forward.6} parent=5 // pred_check
      _
    $region10: #{rgcn_forward.6} parent=5 // pred_check_branch
      %264 = sbr.rel (%p261) target = $region12
    $region11: #{rgcn_forward.6} parent=5 // pred_region
      %s265 = ssub.s32 %s24, 1
      // Predicated region
      $region13: #{rgcn_forward.6} parent=11 // pred_check
        %p266 = pneg %p183
      $region14: #{rgcn_forward.6} parent=11 // pred_check_branch
        %268 = sbr.rel (%p266) target = $region16
      $region15: #{rgcn_forward.6} parent=11 // pred_region
        %s269 = smul.u32 3, %s35
        %p270 = scmp.lt.s32.totalorder %s269, 2
        %s271 = scalar_select %p270, %s269, 2
        %s272 = smul.addr %s271, 16
        %s273 = smul.addr %s272, 4
        %s274 = scalar_lea.vmem %s5, %s273
        %s275 = smul.u32 3, %s35
      $region16: #{rgcn_forward.6} parent=11 // pred_fallthru
        _
      // Predicated region
      $region17: #{rgcn_forward.6} parent=11 // pred_check
        %p276 = pneg %p204
      $region18: #{rgcn_forward.6} parent=11 // pred_check_branch
        %278 = sbr.rel (%p276) target = $region20
      $region19: #{rgcn_forward.6} parent=11 // pred_region
        _
      $region20: #{rgcn_forward.6} parent=11 // pred_fallthru
        _
      // Predicated region
      $region21: #{rgcn_forward.6} parent=11 // pred_check
        %p279 = pneg %p225
      $region22: #{rgcn_forward.6} parent=11 // pred_check_branch
        %281 = sbr.rel (%p279) target = $region24
      $region23: #{rgcn_forward.6} parent=11 // pred_region
        _
      $region24: #{rgcn_forward.6} parent=11 // pred_fallthru
        _
    $region12: #{rgcn_forward.6} parent=5 // pred_fallthru
      _
    %p282 = scmp.lt.s32.totalorder %s24, 2
    // Predicated region
    $region25: #{rgcn_forward.6} parent=5 // pred_check
      %p283 = pneg %p282
    $region26: #{rgcn_forward.6} parent=5 // pred_check_branch
      %285 = sbr.rel (%p283) target = $region28
    $region27: #{rgcn_forward.6} parent=5 // pred_region
      // Predicated region
      $region29: #{rgcn_forward.6} parent=27 // pred_check
        %p286 = pneg %p83
      $region30: #{rgcn_forward.6} parent=27 // pred_check_branch
        %288 = sbr.rel (%p286) target = $region32
      $region31: #{rgcn_forward.6} parent=27 // pred_region
        %s289 = sadd.s32 %s31, %s32
        %s290 = sshra.s32 %s33, 7
        %s291 = sand.u32 %s33, 127
        %s292 = sadd.s32 %s290, %s31
        %s293 = smul.u32 %s292, 128
        %s294 = sshra.s32 %s33, 7
        %s295 = sand.u32 %s33, 127
        %s296 = sadd.s32 %s293, %s295
        %s297 = sld [smem:[#allocation6 + %s296]]
        %s298 = smul.u32 24, %s289
        %p299 = scmp.lt.s32.totalorder %s298, 47
        %s300 = scalar_select %p299, %s298, 47
        %p301 = scmp.lt.s32.totalorder %s297, 0
        %s302 = scalar_select %p301, %s297, 0
        %s303 = sadd.s32 %s302, %s300
        %s304 = smul.addr %s303, 4
        %s305 = scalar_lea.vmem %s2, %s304
        %s306 = sadd.s32 %s31, %s32
        %s307 = sshra.s32 %s33, 7
        %s308 = sand.u32 %s33, 127
        %s309 = sadd.s32 %s307, %s31
        %s310 = smul.u32 %s309, 128
        %s311 = sshra.s32 %s33, 7
        %s312 = sand.u32 %s33, 127
        %s313 = sadd.s32 %s310, %s312
        %s314 = sld [smem:[#allocation6 + %s313]]
        %s315 = smul.u32 24, %s306
      $region32: #{rgcn_forward.6} parent=27 // pred_fallthru
        _
      // Predicated region
      $region33: #{rgcn_forward.6} parent=27 // pred_check
        %p316 = pneg %p125
      $region34: #{rgcn_forward.6} parent=27 // pred_check_branch
        %318 = sbr.rel (%p316) target = $region36
      $region35: #{rgcn_forward.6} parent=27 // pred_region
        %s319 = sshra.s32 %s33, 7
        %s320 = sand.u32 %s33, 127
        %s321 = sadd.s32 %s319, %s31
        %s322 = smul.u32 %s321, 128
        %s323 = sshra.s32 %s33, 7
        %s324 = sand.u32 %s33, 127
        %s325 = sadd.s32 %s322, %s324
        %s326 = sld [smem:[#allocation6 + %s325]]
        %s327 = smul.u32 16, %s326
        %p328 = scmp.lt.s32.totalorder %s327, 15
        %s329 = scalar_select %p328, %s327, 15
        %s330 = smul.addr %s329, 4
        %s331 = scalar_lea.vmem %s3, %s330
        %s332 = sshra.s32 %s33, 7
        %s333 = sand.u32 %s33, 127
        %s334 = sadd.s32 %s332, %s31
        %s335 = smul.u32 %s334, 128
        %s336 = sshra.s32 %s33, 7
        %s337 = sand.u32 %s33, 127
        %s338 = sadd.s32 %s335, %s337
        %s339 = sld [smem:[#allocation6 + %s338]]
        %s340 = smul.u32 16, %s339
      $region36: #{rgcn_forward.6} parent=27 // pred_fallthru
        _
      // Predicated region
      $region37: #{rgcn_forward.6} parent=27 // pred_check
        %p341 = pneg %p151
      $region38: #{rgcn_forward.6} parent=27 // pred_check_branch
        %343 = sbr.rel (%p341) target = $region40
      $region39: #{rgcn_forward.6} parent=27 // pred_region
        %s344 = smul.u32 8, %s31
        %p345 = scmp.lt.s32.totalorder %s344, 15
        %s346 = scalar_select %p345, %s344, 15
        %s347 = smul.addr %s346, 4
        %s348 = scalar_lea.vmem %s4, %s347
        %s349 = smul.u32 8, %s31
      $region40: #{rgcn_forward.6} parent=27 // pred_fallthru
        _
    $region28: #{rgcn_forward.6} parent=5 // pred_fallthru
      _
    %p350 = scmp.le.s32.totalorder 1, %s24
    %p351 = scmp.lt.s32.totalorder %s24, 3
    %p352 = pnand %p350, %p351
    %p353 = pneg %p352
    // Predicated region
    $region41: #{rgcn_forward.6} parent=5 // pred_check
      _
    $region42: #{rgcn_forward.6} parent=5 // pred_check_branch
      %355 = sbr.rel (%p352) target = $region44
    $region43: #{rgcn_forward.6} parent=5 // pred_region
      %s356 = ssub.s32 %s24, 1
      %s357 = sadd.s32 %s34, %s35
      %s358 = sshra.s32 %s36, 7
      %s359 = sand.u32 %s36, 127
      %s360 = sadd.s32 %s358, %s34
      %s361 = smul.u32 %s360, 128
      %s362 = sshra.s32 %s36, 7
      %s363 = sand.u32 %s36, 127
      %s364 = sadd.s32 %s361, %s363
      %s365 = sld [smem:[#allocation6 + %s364]]
      %s366 = smul.u32 24, %s357
      %p367 = scmp.lt.s32.totalorder %s366, 47
      %s368 = scalar_select %p367, %s366, 47
      %p369 = scmp.lt.s32.totalorder %s365, 0
      %s370 = scalar_select %p369, %s365, 0
      %s371 = sadd.s32 %s370, %s368
      %s372 = smul.addr %s371, 4
      %s373 = scalar_lea.vmem %s2, %s372
      %p374 = pneg %p89
      %p375 = pneg %p86
      %s376 = sshra.s32 %s36, 7
      %s377 = sand.u32 %s36, 127
      %s378 = sadd.s32 %s376, %s34
      %s379 = smul.u32 %s378, 128
      %s380 = sshra.s32 %s36, 7
      %s381 = sand.u32 %s36, 127
      %s382 = sadd.s32 %s379, %s381
      %s383 = sld [smem:[#allocation6 + %s382]]
      %s384 = smul.u32 16, %s383
      %p385 = scmp.lt.s32.totalorder %s384, 15
      %s386 = scalar_select %p385, %s384, 15
      %s387 = smul.addr %s386, 4
      %s388 = scalar_lea.vmem %s3, %s387
      %p389 = pneg %p131
      %p390 = pneg %p128
      %s391 = smul.u32 8, %s34
      %p392 = scmp.lt.s32.totalorder %s391, 15
      %s393 = scalar_select %p392, %s391, 15
      %s394 = smul.addr %s393, 4
      %s395 = scalar_lea.vmem %s4, %s394
      %p396 = pneg %p157
      %p397 = pneg %p154
      %s398 = smul.u32 3, %s35
      %p399 = scmp.lt.s32.totalorder %s398, 2
      %s400 = scalar_select %p399, %s398, 2
      %s401 = smul.addr %s400, 16
      %s402 = smul.addr %s401, 4
      %s403 = scalar_lea.vmem %s5, %s402
      %p404 = pneg %p183
      %p405 = pneg %p180
      %p406 = pneg %p204
      %p407 = pneg %p201
      %p408 = pneg %p225
      %p409 = pneg %p222
      %p410 = pneg %p251
      %p411 = pneg %p248
      %s412 = smul.u32 8, %s34
      %p413 = scmp.lt.s32.totalorder %s412, 15
      %s414 = scalar_select %p413, %s412, 15
      %s415 = smul.addr %s414, 4
      %s416 = scalar_lea.vmem %s8, %s415
      %s417 = sadd.s32 %s34, %s35
      %s418 = sshra.s32 %s36, 7
      %s419 = sand.u32 %s36, 127
      %s420 = sadd.s32 %s418, %s34
      %s421 = smul.u32 %s420, 128
      %s422 = sshra.s32 %s36, 7
      %s423 = sand.u32 %s36, 127
      %s424 = sadd.s32 %s421, %s423
      %s425 = sld [smem:[#allocation6 + %s424]]
      %s426 = smul.u32 24, %s417
      %p427 = scmp.lt.s32.totalorder %s426, 47
      %s428 = scalar_select %p427, %s426, 47
      %p429 = scmp.lt.s32.totalorder %s425, 0
      %s430 = scalar_select %p429, %s425, 0
      %s431 = sadd.s32 %s430, %s428
      %s432 = smul.addr %s431, 4
      %s433 = scalar_lea.vmem %s2, %s432
      %s434 = sadd.s32 %s34, %s35
      %s435 = sshra.s32 %s36, 7
      %s436 = sand.u32 %s36, 127
      %s437 = sadd.s32 %s435, %s34
      %s438 = smul.u32 %s437, 128
      %s439 = sshra.s32 %s36, 7
      %s440 = sand.u32 %s36, 127
      %s441 = sadd.s32 %s438, %s440
      %s442 = sld [smem:[#allocation6 + %s441]]
      %s443 = smul.u32 24, %s434
      %s444 = sshra.s32 %s36, 7
      %s445 = sand.u32 %s36, 127
      %s446 = sadd.s32 %s444, %s34
      %s447 = smul.u32 %s446, 128
      %s448 = sshra.s32 %s36, 7
      %s449 = sand.u32 %s36, 127
      %s450 = sadd.s32 %s447, %s449
      %s451 = sld [smem:[#allocation6 + %s450]]
      %s452 = smul.u32 16, %s451
      %p453 = scmp.lt.s32.totalorder %s452, 15
      %s454 = scalar_select %p453, %s452, 15
      %s455 = smul.addr %s454, 4
      %s456 = scalar_lea.vmem %s3, %s455
      %s457 = sshra.s32 %s36, 7
      %s458 = sand.u32 %s36, 127
      %s459 = sadd.s32 %s457, %s34
      %s460 = smul.u32 %s459, 128
      %s461 = sshra.s32 %s36, 7
      %s462 = sand.u32 %s36, 127
      %s463 = sadd.s32 %s460, %s462
      %s464 = sld [smem:[#allocation6 + %s463]]
      %s465 = smul.u32 16, %s464
      %s466 = smul.u32 8, %s34
      %p467 = scmp.lt.s32.totalorder %s466, 15
      %s468 = scalar_select %p467, %s466, 15
      %s469 = smul.addr %s468, 4
      %s470 = scalar_lea.vmem %s4, %s469
      %s471 = smul.u32 8, %s34
      %s472 = smul.u32 3, %s35
      %p473 = scmp.lt.s32.totalorder %s472, 2
      %s474 = scalar_select %p473, %s472, 2
      %s475 = smul.addr %s474, 16
      %s476 = smul.addr %s475, 4
      %s477 = scalar_lea.vmem %s5, %s476
      %s478 = smul.u32 3, %s35
      %s479 = smul.u32 8, %s34
      %p480 = scmp.lt.s32.totalorder %s479, 15
      %s481 = scalar_select %p480, %s479, 15
      %s482 = smul.addr %s481, 4
      %s483 = scalar_lea.vmem %s8, %s482
      %s484 = smul.u32 8, %s34
      %p486 = scmp.eq.s32.totalorder %s35, 0
      %p487 = scmp.eq.s32.totalorder %s36, 0
      %p488 = pnand %p486, %p487
      %p489 = pneg %p488
      // Predicated region
      $region45: #{rgcn_forward.6} parent=43 // pred_check
        _
      $region46: #{rgcn_forward.6} parent=43 // pred_check_branch
        %491 = sbr.rel (%p488) target = $region48
      $region47: #{rgcn_forward.6} parent=43 // pred_region
        %492 = vst [vmem:[#allocation4] sm:$0xff] 0.0
        %493 = vst [vmem:[#allocation4 + $0x8] sm:$0xff] 0.0
        %494 = vst [vmem:[#allocation4 + $0x10] sm:$0xff] 0.0
        %495 = vst [vmem:[#allocation4 + $0x18] sm:$0xff] 0.0
        %496 = vst [vmem:[#allocation4 + $0x20] sm:$0xff] 0.0
        %497 = vst [vmem:[#allocation4 + $0x28] sm:$0xff] 0.0
        %498 = vst [vmem:[#allocation4 + $0x30] sm:$0xff] 0.0
        %499 = vst [vmem:[#allocation4 + $0x38] sm:$0xff] 0.0
        %v500 = vld [vmem:[%s470] sm:$0xf]
        %v501 = vld [vmem:[%s470 + $0x4] sm:$0xf]
        %v502 = vld [vmem:[%s470 + $0x8] sm:$0xf]
        %v503 = vld [vmem:[%s470 + $0xc] sm:$0xf]
        %v504 = vld [vmem:[%s470 + $0x10] sm:$0xf]
        %v505 = vld [vmem:[%s470 + $0x14] sm:$0xf]
        %v506 = vld [vmem:[%s470 + $0x18] sm:$0xf]
        %v507 = vld [vmem:[%s470 + $0x1c] sm:$0xf]
        %v508 = vld [vmem:[%s6] sm:$0xf]
        %v509 = vld [vmem:[%s6 + $0x4] sm:$0xf]
        %v510 = vld [vmem:[%s6 + $0x8] sm:$0xf]
        %v511 = vld [vmem:[%s6 + $0xc] sm:$0xf]
        %v512 = vld [vmem:[%s6 + $0x10] sm:$0xf]
        %v513 = vld [vmem:[%s6 + $0x14] sm:$0xf]
        %v514 = vld [vmem:[%s6 + $0x18] sm:$0xf]
        %v515 = vld [vmem:[%s6 + $0x1c] sm:$0xf]
        %v516 = vld [vmem:[%s6 + $0x20] sm:$0xf]
        %v517 = vld [vmem:[%s6 + $0x24] sm:$0xf]
        %v518 = vld [vmem:[%s6 + $0x28] sm:$0xf]
        %v519 = vld [vmem:[%s6 + $0x2c] sm:$0xf]
        %v520 = vld [vmem:[%s6 + $0x30] sm:$0xf]
        %v521 = vld [vmem:[%s6 + $0x34] sm:$0xf]
        %v522 = vld [vmem:[%s6 + $0x38] sm:$0xf]
        %v523 = vld [vmem:[%s6 + $0x3c] sm:$0xf]
        %v532 = vunpack.c.l.b16 %v500
        %v533 = vunpack.c.l.b16 %v501
        %v534 = vunpack.c.l.b16 %v502
        %v535 = vunpack.c.l.b16 %v503
        %v536 = vunpack.c.l.b16 %v504
        %v537 = vunpack.c.l.b16 %v505
        %v538 = vunpack.c.l.b16 %v506
        %v539 = vunpack.c.l.b16 %v507
        %v540 = vpack.c.b16 %v533, %v532
        %v541 = vpack.c.b16 %v535, %v534
        %v542 = vpack.c.b16 %v537, %v536
        %v543 = vpack.c.b16 %v539, %v538
        %v564 = vunpack.c.l.b16 %v508
        %v565 = vunpack.c.l.b16 %v509
        %v566 = vunpack.c.l.b16 %v510
        %v567 = vunpack.c.l.b16 %v511
        %v568 = vunpack.c.l.b16 %v512
        %v569 = vunpack.c.l.b16 %v513
        %v570 = vunpack.c.l.b16 %v514
        %v571 = vunpack.c.l.b16 %v515
        %v572 = vunpack.c.l.b16 %v516
        %v573 = vunpack.c.l.b16 %v517
        %v574 = vunpack.c.l.b16 %v518
        %v575 = vunpack.c.l.b16 %v519
        %v576 = vunpack.c.l.b16 %v520
        %v577 = vunpack.c.l.b16 %v521
        %v578 = vunpack.c.l.b16 %v522
        %v579 = vunpack.c.l.b16 %v523
        %v580 = vpack.c.b16 %v565, %v564
        %v581 = vpack.c.b16 %v567, %v566
        %v582 = vpack.c.b16 %v569, %v568
        %v583 = vpack.c.b16 %v571, %v570
        %v584 = vpack.c.b16 %v573, %v572
        %v585 = vpack.c.b16 %v575, %v574
        %v586 = vpack.c.b16 %v577, %v576
        %v587 = vpack.c.b16 %v579, %v578
        %596 = vmatprep.subr.bf16.mxu0 0
        %597 = vmatpush1.bf16.msra.mxu0 %v587
        %598 = vmatprep.subr.bf16.mxu0 0
        %599 = vmatpush1.bf16.msra.mxu0 %v586
        %600 = vmatprep.subr.bf16.mxu0 0
        %601 = vmatpush1.bf16.msra.mxu0 %v585
        %602 = vmatprep.subr.bf16.mxu0 0
        %603 = vmatpush1.bf16.msra.mxu0 %v584
        %604 = vmatprep.subr.bf16.mxu0 0
        %605 = vmatpush1.bf16.msra.mxu0 %v583
        %606 = vmatprep.subr.bf16.mxu0 0
        %607 = vmatpush1.bf16.msra.mxu0 %v582
        %608 = vmatprep.subr.bf16.mxu0 0
        %609 = vmatpush1.bf16.msra.mxu0 %v581
        %610 = vmatprep.subr.bf16.mxu0 0
        %611 = vmatpush1.bf16.msra.mxu0 %v580
        %612 = vmatprep.subr.bf16.mxu0 0
        %613 = vmatpush2.bf16.msra.mxu0 0
        %614 = vmatprep.subr.bf16.mxu0 0
        %615 = vmatpush2.bf16.msra.mxu0 0
        %616 = vmatprep.subr.bf16.mxu0 0
        %617 = vmatpush2.bf16.msra.mxu0 0
        %618 = vmatprep.subr.bf16.mxu0 0
        %619 = vmatpush2.bf16.msra.mxu0 0
        %620 = vmatprep.subr.bf16.mxu0 0
        %621 = vmatpush2.bf16.msra.mxu0 0
        %622 = vmatprep.subr.bf16.mxu0 0
        %623 = vmatpush2.bf16.msra.mxu0 0
        %624 = vmatprep.subr.bf16.mxu0 0
        %625 = vmatpush2.bf16.msra.mxu0 0
        %626 = vmatprep.subr.bf16.mxu0 0
        %627 = vmatpush2.bf16.msra.mxu0 0
        %628 = vmatprep.mubr.bf16.mxu0 0
        %629 = vmatmul.mubr.bf16.gmra.mxu0 %v540
        %v630 = vpop.f32.mrf.mxu0
        %v631 = vadd.f32 0.0, %v630
        %v632 = vpop.f32.mrf.mxu0
        %v633 = vpop.f32.mrf.mxu0
        %v634 = vadd.f32 0.0, %v633
        %v635 = vpop.f32.mrf.mxu0
        %636 = vmatprep.mubr.bf16.mxu0 0
        %637 = vmatmul.mubr.bf16.gmra.mxu0 %v541
        %v638 = vpop.f32.mrf.mxu0
        %v639 = vadd.f32 0.0, %v638
        %v640 = vpop.f32.mrf.mxu0
        %v641 = vpop.f32.mrf.mxu0
        %v642 = vadd.f32 0.0, %v641
        %v643 = vpop.f32.mrf.mxu0
        %644 = vmatprep.mubr.bf16.mxu0 0
        %645 = vmatmul.mubr.bf16.gmra.mxu0 %v542
        %v646 = vpop.f32.mrf.mxu0
        %v647 = vadd.f32 0.0, %v646
        %v648 = vpop.f32.mrf.mxu0
        %v649 = vpop.f32.mrf.mxu0
        %v650 = vadd.f32 0.0, %v649
        %v651 = vpop.f32.mrf.mxu0
        %652 = vmatprep.mubr.bf16.mxu0 0
        %653 = vmatmul.mubr.bf16.gmra.mxu0 %v543
        %v654 = vpop.f32.mrf.mxu0
        %v655 = vadd.f32 0.0, %v654
        %v656 = vpop.f32.mrf.mxu0
        %v657 = vpop.f32.mrf.mxu0
        %v658 = vadd.f32 0.0, %v657
        %v659 = vpop.f32.mrf.mxu0
        %660 = vdwg.mxu0
        %661 = vst [vmem:[#allocation3] sm:$0xff] %v631
        %662 = vst [vmem:[#allocation3 + $0x8] sm:$0xff] %v634
        %663 = vst [vmem:[#allocation3 + $0x10] sm:$0xff] %v639
        %664 = vst [vmem:[#allocation3 + $0x18] sm:$0xff] %v642
        %665 = vst [vmem:[#allocation3 + $0x20] sm:$0xff] %v647
        %666 = vst [vmem:[#allocation3 + $0x28] sm:$0xff] %v650
        %667 = vst [vmem:[#allocation3 + $0x30] sm:$0xff] %v655
        %668 = vst [vmem:[#allocation3 + $0x38] sm:$0xff] %v658
      $region48: #{rgcn_forward.6} parent=43 // pred_fallthru
        _
      // Predicated region
      $region49: #{rgcn_forward.6} parent=43 // pred_check
        %p669 = pneg %p487
      $region50: #{rgcn_forward.6} parent=43 // pred_check_branch
        %671 = sbr.rel (%p669) target = $region52
      $region51: #{rgcn_forward.6} parent=43 // pred_region
        %672 = vst [vmem:[#allocation2] sm:$0xff] 0.0
        %673 = vst [vmem:[#allocation2 + $0x8] sm:$0xff] 0.0
        %674 = vst [vmem:[#allocation2 + $0x10] sm:$0xff] 0.0
        %675 = vst [vmem:[#allocation2 + $0x18] sm:$0xff] 0.0
        %676 = vst [vmem:[#allocation2 + $0x20] sm:$0xff] 0.0
        %677 = vst [vmem:[#allocation2 + $0x28] sm:$0xff] 0.0
        %678 = vst [vmem:[#allocation2 + $0x30] sm:$0xff] 0.0
        %679 = vst [vmem:[#allocation2 + $0x38] sm:$0xff] 0.0
        %680 = vst [vmem:[#allocation2 + $0x40] sm:$0xff] 0.0
        %681 = vst [vmem:[#allocation2 + $0x48] sm:$0xff] 0.0
        %682 = vst [vmem:[#allocation2 + $0x50] sm:$0xff] 0.0
        %683 = vst [vmem:[#allocation2 + $0x58] sm:$0xff] 0.0
        %684 = vst [vmem:[#allocation2 + $0x60] sm:$0xff] 0.0
        %685 = vst [vmem:[#allocation2 + $0x68] sm:$0xff] 0.0
        %686 = vst [vmem:[#allocation2 + $0x70] sm:$0xff] 0.0
        %687 = vst [vmem:[#allocation2 + $0x78] sm:$0xff] 0.0
        %688 = vst [vmem:[#allocation2 + $0x80] sm:$0xff] 0.0
        %689 = vst [vmem:[#allocation2 + $0x88] sm:$0xff] 0.0
        %690 = vst [vmem:[#allocation2 + $0x90] sm:$0xff] 0.0
        %691 = vst [vmem:[#allocation2 + $0x98] sm:$0xff] 0.0
        %692 = vst [vmem:[#allocation2 + $0xa0] sm:$0xff] 0.0
        %693 = vst [vmem:[#allocation2 + $0xa8] sm:$0xff] 0.0
        %694 = vst [vmem:[#allocation2 + $0xb0] sm:$0xff] 0.0
        %695 = vst [vmem:[#allocation2 + $0xb8] sm:$0xff] 0.0
      $region52: #{rgcn_forward.6} parent=43 // pred_fallthru
        _
      %s696 = sld [smem:[#allocation7 + %s34]]
      %p697 = scmp.lt.s32.totalorder %s36, %s696
      // Predicated region
      $region53: #{rgcn_forward.6} parent=43 // pred_check
        %p698 = pneg %p697
      $region54: #{rgcn_forward.6} parent=43 // pred_check_branch
        %700 = sbr.rel (%p698) target = $region56
      $region55: #{rgcn_forward.6} parent=43 // pred_region
        %v701 = vld [vmem:[#allocation2] sm:$0xff]
        %v702 = vld [vmem:[#allocation2 + $0x8] sm:$0xff]
        %v703 = vld [vmem:[#allocation2 + $0x10] sm:$0xff]
        %v704 = vld [vmem:[#allocation2 + $0x18] sm:$0xff]
        %v705 = vld [vmem:[#allocation2 + $0x20] sm:$0xff]
        %v706 = vld [vmem:[#allocation2 + $0x28] sm:$0xff]
        %v707 = vld [vmem:[#allocation2 + $0x30] sm:$0xff]
        %v708 = vld [vmem:[#allocation2 + $0x38] sm:$0xff]
        %v709 = vld [vmem:[#allocation2 + $0x40] sm:$0xff]
        %v710 = vld [vmem:[#allocation2 + $0x48] sm:$0xff]
        %v711 = vld [vmem:[#allocation2 + $0x50] sm:$0xff]
        %v712 = vld [vmem:[#allocation2 + $0x58] sm:$0xff]
        %v713 = vld [vmem:[#allocation2 + $0x60] sm:$0xff]
        %v714 = vld [vmem:[#allocation2 + $0x68] sm:$0xff]
        %v715 = vld [vmem:[#allocation2 + $0x70] sm:$0xff]
        %v716 = vld [vmem:[#allocation2 + $0x78] sm:$0xff]
        %v717 = vld [vmem:[#allocation2 + $0x80] sm:$0xff]
        %v718 = vld [vmem:[#allocation2 + $0x88] sm:$0xff]
        %v719 = vld [vmem:[#allocation2 + $0x90] sm:$0xff]
        %v720 = vld [vmem:[#allocation2 + $0x98] sm:$0xff]
        %v721 = vld [vmem:[#allocation2 + $0xa0] sm:$0xff]
        %v722 = vld [vmem:[#allocation2 + $0xa8] sm:$0xff]
        %v723 = vld [vmem:[#allocation2 + $0xb0] sm:$0xff]
        %v724 = vld [vmem:[#allocation2 + $0xb8] sm:$0xff]
        %v725 = vld [vmem:[%s433] sm:$0xf]
        %v726 = vld [vmem:[%s433 + $0x4] sm:$0xf]
        %v727 = vld [vmem:[%s433 + $0x8] sm:$0xf]
        %v728 = vld [vmem:[%s433 + $0xc] sm:$0xf]
        %v729 = vld [vmem:[%s433 + $0x10] sm:$0xf]
        %v730 = vld [vmem:[%s433 + $0x14] sm:$0xf]
        %v731 = vld [vmem:[%s433 + $0x18] sm:$0xf]
        %v732 = vld [vmem:[%s433 + $0x1c] sm:$0xf]
        %v733 = vld [vmem:[%s433 + $0x20] sm:$0xf]
        %v734 = vld [vmem:[%s433 + $0x24] sm:$0xf]
        %v735 = vld [vmem:[%s433 + $0x28] sm:$0xf]
        %v736 = vld [vmem:[%s433 + $0x2c] sm:$0xf]
        %v737 = vld [vmem:[%s433 + $0x30] sm:$0xf]
        %v738 = vld [vmem:[%s433 + $0x34] sm:$0xf]
        %v739 = vld [vmem:[%s433 + $0x38] sm:$0xf]
        %v740 = vld [vmem:[%s433 + $0x3c] sm:$0xf]
        %v741 = vld [vmem:[%s433 + $0x40] sm:$0xf]
        %v742 = vld [vmem:[%s433 + $0x44] sm:$0xf]
        %v743 = vld [vmem:[%s433 + $0x48] sm:$0xf]
        %v744 = vld [vmem:[%s433 + $0x4c] sm:$0xf]
        %v745 = vld [vmem:[%s433 + $0x50] sm:$0xf]
        %v746 = vld [vmem:[%s433 + $0x54] sm:$0xf]
        %v747 = vld [vmem:[%s433 + $0x58] sm:$0xf]
        %v748 = vld [vmem:[%s433 + $0x5c] sm:$0xf]
        %v749 = vld [vmem:[%s456] sm:$0xf]
        %v750 = vld [vmem:[%s456 + $0x4] sm:$0xf]
        %v751 = vld [vmem:[%s456 + $0x8] sm:$0xf]
        %v752 = vld [vmem:[%s456 + $0xc] sm:$0xf]
        %v753 = vld [vmem:[%s456 + $0x10] sm:$0xf]
        %v754 = vld [vmem:[%s456 + $0x14] sm:$0xf]
        %v755 = vld [vmem:[%s456 + $0x18] sm:$0xf]
        %v756 = vld [vmem:[%s456 + $0x1c] sm:$0xf]
        %v757 = vld [vmem:[%s456 + $0x20] sm:$0xf]
        %v758 = vld [vmem:[%s456 + $0x24] sm:$0xf]
        %v759 = vld [vmem:[%s456 + $0x28] sm:$0xf]
        %v760 = vld [vmem:[%s456 + $0x2c] sm:$0xf]
        %v761 = vld [vmem:[%s456 + $0x30] sm:$0xf]
        %v762 = vld [vmem:[%s456 + $0x34] sm:$0xf]
        %v763 = vld [vmem:[%s456 + $0x38] sm:$0xf]
        %v764 = vld [vmem:[%s456 + $0x3c] sm:$0xf]
        %v789 = vunpack.c.l.b16 %v725
        %v790 = vunpack.c.l.b16 %v726
        %v791 = vunpack.c.l.b16 %v727
        %v792 = vunpack.c.l.b16 %v728
        %v793 = vunpack.c.l.b16 %v729
        %v794 = vunpack.c.l.b16 %v730
        %v795 = vunpack.c.l.b16 %v731
        %v796 = vunpack.c.l.b16 %v732
        %v797 = vunpack.c.l.b16 %v733
        %v798 = vunpack.c.l.b16 %v734
        %v799 = vunpack.c.l.b16 %v735
        %v800 = vunpack.c.l.b16 %v736
        %v801 = vunpack.c.l.b16 %v737
        %v802 = vunpack.c.l.b16 %v738
        %v803 = vunpack.c.l.b16 %v739
        %v804 = vunpack.c.l.b16 %v740
        %v805 = vunpack.c.l.b16 %v741
        %v806 = vunpack.c.l.b16 %v742
        %v807 = vunpack.c.l.b16 %v743
        %v808 = vunpack.c.l.b16 %v744
        %v809 = vunpack.c.l.b16 %v745
        %v810 = vunpack.c.l.b16 %v746
        %v811 = vunpack.c.l.b16 %v747
        %v812 = vunpack.c.l.b16 %v748
        %v813 = vpack.c.b16 %v790, %v789
        %v814 = vpack.c.b16 %v792, %v791
        %v815 = vpack.c.b16 %v794, %v793
        %v816 = vpack.c.b16 %v796, %v795
        %v817 = vpack.c.b16 %v798, %v797
        %v818 = vpack.c.b16 %v800, %v799
        %v819 = vpack.c.b16 %v802, %v801
        %v820 = vpack.c.b16 %v804, %v803
        %v821 = vpack.c.b16 %v806, %v805
        %v822 = vpack.c.b16 %v808, %v807
        %v823 = vpack.c.b16 %v810, %v809
        %v824 = vpack.c.b16 %v812, %v811
        %v853 = vunpack.c.l.b16 %v749
        %v854 = vunpack.c.l.b16 %v750
        %v855 = vunpack.c.l.b16 %v751
        %v856 = vunpack.c.l.b16 %v752
        %v857 = vunpack.c.l.b16 %v753
        %v858 = vunpack.c.l.b16 %v754
        %v859 = vunpack.c.l.b16 %v755
        %v860 = vunpack.c.l.b16 %v756
        %v861 = vunpack.c.l.b16 %v757
        %v862 = vunpack.c.l.b16 %v758
        %v863 = vunpack.c.l.b16 %v759
        %v864 = vunpack.c.l.b16 %v760
        %v865 = vunpack.c.l.b16 %v761
        %v866 = vunpack.c.l.b16 %v762
        %v867 = vunpack.c.l.b16 %v763
        %v868 = vunpack.c.l.b16 %v764
        %v869 = vpack.c.b16 %v854, %v853
        %v870 = vpack.c.b16 %v856, %v855
        %v871 = vpack.c.b16 %v858, %v857
        %v872 = vpack.c.b16 %v860, %v859
        %v873 = vpack.c.b16 %v862, %v861
        %v874 = vpack.c.b16 %v864, %v863
        %v875 = vpack.c.b16 %v866, %v865
        %v876 = vpack.c.b16 %v868, %v867
        %885 = vmatprep.subr.bf16.mxu0 0
        %886 = vmatpush1.bf16.msra.mxu0 %v876
        %887 = vmatprep.subr.bf16.mxu0 0
        %888 = vmatpush1.bf16.msra.mxu0 %v875
        %889 = vmatprep.subr.bf16.mxu0 0
        %890 = vmatpush1.bf16.msra.mxu0 %v874
        %891 = vmatprep.subr.bf16.mxu0 0
        %892 = vmatpush1.bf16.msra.mxu0 %v873
        %893 = vmatprep.subr.bf16.mxu0 0
        %894 = vmatpush1.bf16.msra.mxu0 %v872
        %895 = vmatprep.subr.bf16.mxu0 0
        %896 = vmatpush1.bf16.msra.mxu0 %v871
        %897 = vmatprep.subr.bf16.mxu0 0
        %898 = vmatpush1.bf16.msra.mxu0 %v870
        %899 = vmatprep.subr.bf16.mxu0 0
        %900 = vmatpush1.bf16.msra.mxu0 %v869
        %901 = vmatprep.subr.bf16.mxu0 0
        %902 = vmatpush2.bf16.msra.mxu0 0
        %903 = vmatprep.subr.bf16.mxu0 0
        %904 = vmatpush2.bf16.msra.mxu0 0
        %905 = vmatprep.subr.bf16.mxu0 0
        %906 = vmatpush2.bf16.msra.mxu0 0
        %907 = vmatprep.subr.bf16.mxu0 0
        %908 = vmatpush2.bf16.msra.mxu0 0
        %909 = vmatprep.subr.bf16.mxu0 0
        %910 = vmatpush2.bf16.msra.mxu0 0
        %911 = vmatprep.subr.bf16.mxu0 0
        %912 = vmatpush2.bf16.msra.mxu0 0
        %913 = vmatprep.subr.bf16.mxu0 0
        %914 = vmatpush2.bf16.msra.mxu0 0
        %915 = vmatprep.subr.bf16.mxu0 0
        %916 = vmatpush2.bf16.msra.mxu0 0
        %917 = vmatprep.mubr.bf16.mxu0 0
        %918 = vmatmul.mubr.bf16.gmra.mxu0 %v813
        %v919 = vpop.f32.mrf.mxu0
        %v920 = vadd.f32 0.0, %v919
        %v921 = vpop.f32.mrf.mxu0
        %v922 = vpop.f32.mrf.mxu0
        %v923 = vadd.f32 0.0, %v922
        %v924 = vpop.f32.mrf.mxu0
        %925 = vmatprep.mubr.bf16.mxu0 0
        %926 = vmatmul.mubr.bf16.gmra.mxu0 %v814
        %v927 = vpop.f32.mrf.mxu0
        %v928 = vadd.f32 0.0, %v927
        %v929 = vpop.f32.mrf.mxu0
        %v930 = vpop.f32.mrf.mxu0
        %v931 = vadd.f32 0.0, %v930
        %v932 = vpop.f32.mrf.mxu0
        %933 = vmatprep.mubr.bf16.mxu0 0
        %934 = vmatmul.mubr.bf16.gmra.mxu0 %v815
        %v935 = vpop.f32.mrf.mxu0
        %v936 = vadd.f32 0.0, %v935
        %v937 = vpop.f32.mrf.mxu0
        %v938 = vpop.f32.mrf.mxu0
        %v939 = vadd.f32 0.0, %v938
        %v940 = vpop.f32.mrf.mxu0
        %941 = vmatprep.mubr.bf16.mxu0 0
        %942 = vmatmul.mubr.bf16.gmra.mxu0 %v816
        %v943 = vpop.f32.mrf.mxu0
        %v944 = vadd.f32 0.0, %v943
        %v945 = vpop.f32.mrf.mxu0
        %v946 = vpop.f32.mrf.mxu0
        %v947 = vadd.f32 0.0, %v946
        %v948 = vpop.f32.mrf.mxu0
        %949 = vmatprep.mubr.bf16.mxu0 0
        %950 = vmatmul.mubr.bf16.gmra.mxu0 %v817
        %v951 = vpop.f32.mrf.mxu0
        %v952 = vadd.f32 0.0, %v951
        %v953 = vpop.f32.mrf.mxu0
        %v954 = vpop.f32.mrf.mxu0
        %v955 = vadd.f32 0.0, %v954
        %v956 = vpop.f32.mrf.mxu0
        %957 = vmatprep.mubr.bf16.mxu0 0
        %958 = vmatmul.mubr.bf16.gmra.mxu0 %v818
        %v959 = vpop.f32.mrf.mxu0
        %v960 = vadd.f32 0.0, %v959
        %v961 = vpop.f32.mrf.mxu0
        %v962 = vpop.f32.mrf.mxu0
        %v963 = vadd.f32 0.0, %v962
        %v964 = vpop.f32.mrf.mxu0
        %965 = vmatprep.mubr.bf16.mxu0 0
        %966 = vmatmul.mubr.bf16.gmra.mxu0 %v819
        %v967 = vpop.f32.mrf.mxu0
        %v968 = vadd.f32 0.0, %v967
        %v969 = vpop.f32.mrf.mxu0
        %v970 = vpop.f32.mrf.mxu0
        %v971 = vadd.f32 0.0, %v970
        %v972 = vpop.f32.mrf.mxu0
        %973 = vmatprep.mubr.bf16.mxu0 0
        %974 = vmatmul.mubr.bf16.gmra.mxu0 %v820
        %v975 = vpop.f32.mrf.mxu0
        %v976 = vadd.f32 0.0, %v975
        %v977 = vpop.f32.mrf.mxu0
        %v978 = vpop.f32.mrf.mxu0
        %v979 = vadd.f32 0.0, %v978
        %v980 = vpop.f32.mrf.mxu0
        %981 = vmatprep.mubr.bf16.mxu0 0
        %982 = vmatmul.mubr.bf16.gmra.mxu0 %v821
        %v983 = vpop.f32.mrf.mxu0
        %v984 = vadd.f32 0.0, %v983
        %v985 = vpop.f32.mrf.mxu0
        %v986 = vpop.f32.mrf.mxu0
        %v987 = vadd.f32 0.0, %v986
        %v988 = vpop.f32.mrf.mxu0
        %989 = vmatprep.mubr.bf16.mxu0 0
        %990 = vmatmul.mubr.bf16.gmra.mxu0 %v822
        %v991 = vpop.f32.mrf.mxu0
        %v992 = vadd.f32 0.0, %v991
        %v993 = vpop.f32.mrf.mxu0
        %v994 = vpop.f32.mrf.mxu0
        %v995 = vadd.f32 0.0, %v994
        %v996 = vpop.f32.mrf.mxu0
        %997 = vmatprep.mubr.bf16.mxu0 0
        %998 = vmatmul.mubr.bf16.gmra.mxu0 %v823
        %v999 = vpop.f32.mrf.mxu0
        %v1000 = vadd.f32 0.0, %v999
        %v1001 = vpop.f32.mrf.mxu0
        %v1002 = vpop.f32.mrf.mxu0
        %v1003 = vadd.f32 0.0, %v1002
        %v1004 = vpop.f32.mrf.mxu0
        %1005 = vmatprep.mubr.bf16.mxu0 0
        %1006 = vmatmul.mubr.bf16.gmra.mxu0 %v824
        %v1007 = vpop.f32.mrf.mxu0
        %v1008 = vadd.f32 0.0, %v1007
        %v1009 = vpop.f32.mrf.mxu0
        %v1010 = vpop.f32.mrf.mxu0
        %v1011 = vadd.f32 0.0, %v1010
        %v1012 = vpop.f32.mrf.mxu0
        %1013 = vdwg.mxu0
        %v1014 = vadd.f32 %v701, %v920
        %v1015 = vadd.f32 %v702, %v923
        %v1016 = vadd.f32 %v703, %v928
        %v1017 = vadd.f32 %v704, %v931
        %v1018 = vadd.f32 %v705, %v936
        %v1019 = vadd.f32 %v706, %v939
        %v1020 = vadd.f32 %v707, %v944
        %v1021 = vadd.f32 %v708, %v947
        %v1022 = vadd.f32 %v709, %v952
        %v1023 = vadd.f32 %v710, %v955
        %v1024 = vadd.f32 %v711, %v960
        %v1025 = vadd.f32 %v712, %v963
        %v1026 = vadd.f32 %v713, %v968
        %v1027 = vadd.f32 %v714, %v971
        %v1028 = vadd.f32 %v715, %v976
        %v1029 = vadd.f32 %v716, %v979
        %v1030 = vadd.f32 %v717, %v984
        %v1031 = vadd.f32 %v718, %v987
        %v1032 = vadd.f32 %v719, %v992
        %v1033 = vadd.f32 %v720, %v995
        %v1034 = vadd.f32 %v721, %v1000
        %v1035 = vadd.f32 %v722, %v1003
        %v1036 = vadd.f32 %v723, %v1008
        %v1037 = vadd.f32 %v724, %v1011
        %1038 = vst [vmem:[#allocation2] sm:$0xff] %v1014
        %1039 = vst [vmem:[#allocation2 + $0x8] sm:$0xff] %v1015
        %1040 = vst [vmem:[#allocation2 + $0x10] sm:$0xff] %v1016
        %1041 = vst [vmem:[#allocation2 + $0x18] sm:$0xff] %v1017
        %1042 = vst [vmem:[#allocation2 + $0x20] sm:$0xff] %v1018
        %1043 = vst [vmem:[#allocation2 + $0x28] sm:$0xff] %v1019
        %1044 = vst [vmem:[#allocation2 + $0x30] sm:$0xff] %v1020
        %1045 = vst [vmem:[#allocation2 + $0x38] sm:$0xff] %v1021
        %1046 = vst [vmem:[#allocation2 + $0x40] sm:$0xff] %v1022
        %1047 = vst [vmem:[#allocation2 + $0x48] sm:$0xff] %v1023
        %1048 = vst [vmem:[#allocation2 + $0x50] sm:$0xff] %v1024
        %1049 = vst [vmem:[#allocation2 + $0x58] sm:$0xff] %v1025
        %1050 = vst [vmem:[#allocation2 + $0x60] sm:$0xff] %v1026
        %1051 = vst [vmem:[#allocation2 + $0x68] sm:$0xff] %v1027
        %1052 = vst [vmem:[#allocation2 + $0x70] sm:$0xff] %v1028
        %1053 = vst [vmem:[#allocation2 + $0x78] sm:$0xff] %v1029
        %1054 = vst [vmem:[#allocation2 + $0x80] sm:$0xff] %v1030
        %1055 = vst [vmem:[#allocation2 + $0x88] sm:$0xff] %v1031
        %1056 = vst [vmem:[#allocation2 + $0x90] sm:$0xff] %v1032
        %1057 = vst [vmem:[#allocation2 + $0x98] sm:$0xff] %v1033
        %1058 = vst [vmem:[#allocation2 + $0xa0] sm:$0xff] %v1034
        %1059 = vst [vmem:[#allocation2 + $0xa8] sm:$0xff] %v1035
        %1060 = vst [vmem:[#allocation2 + $0xb0] sm:$0xff] %v1036
        %1061 = vst [vmem:[#allocation2 + $0xb8] sm:$0xff] %v1037
      $region56: #{rgcn_forward.6} parent=43 // pred_fallthru
        _
      // Predicated region
      $region57: #{rgcn_forward.6} parent=43 // pred_check
        %p1062 = pneg %p487
      $region58: #{rgcn_forward.6} parent=43 // pred_check_branch
        %1064 = sbr.rel (%p1062) target = $region60
      $region59: #{rgcn_forward.6} parent=43 // pred_region
        %v1065 = vld [vmem:[#allocation4] sm:$0xff]
        %v1066 = vld [vmem:[#allocation4 + $0x8] sm:$0xff]
        %v1067 = vld [vmem:[#allocation4 + $0x10] sm:$0xff]
        %v1068 = vld [vmem:[#allocation4 + $0x18] sm:$0xff]
        %v1069 = vld [vmem:[#allocation4 + $0x20] sm:$0xff]
        %v1070 = vld [vmem:[#allocation4 + $0x28] sm:$0xff]
        %v1071 = vld [vmem:[#allocation4 + $0x30] sm:$0xff]
        %v1072 = vld [vmem:[#allocation4 + $0x38] sm:$0xff]
        %v1073 = vld [vmem:[#allocation2] sm:$0xff]
        %v1074 = vld [vmem:[#allocation2 + $0x8] sm:$0xff]
        %v1075 = vld [vmem:[#allocation2 + $0x10] sm:$0xff]
        %v1076 = vld [vmem:[#allocation2 + $0x18] sm:$0xff]
        %v1077 = vld [vmem:[#allocation2 + $0x20] sm:$0xff]
        %v1078 = vld [vmem:[#allocation2 + $0x28] sm:$0xff]
        %v1079 = vld [vmem:[#allocation2 + $0x30] sm:$0xff]
        %v1080 = vld [vmem:[#allocation2 + $0x38] sm:$0xff]
        %v1081 = vld [vmem:[%s477] sm:$0xf]
        %v1082 = vld [vmem:[%s477 + $0x4] sm:$0xf]
        %v1083 = vld [vmem:[%s477 + $0x8] sm:$0xf]
        %v1084 = vld [vmem:[%s477 + $0xc] sm:$0xf]
        %v1085 = vld [vmem:[%s477 + $0x10] sm:$0xf]
        %v1086 = vld [vmem:[%s477 + $0x14] sm:$0xf]
        %v1087 = vld [vmem:[%s477 + $0x18] sm:$0xf]
        %v1088 = vld [vmem:[%s477 + $0x1c] sm:$0xf]
        %v1089 = vld [vmem:[%s477 + $0x20] sm:$0xf]
        %v1090 = vld [vmem:[%s477 + $0x24] sm:$0xf]
        %v1091 = vld [vmem:[%s477 + $0x28] sm:$0xf]
        %v1092 = vld [vmem:[%s477 + $0x2c] sm:$0xf]
        %v1093 = vld [vmem:[%s477 + $0x30] sm:$0xf]
        %v1094 = vld [vmem:[%s477 + $0x34] sm:$0xf]
        %v1095 = vld [vmem:[%s477 + $0x38] sm:$0xf]
        %v1096 = vld [vmem:[%s477 + $0x3c] sm:$0xf]
        %v1097 = vunpack.c.l.bf16 %v1081
        %v1098 = vunpack.c.l.bf16 %v1082
        %v1099 = vunpack.c.l.bf16 %v1083
        %v1100 = vunpack.c.l.bf16 %v1084
        %v1101 = vunpack.c.l.bf16 %v1085
        %v1102 = vunpack.c.l.bf16 %v1086
        %v1103 = vunpack.c.l.bf16 %v1087
        %v1104 = vunpack.c.l.bf16 %v1088
        %v1105 = vunpack.c.l.bf16 %v1089
        %v1106 = vunpack.c.l.bf16 %v1090
        %v1107 = vunpack.c.l.bf16 %v1091
        %v1108 = vunpack.c.l.bf16 %v1092
        %v1109 = vunpack.c.l.bf16 %v1093
        %v1110 = vunpack.c.l.bf16 %v1094
        %v1111 = vunpack.c.l.bf16 %v1095
        %v1112 = vunpack.c.l.bf16 %v1096
        %1113 = vmatprep.subr.mxu0 0.0
        %1114 = vmatpush1.msra.mxu0 %v1112
        %1115 = vmatprep.subr.mxu0 0.0
        %1116 = vmatpush1.msra.mxu0 %v1111
        %1117 = vmatprep.subr.mxu0 0.0
        %1118 = vmatpush1.msra.mxu0 %v1110
        %1119 = vmatprep.subr.mxu0 0.0
        %1120 = vmatpush1.msra.mxu0 %v1109
        %1121 = vmatprep.subr.mxu0 0.0
        %1122 = vmatpush1.msra.mxu0 %v1108
        %1123 = vmatprep.subr.mxu0 0.0
        %1124 = vmatpush1.msra.mxu0 %v1107
        %1125 = vmatprep.subr.mxu0 0.0
        %1126 = vmatpush1.msra.mxu0 %v1106
        %1127 = vmatprep.subr.mxu0 0.0
        %1128 = vmatpush1.msra.mxu0 %v1105
        %1129 = vmatprep.subr.mxu0 0.0
        %1130 = vmatpush1.msra.mxu0 %v1104
        %1131 = vmatprep.subr.mxu0 0.0
        %1132 = vmatpush1.msra.mxu0 %v1103
        %1133 = vmatprep.subr.mxu0 0.0
        %1134 = vmatpush1.msra.mxu0 %v1102
        %1135 = vmatprep.subr.mxu0 0.0
        %1136 = vmatpush1.msra.mxu0 %v1101
        %1137 = vmatprep.subr.mxu0 0.0
        %1138 = vmatpush1.msra.mxu0 %v1100
        %1139 = vmatprep.subr.mxu0 0.0
        %1140 = vmatpush1.msra.mxu0 %v1099
        %1141 = vmatprep.subr.mxu0 0.0
        %1142 = vmatpush1.msra.mxu0 %v1098
        %1143 = vmatprep.subr.mxu0 0.0
        %1144 = vmatpush1.msra.mxu0 %v1097
        %1145 = vmatprep.subr.mxu0 0.0
        %1146 = vmatpush2.msra.mxu0 0.0
        %1147 = vmatprep.subr.mxu0 0.0
        %1148 = vmatpush2.msra.mxu0 0.0
        %1149 = vmatprep.subr.mxu0 0.0
        %1150 = vmatpush2.msra.mxu0 0.0
        %1151 = vmatprep.subr.mxu0 0.0
        %1152 = vmatpush2.msra.mxu0 0.0
        %1153 = vmatprep.subr.mxu0 0.0
        %1154 = vmatpush2.msra.mxu0 0.0
        %1155 = vmatprep.subr.mxu0 0.0
        %1156 = vmatpush2.msra.mxu0 0.0
        %1157 = vmatprep.subr.mxu0 0.0
        %1158 = vmatpush2.msra.mxu0 0.0
        %1159 = vmatprep.subr.mxu0 0.0
        %1160 = vmatpush2.msra.mxu0 0.0
        %1161 = vmatprep.subr.mxu0 0.0
        %1162 = vmatpush2.msra.mxu0 0.0
        %1163 = vmatprep.subr.mxu0 0.0
        %1164 = vmatpush2.msra.mxu0 0.0
        %1165 = vmatprep.subr.mxu0 0.0
        %1166 = vmatpush2.msra.mxu0 0.0
        %1167 = vmatprep.subr.mxu0 0.0
        %1168 = vmatpush2.msra.mxu0 0.0
        %1169 = vmatprep.subr.mxu0 0.0
        %1170 = vmatpush2.msra.mxu0 0.0
        %1171 = vmatprep.subr.mxu0 0.0
        %1172 = vmatpush2.msra.mxu0 0.0
        %1173 = vmatprep.subr.mxu0 0.0
        %1174 = vmatpush2.msra.mxu0 0.0
        %1175 = vmatprep.subr.mxu0 0.0
        %1176 = vmatpush2.msra.mxu0 0.0
        %1177 = vmatprep.mubr.f32.mxu0 0.0
        %1178 = vmatmul.mubr.f32.gmra.mxu0 %v1073
        %v1179 = vpop.f32.mrf.mxu0
        %v1180 = vadd.f32 0.0, %v1179
        %v1181 = vpop.f32.mrf.mxu0
        %1182 = vmatprep.mubr.f32.mxu0 0.0
        %1183 = vmatmul.mubr.f32.gmra.mxu0 %v1074
        %v1184 = vpop.f32.mrf.mxu0
        %v1185 = vadd.f32 0.0, %v1184
        %v1186 = vpop.f32.mrf.mxu0
        %1187 = vmatprep.mubr.f32.mxu0 0.0
        %1188 = vmatmul.mubr.f32.gmra.mxu0 %v1075
        %v1189 = vpop.f32.mrf.mxu0
        %v1190 = vadd.f32 0.0, %v1189
        %v1191 = vpop.f32.mrf.mxu0
        %1192 = vmatprep.mubr.f32.mxu0 0.0
        %1193 = vmatmul.mubr.f32.gmra.mxu0 %v1076
        %v1194 = vpop.f32.mrf.mxu0
        %v1195 = vadd.f32 0.0, %v1194
        %v1196 = vpop.f32.mrf.mxu0
        %1197 = vmatprep.mubr.f32.mxu0 0.0
        %1198 = vmatmul.mubr.f32.gmra.mxu0 %v1077
        %v1199 = vpop.f32.mrf.mxu0
        %v1200 = vadd.f32 0.0, %v1199
        %v1201 = vpop.f32.mrf.mxu0
        %1202 = vmatprep.mubr.f32.mxu0 0.0
        %1203 = vmatmul.mubr.f32.gmra.mxu0 %v1078
        %v1204 = vpop.f32.mrf.mxu0
        %v1205 = vadd.f32 0.0, %v1204
        %v1206 = vpop.f32.mrf.mxu0
        %1207 = vmatprep.mubr.f32.mxu0 0.0
        %1208 = vmatmul.mubr.f32.gmra.mxu0 %v1079
        %v1209 = vpop.f32.mrf.mxu0
        %v1210 = vadd.f32 0.0, %v1209
        %v1211 = vpop.f32.mrf.mxu0
        %1212 = vmatprep.mubr.f32.mxu0 0.0
        %1213 = vmatmul.mubr.f32.gmra.mxu0 %v1080
        %v1214 = vpop.f32.mrf.mxu0
        %v1215 = vadd.f32 0.0, %v1214
        %v1216 = vpop.f32.mrf.mxu0
        %1217 = vdwg.mxu0
        %v1218 = vadd.f32 %v1065, %v1180
        %v1219 = vadd.f32 %v1066, %v1185
        %v1220 = vadd.f32 %v1067, %v1190
        %v1221 = vadd.f32 %v1068, %v1195
        %v1222 = vadd.f32 %v1069, %v1200
        %v1223 = vadd.f32 %v1070, %v1205
        %v1224 = vadd.f32 %v1071, %v1210
        %v1225 = vadd.f32 %v1072, %v1215
        %v1226 = vld [vmem:[#allocation2 + $0x40] sm:$0xff]
        %v1227 = vld [vmem:[#allocation2 + $0x48] sm:$0xff]
        %v1228 = vld [vmem:[#allocation2 + $0x50] sm:$0xff]
        %v1229 = vld [vmem:[#allocation2 + $0x58] sm:$0xff]
        %v1230 = vld [vmem:[#allocation2 + $0x60] sm:$0xff]
        %v1231 = vld [vmem:[#allocation2 + $0x68] sm:$0xff]
        %v1232 = vld [vmem:[#allocation2 + $0x70] sm:$0xff]
        %v1233 = vld [vmem:[#allocation2 + $0x78] sm:$0xff]
        %s1234 = scalar_lea.vmem %s477, 64
        %v1235 = vld [vmem:[%s1234] sm:$0xf]
        %v1236 = vld [vmem:[%s1234 + $0x4] sm:$0xf]
        %v1237 = vld [vmem:[%s1234 + $0x8] sm:$0xf]
        %v1238 = vld [vmem:[%s1234 + $0xc] sm:$0xf]
        %v1239 = vld [vmem:[%s1234 + $0x10] sm:$0xf]
        %v1240 = vld [vmem:[%s1234 + $0x14] sm:$0xf]
        %v1241 = vld [vmem:[%s1234 + $0x18] sm:$0xf]
        %v1242 = vld [vmem:[%s1234 + $0x1c] sm:$0xf]
        %v1243 = vld [vmem:[%s1234 + $0x20] sm:$0xf]
        %v1244 = vld [vmem:[%s1234 + $0x24] sm:$0xf]
        %v1245 = vld [vmem:[%s1234 + $0x28] sm:$0xf]
        %v1246 = vld [vmem:[%s1234 + $0x2c] sm:$0xf]
        %v1247 = vld [vmem:[%s1234 + $0x30] sm:$0xf]
        %v1248 = vld [vmem:[%s1234 + $0x34] sm:$0xf]
        %v1249 = vld [vmem:[%s1234 + $0x38] sm:$0xf]
        %v1250 = vld [vmem:[%s1234 + $0x3c] sm:$0xf]
        %v1251 = vunpack.c.l.bf16 %v1235
        %v1252 = vunpack.c.l.bf16 %v1236
        %v1253 = vunpack.c.l.bf16 %v1237
        %v1254 = vunpack.c.l.bf16 %v1238
        %v1255 = vunpack.c.l.bf16 %v1239
        %v1256 = vunpack.c.l.bf16 %v1240
        %v1257 = vunpack.c.l.bf16 %v1241
        %v1258 = vunpack.c.l.bf16 %v1242
        %v1259 = vunpack.c.l.bf16 %v1243
        %v1260 = vunpack.c.l.bf16 %v1244
        %v1261 = vunpack.c.l.bf16 %v1245
        %v1262 = vunpack.c.l.bf16 %v1246
        %v1263 = vunpack.c.l.bf16 %v1247
        %v1264 = vunpack.c.l.bf16 %v1248
        %v1265 = vunpack.c.l.bf16 %v1249
        %v1266 = vunpack.c.l.bf16 %v1250
        %1267 = vmatprep.subr.mxu0 0.0
        %1268 = vmatpush1.msra.mxu0 %v1266
        %1269 = vmatprep.subr.mxu0 0.0
        %1270 = vmatpush1.msra.mxu0 %v1265
        %1271 = vmatprep.subr.mxu0 0.0
        %1272 = vmatpush1.msra.mxu0 %v1264
        %1273 = vmatprep.subr.mxu0 0.0
        %1274 = vmatpush1.msra.mxu0 %v1263
        %1275 = vmatprep.subr.mxu0 0.0
        %1276 = vmatpush1.msra.mxu0 %v1262
        %1277 = vmatprep.subr.mxu0 0.0
        %1278 = vmatpush1.msra.mxu0 %v1261
        %1279 = vmatprep.subr.mxu0 0.0
        %1280 = vmatpush1.msra.mxu0 %v1260
        %1281 = vmatprep.subr.mxu0 0.0
        %1282 = vmatpush1.msra.mxu0 %v1259
        %1283 = vmatprep.subr.mxu0 0.0
        %1284 = vmatpush1.msra.mxu0 %v1258
        %1285 = vmatprep.subr.mxu0 0.0
        %1286 = vmatpush1.msra.mxu0 %v1257
        %1287 = vmatprep.subr.mxu0 0.0
        %1288 = vmatpush1.msra.mxu0 %v1256
        %1289 = vmatprep.subr.mxu0 0.0
        %1290 = vmatpush1.msra.mxu0 %v1255
        %1291 = vmatprep.subr.mxu0 0.0
        %1292 = vmatpush1.msra.mxu0 %v1254
        %1293 = vmatprep.subr.mxu0 0.0
        %1294 = vmatpush1.msra.mxu0 %v1253
        %1295 = vmatprep.subr.mxu0 0.0
        %1296 = vmatpush1.msra.mxu0 %v1252
        %1297 = vmatprep.subr.mxu0 0.0
        %1298 = vmatpush1.msra.mxu0 %v1251
        %1299 = vmatprep.subr.mxu0 0.0
        %1300 = vmatpush2.msra.mxu0 0.0
        %1301 = vmatprep.subr.mxu0 0.0
        %1302 = vmatpush2.msra.mxu0 0.0
        %1303 = vmatprep.subr.mxu0 0.0
        %1304 = vmatpush2.msra.mxu0 0.0
        %1305 = vmatprep.subr.mxu0 0.0
        %1306 = vmatpush2.msra.mxu0 0.0
        %1307 = vmatprep.subr.mxu0 0.0
        %1308 = vmatpush2.msra.mxu0 0.0
        %1309 = vmatprep.subr.mxu0 0.0
        %1310 = vmatpush2.msra.mxu0 0.0
        %1311 = vmatprep.subr.mxu0 0.0
        %1312 = vmatpush2.msra.mxu0 0.0
        %1313 = vmatprep.subr.mxu0 0.0
        %1314 = vmatpush2.msra.mxu0 0.0
        %1315 = vmatprep.subr.mxu0 0.0
        %1316 = vmatpush2.msra.mxu0 0.0
        %1317 = vmatprep.subr.mxu0 0.0
        %1318 = vmatpush2.msra.mxu0 0.0
        %1319 = vmatprep.subr.mxu0 0.0
        %1320 = vmatpush2.msra.mxu0 0.0
        %1321 = vmatprep.subr.mxu0 0.0
        %1322 = vmatpush2.msra.mxu0 0.0
        %1323 = vmatprep.subr.mxu0 0.0
        %1324 = vmatpush2.msra.mxu0 0.0
        %1325 = vmatprep.subr.mxu0 0.0
        %1326 = vmatpush2.msra.mxu0 0.0
        %1327 = vmatprep.subr.mxu0 0.0
        %1328 = vmatpush2.msra.mxu0 0.0
        %1329 = vmatprep.subr.mxu0 0.0
        %1330 = vmatpush2.msra.mxu0 0.0
        %1331 = vmatprep.mubr.f32.mxu0 0.0
        %1332 = vmatmul.mubr.f32.gmra.mxu0 %v1226
        %v1333 = vpop.f32.mrf.mxu0
        %v1334 = vadd.f32 0.0, %v1333
        %v1335 = vpop.f32.mrf.mxu0
        %1336 = vmatprep.mubr.f32.mxu0 0.0
        %1337 = vmatmul.mubr.f32.gmra.mxu0 %v1227
        %v1338 = vpop.f32.mrf.mxu0
        %v1339 = vadd.f32 0.0, %v1338
        %v1340 = vpop.f32.mrf.mxu0
        %1341 = vmatprep.mubr.f32.mxu0 0.0
        %1342 = vmatmul.mubr.f32.gmra.mxu0 %v1228
        %v1343 = vpop.f32.mrf.mxu0
        %v1344 = vadd.f32 0.0, %v1343
        %v1345 = vpop.f32.mrf.mxu0
        %1346 = vmatprep.mubr.f32.mxu0 0.0
        %1347 = vmatmul.mubr.f32.gmra.mxu0 %v1229
        %v1348 = vpop.f32.mrf.mxu0
        %v1349 = vadd.f32 0.0, %v1348
        %v1350 = vpop.f32.mrf.mxu0
        %1351 = vmatprep.mubr.f32.mxu0 0.0
        %1352 = vmatmul.mubr.f32.gmra.mxu0 %v1230
        %v1353 = vpop.f32.mrf.mxu0
        %v1354 = vadd.f32 0.0, %v1353
        %v1355 = vpop.f32.mrf.mxu0
        %1356 = vmatprep.mubr.f32.mxu0 0.0
        %1357 = vmatmul.mubr.f32.gmra.mxu0 %v1231
        %v1358 = vpop.f32.mrf.mxu0
        %v1359 = vadd.f32 0.0, %v1358
        %v1360 = vpop.f32.mrf.mxu0
        %1361 = vmatprep.mubr.f32.mxu0 0.0
        %1362 = vmatmul.mubr.f32.gmra.mxu0 %v1232
        %v1363 = vpop.f32.mrf.mxu0
        %v1364 = vadd.f32 0.0, %v1363
        %v1365 = vpop.f32.mrf.mxu0
        %1366 = vmatprep.mubr.f32.mxu0 0.0
        %1367 = vmatmul.mubr.f32.gmra.mxu0 %v1233
        %v1368 = vpop.f32.mrf.mxu0
        %v1369 = vadd.f32 0.0, %v1368
        %v1370 = vpop.f32.mrf.mxu0
        %1371 = vdwg.mxu0
        %v1372 = vadd.f32 %v1218, %v1334
        %v1373 = vadd.f32 %v1219, %v1339
        %v1374 = vadd.f32 %v1220, %v1344
        %v1375 = vadd.f32 %v1221, %v1349
        %v1376 = vadd.f32 %v1222, %v1354
        %v1377 = vadd.f32 %v1223, %v1359
        %v1378 = vadd.f32 %v1224, %v1364
        %v1379 = vadd.f32 %v1225, %v1369
        %v1380 = vld [vmem:[#allocation2 + $0x80] sm:$0xff]
        %v1381 = vld [vmem:[#allocation2 + $0x88] sm:$0xff]
        %v1382 = vld [vmem:[#allocation2 + $0x90] sm:$0xff]
        %v1383 = vld [vmem:[#allocation2 + $0x98] sm:$0xff]
        %v1384 = vld [vmem:[#allocation2 + $0xa0] sm:$0xff]
        %v1385 = vld [vmem:[#allocation2 + $0xa8] sm:$0xff]
        %v1386 = vld [vmem:[#allocation2 + $0xb0] sm:$0xff]
        %v1387 = vld [vmem:[#allocation2 + $0xb8] sm:$0xff]
        %s1388 = scalar_lea.vmem %s477, 128
        %v1389 = vld [vmem:[%s1388] sm:$0xf]
        %v1390 = vld [vmem:[%s1388 + $0x4] sm:$0xf]
        %v1391 = vld [vmem:[%s1388 + $0x8] sm:$0xf]
        %v1392 = vld [vmem:[%s1388 + $0xc] sm:$0xf]
        %v1393 = vld [vmem:[%s1388 + $0x10] sm:$0xf]
        %v1394 = vld [vmem:[%s1388 + $0x14] sm:$0xf]
        %v1395 = vld [vmem:[%s1388 + $0x18] sm:$0xf]
        %v1396 = vld [vmem:[%s1388 + $0x1c] sm:$0xf]
        %v1397 = vld [vmem:[%s1388 + $0x20] sm:$0xf]
        %v1398 = vld [vmem:[%s1388 + $0x24] sm:$0xf]
        %v1399 = vld [vmem:[%s1388 + $0x28] sm:$0xf]
        %v1400 = vld [vmem:[%s1388 + $0x2c] sm:$0xf]
        %v1401 = vld [vmem:[%s1388 + $0x30] sm:$0xf]
        %v1402 = vld [vmem:[%s1388 + $0x34] sm:$0xf]
        %v1403 = vld [vmem:[%s1388 + $0x38] sm:$0xf]
        %v1404 = vld [vmem:[%s1388 + $0x3c] sm:$0xf]
        %v1405 = vunpack.c.l.bf16 %v1389
        %v1406 = vunpack.c.l.bf16 %v1390
        %v1407 = vunpack.c.l.bf16 %v1391
        %v1408 = vunpack.c.l.bf16 %v1392
        %v1409 = vunpack.c.l.bf16 %v1393
        %v1410 = vunpack.c.l.bf16 %v1394
        %v1411 = vunpack.c.l.bf16 %v1395
        %v1412 = vunpack.c.l.bf16 %v1396
        %v1413 = vunpack.c.l.bf16 %v1397
        %v1414 = vunpack.c.l.bf16 %v1398
        %v1415 = vunpack.c.l.bf16 %v1399
        %v1416 = vunpack.c.l.bf16 %v1400
        %v1417 = vunpack.c.l.bf16 %v1401
        %v1418 = vunpack.c.l.bf16 %v1402
        %v1419 = vunpack.c.l.bf16 %v1403
        %v1420 = vunpack.c.l.bf16 %v1404
        %1421 = vmatprep.subr.mxu0 0.0
        %1422 = vmatpush1.msra.mxu0 %v1420
        %1423 = vmatprep.subr.mxu0 0.0
        %1424 = vmatpush1.msra.mxu0 %v1419
        %1425 = vmatprep.subr.mxu0 0.0
        %1426 = vmatpush1.msra.mxu0 %v1418
        %1427 = vmatprep.subr.mxu0 0.0
        %1428 = vmatpush1.msra.mxu0 %v1417
        %1429 = vmatprep.subr.mxu0 0.0
        %1430 = vmatpush1.msra.mxu0 %v1416
        %1431 = vmatprep.subr.mxu0 0.0
        %1432 = vmatpush1.msra.mxu0 %v1415
        %1433 = vmatprep.subr.mxu0 0.0
        %1434 = vmatpush1.msra.mxu0 %v1414
        %1435 = vmatprep.subr.mxu0 0.0
        %1436 = vmatpush1.msra.mxu0 %v1413
        %1437 = vmatprep.subr.mxu0 0.0
        %1438 = vmatpush1.msra.mxu0 %v1412
        %1439 = vmatprep.subr.mxu0 0.0
        %1440 = vmatpush1.msra.mxu0 %v1411
        %1441 = vmatprep.subr.mxu0 0.0
        %1442 = vmatpush1.msra.mxu0 %v1410
        %1443 = vmatprep.subr.mxu0 0.0
        %1444 = vmatpush1.msra.mxu0 %v1409
        %1445 = vmatprep.subr.mxu0 0.0
        %1446 = vmatpush1.msra.mxu0 %v1408
        %1447 = vmatprep.subr.mxu0 0.0
        %1448 = vmatpush1.msra.mxu0 %v1407
        %1449 = vmatprep.subr.mxu0 0.0
        %1450 = vmatpush1.msra.mxu0 %v1406
        %1451 = vmatprep.subr.mxu0 0.0
        %1452 = vmatpush1.msra.mxu0 %v1405
        %1453 = vmatprep.subr.mxu0 0.0
        %1454 = vmatpush2.msra.mxu0 0.0
        %1455 = vmatprep.subr.mxu0 0.0
        %1456 = vmatpush2.msra.mxu0 0.0
        %1457 = vmatprep.subr.mxu0 0.0
        %1458 = vmatpush2.msra.mxu0 0.0
        %1459 = vmatprep.subr.mxu0 0.0
        %1460 = vmatpush2.msra.mxu0 0.0
        %1461 = vmatprep.subr.mxu0 0.0
        %1462 = vmatpush2.msra.mxu0 0.0
        %1463 = vmatprep.subr.mxu0 0.0
        %1464 = vmatpush2.msra.mxu0 0.0
        %1465 = vmatprep.subr.mxu0 0.0
        %1466 = vmatpush2.msra.mxu0 0.0
        %1467 = vmatprep.subr.mxu0 0.0
        %1468 = vmatpush2.msra.mxu0 0.0
        %1469 = vmatprep.subr.mxu0 0.0
        %1470 = vmatpush2.msra.mxu0 0.0
        %1471 = vmatprep.subr.mxu0 0.0
        %1472 = vmatpush2.msra.mxu0 0.0
        %1473 = vmatprep.subr.mxu0 0.0
        %1474 = vmatpush2.msra.mxu0 0.0
        %1475 = vmatprep.subr.mxu0 0.0
        %1476 = vmatpush2.msra.mxu0 0.0
        %1477 = vmatprep.subr.mxu0 0.0
        %1478 = vmatpush2.msra.mxu0 0.0
        %1479 = vmatprep.subr.mxu0 0.0
        %1480 = vmatpush2.msra.mxu0 0.0
        %1481 = vmatprep.subr.mxu0 0.0
        %1482 = vmatpush2.msra.mxu0 0.0
        %1483 = vmatprep.subr.mxu0 0.0
        %1484 = vmatpush2.msra.mxu0 0.0
        %1485 = vmatprep.mubr.f32.mxu0 0.0
        %1486 = vmatmul.mubr.f32.gmra.mxu0 %v1380
        %v1487 = vpop.f32.mrf.mxu0
        %v1488 = vadd.f32 0.0, %v1487
        %v1489 = vpop.f32.mrf.mxu0
        %1490 = vmatprep.mubr.f32.mxu0 0.0
        %1491 = vmatmul.mubr.f32.gmra.mxu0 %v1381
        %v1492 = vpop.f32.mrf.mxu0
        %v1493 = vadd.f32 0.0, %v1492
        %v1494 = vpop.f32.mrf.mxu0
        %1495 = vmatprep.mubr.f32.mxu0 0.0
        %1496 = vmatmul.mubr.f32.gmra.mxu0 %v1382
        %v1497 = vpop.f32.mrf.mxu0
        %v1498 = vadd.f32 0.0, %v1497
        %v1499 = vpop.f32.mrf.mxu0
        %1500 = vmatprep.mubr.f32.mxu0 0.0
        %1501 = vmatmul.mubr.f32.gmra.mxu0 %v1383
        %v1502 = vpop.f32.mrf.mxu0
        %v1503 = vadd.f32 0.0, %v1502
        %v1504 = vpop.f32.mrf.mxu0
        %1505 = vmatprep.mubr.f32.mxu0 0.0
        %1506 = vmatmul.mubr.f32.gmra.mxu0 %v1384
        %v1507 = vpop.f32.mrf.mxu0
        %v1508 = vadd.f32 0.0, %v1507
        %v1509 = vpop.f32.mrf.mxu0
        %1510 = vmatprep.mubr.f32.mxu0 0.0
        %1511 = vmatmul.mubr.f32.gmra.mxu0 %v1385
        %v1512 = vpop.f32.mrf.mxu0
        %v1513 = vadd.f32 0.0, %v1512
        %v1514 = vpop.f32.mrf.mxu0
        %1515 = vmatprep.mubr.f32.mxu0 0.0
        %1516 = vmatmul.mubr.f32.gmra.mxu0 %v1386
        %v1517 = vpop.f32.mrf.mxu0
        %v1518 = vadd.f32 0.0, %v1517
        %v1519 = vpop.f32.mrf.mxu0
        %1520 = vmatprep.mubr.f32.mxu0 0.0
        %1521 = vmatmul.mubr.f32.gmra.mxu0 %v1387
        %v1522 = vpop.f32.mrf.mxu0
        %v1523 = vadd.f32 0.0, %v1522
        %v1524 = vpop.f32.mrf.mxu0
        %1525 = vdwg.mxu0
        %v1526 = vadd.f32 %v1372, %v1488
        %v1527 = vadd.f32 %v1373, %v1493
        %v1528 = vadd.f32 %v1374, %v1498
        %v1529 = vadd.f32 %v1375, %v1503
        %v1530 = vadd.f32 %v1376, %v1508
        %v1531 = vadd.f32 %v1377, %v1513
        %v1532 = vadd.f32 %v1378, %v1518
        %v1533 = vadd.f32 %v1379, %v1523
        %1534 = vst [vmem:[#allocation4] sm:$0xff] %v1526
        %1535 = vst [vmem:[#allocation4 + $0x8] sm:$0xff] %v1527
        %1536 = vst [vmem:[#allocation4 + $0x10] sm:$0xff] %v1528
        %1537 = vst [vmem:[#allocation4 + $0x18] sm:$0xff] %v1529
        %1538 = vst [vmem:[#allocation4 + $0x20] sm:$0xff] %v1530
        %1539 = vst [vmem:[#allocation4 + $0x28] sm:$0xff] %v1531
        %1540 = vst [vmem:[#allocation4 + $0x30] sm:$0xff] %v1532
        %1541 = vst [vmem:[#allocation4 + $0x38] sm:$0xff] %v1533
      $region60: #{rgcn_forward.6} parent=43 // pred_fallthru
        _
      // Predicated region
      $region61: #{rgcn_forward.6} parent=43 // pred_check
        _
      $region62: #{rgcn_forward.6} parent=43 // pred_check_branch
        %1543 = sbr.rel (%p488) target = $region64
      $region63: #{rgcn_forward.6} parent=43 // pred_region
        %v1544 = vld [vmem:[#allocation4] sm:$0xff]
        %v1545 = vld [vmem:[#allocation4 + $0x8] sm:$0xff]
        %v1546 = vld [vmem:[#allocation4 + $0x10] sm:$0xff]
        %v1547 = vld [vmem:[#allocation4 + $0x18] sm:$0xff]
        %v1548 = vld [vmem:[#allocation4 + $0x20] sm:$0xff]
        %v1549 = vld [vmem:[#allocation4 + $0x28] sm:$0xff]
        %v1550 = vld [vmem:[#allocation4 + $0x30] sm:$0xff]
        %v1551 = vld [vmem:[#allocation4 + $0x38] sm:$0xff]
        %v1552 = vld [vmem:[%s7] sm:$0xf]
        %v1553 = vlaneseq
        %v1554 = vshrl.u32 %v1553, 7
        %v1555 = vsub.s32 3, %v1554
        %v1556 = vrot.slane %v1552, %v1555
        %v1557 = vmul.f32 %v1544, %v1556
        %v1558 = vmul.f32 %v1545, %v1556
        %v1559 = vmul.f32 %v1546, %v1556
        %v1560 = vmul.f32 %v1547, %v1556
        %v1561 = vmul.f32 %v1548, %v1556
        %v1562 = vmul.f32 %v1549, %v1556
        %v1563 = vmul.f32 %v1550, %v1556
        %v1564 = vmul.f32 %v1551, %v1556
        %1565 = vadd.xlane.f32.xlu0 %v1557
        %v1566 = vpop.xlane.xlu0 %1565
        %1567 = vadd.xlane.f32.xlu0 %v1558
        %v1568 = vpop.xlane.xlu0 %1567
        %1569 = vadd.xlane.f32.xlu0 %v1559
        %v1570 = vpop.xlane.xlu0 %1569
        %1571 = vadd.xlane.f32.xlu0 %v1560
        %v1572 = vpop.xlane.xlu0 %1571
        %1573 = vadd.xlane.f32.xlu0 %v1561
        %v1574 = vpop.xlane.xlu0 %1573
        %1575 = vadd.xlane.f32.xlu0 %v1562
        %v1576 = vpop.xlane.xlu0 %1575
        %1577 = vadd.xlane.f32.xlu0 %v1563
        %v1578 = vpop.xlane.xlu0 %1577
        %1579 = vadd.xlane.f32.xlu0 %v1564
        %v1580 = vpop.xlane.xlu0 %1579
        %v1581 = vmul.f32 %v1566, 0.03125
        %v1582 = vmul.f32 %v1568, 0.03125
        %v1583 = vmul.f32 %v1570, 0.03125
        %v1584 = vmul.f32 %v1572, 0.03125
        %v1585 = vmul.f32 %v1574, 0.03125
        %v1586 = vmul.f32 %v1576, 0.03125
        %v1587 = vmul.f32 %v1578, 0.03125
        %v1588 = vmul.f32 %v1580, 0.03125
        %v1589 = vsub.f32 %v1544, %v1581
        %v1590 = vsub.f32 %v1545, %v1582
        %v1591 = vsub.f32 %v1546, %v1583
        %v1592 = vsub.f32 %v1547, %v1584
        %v1593 = vsub.f32 %v1548, %v1585
        %v1594 = vsub.f32 %v1549, %v1586
        %v1595 = vsub.f32 %v1550, %v1587
        %v1596 = vsub.f32 %v1551, %v1588
        %v1597 = vmul.f32 %v1589, %v1556
        %v1598 = vmul.f32 %v1590, %v1556
        %v1599 = vmul.f32 %v1591, %v1556
        %v1600 = vmul.f32 %v1592, %v1556
        %v1601 = vmul.f32 %v1593, %v1556
        %v1602 = vmul.f32 %v1594, %v1556
        %v1603 = vmul.f32 %v1595, %v1556
        %v1604 = vmul.f32 %v1596, %v1556
        %v1605 = vmul.f32 %v1597, %v1597
        %v1606 = vmul.f32 %v1598, %v1598
        %v1607 = vmul.f32 %v1599, %v1599
        %v1608 = vmul.f32 %v1600, %v1600
        %v1609 = vmul.f32 %v1601, %v1601
        %v1610 = vmul.f32 %v1602, %v1602
        %v1611 = vmul.f32 %v1603, %v1603
        %v1612 = vmul.f32 %v1604, %v1604
        %1613 = vadd.xlane.f32.xlu0 %v1605
        %v1614 = vpop.xlane.xlu0 %1613
        %1615 = vadd.xlane.f32.xlu0 %v1606
        %v1616 = vpop.xlane.xlu0 %1615
        %1617 = vadd.xlane.f32.xlu0 %v1607
        %v1618 = vpop.xlane.xlu0 %1617
        %1619 = vadd.xlane.f32.xlu0 %v1608
        %v1620 = vpop.xlane.xlu0 %1619
        %1621 = vadd.xlane.f32.xlu0 %v1609
        %v1622 = vpop.xlane.xlu0 %1621
        %1623 = vadd.xlane.f32.xlu0 %v1610
        %v1624 = vpop.xlane.xlu0 %1623
        %1625 = vadd.xlane.f32.xlu0 %v1611
        %v1626 = vpop.xlane.xlu0 %1625
        %1627 = vadd.xlane.f32.xlu0 %v1612
        %v1628 = vpop.xlane.xlu0 %1627
        %v1629 = vmul.f32 %v1614, 0.03125
        %v1630 = vmul.f32 %v1616, 0.03125
        %v1631 = vmul.f32 %v1618, 0.03125
        %v1632 = vmul.f32 %v1620, 0.03125
        %v1633 = vmul.f32 %v1622, 0.03125
        %v1634 = vmul.f32 %v1624, 0.03125
        %v1635 = vmul.f32 %v1626, 0.03125
        %v1636 = vmul.f32 %v1628, 0.03125
        %v1637 = vadd.f32 %v1629, 1e-05
        %v1638 = vadd.f32 %v1630, 1e-05
        %v1639 = vadd.f32 %v1631, 1e-05
        %v1640 = vadd.f32 %v1632, 1e-05
        %v1641 = vadd.f32 %v1633, 1e-05
        %v1642 = vadd.f32 %v1634, 1e-05
        %v1643 = vadd.f32 %v1635, 1e-05
        %v1644 = vadd.f32 %v1636, 1e-05
        %v1645 = vrsqrt.pop %v1637
        %v1646 = vrsqrt.pop %v1638
        %v1647 = vrsqrt.pop %v1639
        %v1648 = vrsqrt.pop %v1640
        %v1649 = vrsqrt.pop %v1641
        %v1650 = vrsqrt.pop %v1642
        %v1651 = vrsqrt.pop %v1643
        %v1652 = vrsqrt.pop %v1644
        %v1653 = vmul.f32 %v1597, %v1645
        %v1654 = vmul.f32 %v1598, %v1646
        %v1655 = vmul.f32 %v1599, %v1647
        %v1656 = vmul.f32 %v1600, %v1648
        %v1657 = vmul.f32 %v1601, %v1649
        %v1658 = vmul.f32 %v1602, %v1650
        %v1659 = vmul.f32 %v1603, %v1651
        %v1660 = vmul.f32 %v1604, %v1652
        %v1661 = vlaneseq
        %v1662 = vshrl.u32 %v1661, 7
        %v1663 = vsub.s32 0, %v1662
        %v1664 = vrot.slane %v1552, %v1663
        %v1665 = vmul.f32 %v1653, %v1664
        %v1666 = vmul.f32 %v1654, %v1664
        %v1667 = vmul.f32 %v1655, %v1664
        %v1668 = vmul.f32 %v1656, %v1664
        %v1669 = vmul.f32 %v1657, %v1664
        %v1670 = vmul.f32 %v1658, %v1664
        %v1671 = vmul.f32 %v1659, %v1664
        %v1672 = vmul.f32 %v1660, %v1664
        %v1673 = vlaneseq
        %v1674 = vshrl.u32 %v1673, 7
        %v1675 = vsub.s32 1, %v1674
        %v1676 = vrot.slane %v1552, %v1675
        %v1677 = vadd.f32 %v1665, %v1676
        %v1678 = vadd.f32 %v1666, %v1676
        %v1679 = vadd.f32 %v1667, %v1676
        %v1680 = vadd.f32 %v1668, %v1676
        %v1681 = vadd.f32 %v1669, %v1676
        %v1682 = vadd.f32 %v1670, %v1676
        %v1683 = vadd.f32 %v1671, %v1676
        %v1684 = vadd.f32 %v1672, %v1676
        %v1685 = vlaneseq
        %v1686 = vshrl.u32 %v1685, 7
        %v1687 = vsub.s32 2, %v1686
        %v1688 = vrot.slane %v1552, %v1687
        %v1689 = vadd.f32 %v1677, %v1688
        %v1690 = vadd.f32 %v1678, %v1688
        %v1691 = vadd.f32 %v1679, %v1688
        %v1692 = vadd.f32 %v1680, %v1688
        %v1693 = vadd.f32 %v1681, %v1688
        %v1694 = vadd.f32 %v1682, %v1688
        %v1695 = vadd.f32 %v1683, %v1688
        %v1696 = vadd.f32 %v1684, %v1688
        %v1697 = vld [vmem:[#allocation3] sm:$0xff]
        %v1698 = vld [vmem:[#allocation3 + $0x8] sm:$0xff]
        %v1699 = vld [vmem:[#allocation3 + $0x10] sm:$0xff]
        %v1700 = vld [vmem:[#allocation3 + $0x18] sm:$0xff]
        %v1701 = vld [vmem:[#allocation3 + $0x20] sm:$0xff]
        %v1702 = vld [vmem:[#allocation3 + $0x28] sm:$0xff]
        %v1703 = vld [vmem:[#allocation3 + $0x30] sm:$0xff]
        %v1704 = vld [vmem:[#allocation3 + $0x38] sm:$0xff]
        %v1705 = vadd.f32 %v1689, %v1697
        %v1706 = vadd.f32 %v1690, %v1698
        %v1707 = vadd.f32 %v1691, %v1699
        %v1708 = vadd.f32 %v1692, %v1700
        %v1709 = vadd.f32 %v1693, %v1701
        %v1710 = vadd.f32 %v1694, %v1702
        %v1711 = vadd.f32 %v1695, %v1703
        %v1712 = vadd.f32 %v1696, %v1704
        %v1713 = vmax.f32 %v1705, 0.0
        %v1714 = vmax.f32 %v1706, 0.0
        %v1715 = vmax.f32 %v1707, 0.0
        %v1716 = vmax.f32 %v1708, 0.0
        %v1717 = vmax.f32 %v1709, 0.0
        %v1718 = vmax.f32 %v1710, 0.0
        %v1719 = vmax.f32 %v1711, 0.0
        %v1720 = vmax.f32 %v1712, 0.0
        %v1721 = vpack.c.bf16 %v1714, %v1713
        %v1722 = vpack.c.bf16 %v1716, %v1715
        %v1723 = vpack.c.bf16 %v1718, %v1717
        %v1724 = vpack.c.bf16 %v1720, %v1719
        %v1729 = vunpack.c.l.b16 %v1721
        %v1730 = vunpack.c.h.b16 %v1721
        %v1731 = vunpack.c.l.b16 %v1722
        %v1732 = vunpack.c.h.b16 %v1722
        %v1733 = vunpack.c.l.b16 %v1723
        %v1734 = vunpack.c.h.b16 %v1723
        %v1735 = vunpack.c.l.b16 %v1724
        %v1736 = vunpack.c.h.b16 %v1724
        %v1737 = vpack.c.b16 %v1729, %v1729
        %v1738 = vpack.c.b16 %v1730, %v1730
        %v1739 = vpack.c.b16 %v1731, %v1731
        %v1740 = vpack.c.b16 %v1732, %v1732
        %v1741 = vpack.c.b16 %v1733, %v1733
        %v1742 = vpack.c.b16 %v1734, %v1734
        %v1743 = vpack.c.b16 %v1735, %v1735
        %v1744 = vpack.c.b16 %v1736, %v1736
        %1753 = vst [vmem:[%s483] sm:$0xf] %v1737
        %1754 = vst [vmem:[%s483 + $0x4] sm:$0xf] %v1738
        %1755 = vst [vmem:[%s483 + $0x8] sm:$0xf] %v1739
        %1756 = vst [vmem:[%s483 + $0xc] sm:$0xf] %v1740
        %1757 = vst [vmem:[%s483 + $0x10] sm:$0xf] %v1741
        %1758 = vst [vmem:[%s483 + $0x14] sm:$0xf] %v1742
        %1759 = vst [vmem:[%s483 + $0x18] sm:$0xf] %v1743
        %1760 = vst [vmem:[%s483 + $0x1c] sm:$0xf] %v1744
      $region64: #{rgcn_forward.6} parent=43 // pred_fallthru
        _
      %s1761 = smul.u32 8, %s34
      %p1762 = scmp.lt.s32.totalorder %s1761, 15
      %s1763 = scalar_select %p1762, %s1761, 15
      %s1764 = smul.addr %s1763, 4
      %s1765 = scalar_lea.vmem %s8, %s1764
      // Predicated region
      $region65: #{rgcn_forward.6} parent=43 // pred_check
        %p1766 = pneg %p248
      $region66: #{rgcn_forward.6} parent=43 // pred_check_branch
        %1768 = sbr.rel (%p1766) target = $region68
      $region67: #{rgcn_forward.6} parent=43 // pred_region
        %s1769 = smul.u32 8, %s34
      $region68: #{rgcn_forward.6} parent=43 // pred_fallthru
        _
    $region44: #{rgcn_forward.6} parent=5 // pred_fallthru
      _
    %p1770 = scmp.le.s32.totalorder 2, %s24
    // Predicated region
    $region69: #{rgcn_forward.6} parent=5 // pred_check
      %p1771 = pneg %p1770
    $region70: #{rgcn_forward.6} parent=5 // pred_check_branch
      %1773 = sbr.rel (%p1771) target = $region72
    $region71: #{rgcn_forward.6} parent=5 // pred_region
      %s1774 = ssub.s32 %s24, 2
      // Predicated region
      $region73: #{rgcn_forward.6} parent=71 // pred_check
        %p1775 = pneg %p254
      $region74: #{rgcn_forward.6} parent=71 // pred_check_branch
        %1777 = sbr.rel (%p1775) target = $region76
      $region75: #{rgcn_forward.6} parent=71 // pred_region
        %s1778 = smul.u32 8, %s37
        %p1779 = scmp.lt.s32.totalorder %s1778, 15
        %s1780 = scalar_select %p1779, %s1778, 15
        %s1781 = smul.addr %s1780, 4
        %s1782 = scalar_lea.vmem %s8, %s1781
      $region76: #{rgcn_forward.6} parent=71 // pred_fallthru
        _
    $region72: #{rgcn_forward.6} parent=5 // pred_fallthru
      _
  $region6: #{rgcn_forward.6} parent=0 // loop_footer
    %s28 = sadd.s32 1, %s24
  $region7: #{rgcn_forward.6} parent=0 // loop_footer_branch
    %23 = sbr.rel target = $region3
  $region8: #{rgcn_forward.6} parent=0 // loop_exit
    _

</llo_original>
